<compile_context>
chip_gen: v7x
topology: tpu7x:2x2x1
jax: 0.10.0
libtpu: 0.0.40
codegen_flags: <defaults>
</compile_context>

<pallas_src>
import functools

import jax
import jax.numpy as jnp
from jax import lax
from jax.experimental import pallas as pl
from jax.experimental.pallas import tpu as pltpu


def _round_up(x, m):
    return ((x + m - 1) // m) * m


# --------------------------------------------------------------------------- #
# Pallas kernel: one LSTM layer, grid over time chunks.
#   x_ref    : (chunk*B_pad, D_pad)  bf16   current chunk of inputs (time-major)
#   wih_hbm  : (D_pad, 4*H_pad)      bf16   HBM (DMA'd once into VMEM scratch)
#   whh_hbm  : (H_pad, 4*H_pad)      bf16   HBM (DMA'd once into VMEM scratch)
#   bias_ref : (1, 4*H_pad)          f32    b_ih + b_hh, gate order [i,f,o,g]
#   y_ref    : (chunk*B_pad, H_pad)  bf16   all h_t of this chunk
#   h_out/c_out : (B_pad, H_pad)     f32    final states (written on last chunk)
# --------------------------------------------------------------------------- #
def _lstm_layer_kernel(x_ref, wih_hbm, whh_hbm, bias_ref,
                       y_ref, h_out_ref, c_out_ref,
                       wih_sc, whh_sc, dma_sem,
                       xw_sc, h_sc, hb_sc, c_sc,
                       *, hidden_pad, batch_pad, chunk, tail, n_chunks):
    c_idx = pl.program_id(0)
    Hp = hidden_pad
    Bp = batch_pad

    @pl.when(c_idx == 0)
    def _():
        # One-time weight DMA HBM -> VMEM (single-buffered, resident for the grid).
        cp_ih = pltpu.make_async_copy(wih_hbm, wih_sc, dma_sem.at[0])
        cp_hh = pltpu.make_async_copy(whh_hbm, whh_sc, dma_sem.at[1])
        cp_ih.start()
        cp_hh.start()
        h_sc[...] = jnp.zeros_like(h_sc)
        hb_sc[...] = jnp.zeros_like(hb_sc)
        c_sc[...] = jnp.zeros_like(c_sc)
        cp_ih.wait()
        cp_hh.wait()

    # Fused input projection for the whole chunk: one big MXU matmul (bf16
    # operands, f32 accumulation) + f32 bias add, kept in VMEM scratch.
    xw = jnp.dot(x_ref[...], wih_sc[...], preferred_element_type=jnp.float32)
    xw_sc[...] = xw + bias_ref[...]                  # (chunk*Bp, 4*Hp) f32

    whh = whh_sc[...]                                # (Hp, 4*Hp) bf16, resident

    def step(t):
        h_prev = hb_sc[...]                          # (Bp, Hp) bf16 carry
        gates = (xw_sc[t * Bp:(t + 1) * Bp, :]
                 + jnp.dot(h_prev, whh, preferred_element_type=jnp.float32))
        # Gate column order [i | f | o | g]: one transcendental slab for i,f,o.
        # sigmoid(z) == 0.5*tanh(0.5*z) + 0.5  -> 1 EUP op instead of exp+recip.
        ifo = 0.5 * jnp.tanh(0.5 * gates[:, :3 * Hp]) + 0.5
        g_g = jnp.tanh(gates[:, 3 * Hp:])
        i_g = ifo[:, 0 * Hp:1 * Hp]
        f_g = ifo[:, 1 * Hp:2 * Hp]
        o_g = ifo[:, 2 * Hp:3 * Hp]
        c_new = f_g * c_sc[...] + i_g * g_g
        h_new = o_g * jnp.tanh(c_new)
        c_sc[...] = c_new
        h_sc[...] = h_new
        h_bf = h_new.astype(jnp.bfloat16)            # cast once, reused for carry+store
        hb_sc[...] = h_bf
        y_ref[t * Bp:(t + 1) * Bp, :] = h_bf

    # Statically unrolled chunk loop. Steps below `tail` are valid in every
    # chunk -> unguarded. Steps >= tail are only invalid in the LAST chunk.
    for t in range(chunk):
        if t < tail:
            step(t)
        else:
            @pl.when(c_idx != n_chunks - 1)
            def _(tt=t):
                step(tt)

            @pl.when(c_idx == n_chunks - 1)
            def _(tt=t):
                # Padded timesteps: write zeros (no uninitialized VMEM to HBM).
                y_ref[tt * Bp:(tt + 1) * Bp, :] = jnp.zeros((Bp, Hp), jnp.bfloat16)

    @pl.when(c_idx == n_chunks - 1)
    def _():
        h_out_ref[...] = h_sc[...]
        c_out_ref[...] = c_sc[...]


def _lstm_layer(x2d, wih_t, whh_t, bias, *, B_pad, H_pad, chunk, seq_len, vmem_limit):
    """Run one LSTM layer.

    x2d:   (T_pad*B_pad, D_pad) bf16 time-major activations.
    Returns (y2d, h_n, c_n): y2d (T_pad*B_pad, H_pad) bf16, h_n/c_n (B_pad, H_pad) f32.
    """
    TB, D_pad = x2d.shape
    T_pad = TB // B_pad
    n_chunks = T_pad // chunk
    tail = seq_len - (n_chunks - 1) * chunk          # valid steps in last chunk
    G = 4 * H_pad

    kernel = functools.partial(
        _lstm_layer_kernel,
        hidden_pad=H_pad, batch_pad=B_pad, chunk=chunk, tail=tail, n_chunks=n_chunks)

    y2d, h_n, c_n = pl.pallas_call(
        kernel,
        out_shape=(
            jax.ShapeDtypeStruct((T_pad * B_pad, H_pad), jnp.bfloat16),  # all h_t
            jax.ShapeDtypeStruct((B_pad, H_pad), jnp.float32),           # h_n
            jax.ShapeDtypeStruct((B_pad, H_pad), jnp.float32),           # c_n
        ),
        grid_spec=pltpu.PrefetchScalarGridSpec(
            num_scalar_prefetch=0,
            grid=(n_chunks,),
            in_specs=[
                pl.BlockSpec((chunk * B_pad, D_pad), lambda c: (c, 0)),  # x chunk
                pl.BlockSpec(memory_space=pl.ANY),                       # W_ih^T (HBM)
                pl.BlockSpec(memory_space=pl.ANY),                       # W_hh^T (HBM)
                pl.BlockSpec((1, G), lambda c: (0, 0)),                  # bias
            ],
            out_specs=(
                pl.BlockSpec((chunk * B_pad, H_pad), lambda c: (c, 0)),
                pl.BlockSpec((B_pad, H_pad), lambda c: (0, 0)),
                pl.BlockSpec((B_pad, H_pad), lambda c: (0, 0)),
            ),
            scratch_shapes=[
                pltpu.VMEM((D_pad, G), jnp.bfloat16),          # W_ih^T resident
                pltpu.VMEM((H_pad, G), jnp.bfloat16),          # W_hh^T resident
                pltpu.SemaphoreType.DMA((2,)),
                pltpu.VMEM((chunk * B_pad, G), jnp.float32),   # xw chunk
                pltpu.VMEM((B_pad, H_pad), jnp.float32),       # h carry (f32)
                pltpu.VMEM((B_pad, H_pad), jnp.bfloat16),      # h carry (bf16)
                pltpu.VMEM((B_pad, H_pad), jnp.float32),       # c carry (f32)
            ],
        ),
        compiler_params=pltpu.CompilerParams(
            dimension_semantics=("arbitrary",),                # sequential recurrence
            vmem_limit_bytes=vmem_limit),
    )(x2d, wih_t, whh_t, bias)
    return y2d, h_n, c_n


# --------------------------------------------------------------------------- #
# VMEM-budget-aware chunk selection.
# --------------------------------------------------------------------------- #
def _choose_chunk(T, B_pad, D_pad, H_pad):
    G = 4 * H_pad
    fixed = (D_pad * G * 2                 # W_ih^T bf16 (single-buffered)
             + H_pad * G * 2               # W_hh^T bf16 (single-buffered)
             + 2 * B_pad * H_pad * 4       # h, c carries f32
             + B_pad * H_pad * 2           # h carry bf16
             + 2 * G * 4)                  # bias (double-buffered)

    def var_bytes(c):
        return (2 * c * B_pad * D_pad * 2      # x blocks bf16, double-buffered
                + 2 * c * B_pad * H_pad * 2    # y blocks bf16, double-buffered
                + c * B_pad * G * 4)           # xw scratch f32

    budget = 24 * 1024 * 1024
    chunk = min(_round_up(T, 8), 64)
    while chunk > 8 and fixed + var_bytes(chunk) > budget:
        chunk -= 8
    est = fixed + var_bytes(chunk)
    vmem_limit = int(min(64 * 1024 * 1024, max(16 * 1024 * 1024, 2 * est)))
    return chunk, vmem_limit


# --------------------------------------------------------------------------- #
# Weight preparation: torch gate order [i, f, g, o] -> kernel order [i, f, o, g],
# each gate block zero-padded H -> H_pad; input dim zero-padded to pad_in_to.
# --------------------------------------------------------------------------- #
def _prep_weight(w, H, H_pad, pad_in_to=None):
    D = w.shape[1]
    blocks = [w[0:H], w[H:2 * H], w[3 * H:4 * H], w[2 * H:3 * H]]   # i, f, o, g
    blocks = [jnp.pad(b, ((0, H_pad - H), (0, 0))) for b in blocks]
    cat = jnp.concatenate(blocks, axis=0)                           # (4*H_pad, D)
    if pad_in_to is not None and pad_in_to > D:
        cat = jnp.pad(cat, ((0, 0), (0, pad_in_to - D)))
    return cat.T                                                    # (D_pad, 4*H_pad)


def _prep_bias(b, H, H_pad):
    blocks = [b[0:H], b[H:2 * H], b[3 * H:4 * H], b[2 * H:3 * H]]   # i, f, o, g
    blocks = [jnp.pad(v, (0, H_pad - H)) for v in blocks]
    return jnp.concatenate(blocks, axis=0).astype(jnp.float32)      # (4*H_pad,)


def init_multirnn_params(key, input_size, hidden_size, num_layers):
    """Deterministic init matching nn.LSTM parameter shapes (uniform(-k, k), k=1/sqrt(H))."""
    k = 1.0 / jnp.sqrt(jnp.float32(hidden_size))
    params = []
    for layer in range(num_layers):
        in_dim = input_size if layer == 0 else hidden_size
        key, k1, k2, k3, k4 = jax.random.split(key, 5)
        params.append(dict(
            w_ih=jax.random.uniform(k1, (4 * hidden_size, in_dim), jnp.float32, -k, k),
            w_hh=jax.random.uniform(k2, (4 * hidden_size, hidden_size), jnp.float32, -k, k),
            b_ih=jax.random.uniform(k3, (4 * hidden_size,), jnp.float32, -k, k),
            b_hh=jax.random.uniform(k4, (4 * hidden_size,), jnp.float32, -k, k),
        ))
    return params


def multirnn_forward(x_bti, params):
    """MultiRNN.forward for rnn_type='LSTM', batch_first=True, unidirectional.

    x_bti: (B, T, input_size).
    Returns (output, (h_n, c_n)) like nn.LSTM with zero initial state:
      output: (B, T, H);  h_n, c_n: (num_layers, B, H).
    """
    B, T, I = x_bti.shape
    H = params[0]["w_hh"].shape[1]

    B_pad = _round_up(B, 8)
    H_pad = _round_up(H, 128)
    I_pad = _round_up(I, 128)
    chunk, vmem_limit = _choose_chunk(T, B_pad, max(I_pad, H_pad), H_pad)
    T_pad = _round_up(T, chunk)

    # batch_first -> time-major once; pad time/batch/features; bf16; flatten
    # (T_pad, B_pad) so every layer consumes/produces a lane-dense 2D slab.
    x_tm = jnp.transpose(x_bti, (1, 0, 2)).astype(jnp.bfloat16)
    x_tm = jnp.pad(x_tm, ((0, T_pad - T), (0, B_pad - B), (0, I_pad - I)))
    cur = x_tm.reshape(T_pad * B_pad, I_pad)

    hs, cs = [], []
    for li, p in enumerate(params):
        in_pad = I_pad if li == 0 else H_pad
        wih_t = _prep_weight(p["w_ih"], H, H_pad, pad_in_to=in_pad).astype(jnp.bfloat16)
        whh_t = _prep_weight(p["w_hh"], H, H_pad, pad_in_to=H_pad).astype(jnp.bfloat16)
        bias = _prep_bias(p["b_ih"] + p["b_hh"], H, H_pad)[None, :]   # (1, 4*H_pad)

        cur, h_n, c_n = _lstm_layer(cur, wih_t, whh_t, bias,
                                    B_pad=B_pad, H_pad=H_pad, chunk=chunk,
                                    seq_len=T, vmem_limit=vmem_limit)
        hs.append(h_n[:B, :H])
        cs.append(c_n[:B, :H])

    y = cur.reshape(T_pad, B_pad, H_pad)[:T, :B, :H].astype(jnp.float32)
    out = jnp.transpose(y, (1, 0, 2))                 # back to (B, T, H)
    return out, (jnp.stack(hs, 0), jnp.stack(cs, 0))


# --------------------------------------------------------------------------- #
# Pure-JAX f32 reference mirroring torch.nn.LSTM semantics.
# --------------------------------------------------------------------------- #
def _lstm_reference(x_bti, params):
    def one_layer(x_tbi, p):
        H = p["w_hh"].shape[1]

        def step(carry, x_t):
            h, c = carry
            gates = x_t @ p["w_ih"].T + h @ p["w_hh"].T + p["b_ih"] + p["b_hh"]
            i = jax.nn.sigmoid(gates[:, 0 * H:1 * H])
            f = jax.nn.sigmoid(gates[:, 1 * H:2 * H])
            g = jnp.tanh(gates[:, 2 * H:3 * H])
            o = jax.nn.sigmoid(gates[:, 3 * H:4 * H])
            c_new = f * c + i * g
            h_new = o * jnp.tanh(c_new)
            return (h_new, c_new), h_new

        Bsz = x_tbi.shape[1]
        init = (jnp.zeros((Bsz, H), jnp.float32), jnp.zeros((Bsz, H), jnp.float32))
        (h_n, c_n), ys = lax.scan(step, init, x_tbi)
        return ys, h_n, c_n

    x_tbi = jnp.transpose(x_bti, (1, 0, 2))
    hs, cs = [], []
    for p in params:
        x_tbi, h_n, c_n = one_layer(x_tbi, p)
        hs.append(h_n)
        cs.append(c_n)
    return jnp.transpose(x_tbi, (1, 0, 2)), (jnp.stack(hs, 0), jnp.stack(cs, 0))


if __name__ == "__main__":
    key = jax.random.PRNGKey(0)
    fwd = jax.jit(multirnn_forward)

    # Config 1: MultiRNN('LSTM', input_size=16, hidden_size=32, num_layers=1)
    B, T, I, H, L = 2, 8, 16, 32, 1
    key, kx, kp = jax.random.split(key, 3)
    x = jax.random.normal(kx, (B, T, I), jnp.float32)
    params = init_multirnn_params(kp, I, H, L)

    out, (h_n, c_n) = fwd(x, params)
    out = jax.block_until_ready(out)
    h_n = jax.block_until_ready(h_n)
    c_n = jax.block_until_ready(c_n)

    assert out.shape == (B, T, H) and h_n.shape == (L, B, H) and c_n.shape == (L, B, H)
    ref_out, (ref_h, ref_c) = _lstm_reference(x, params)
    # bf16 MXU operands / bf16 layer activations (f32 accumulation + carries).
    assert jnp.allclose(out, ref_out, atol=3e-2, rtol=3e-2)
    assert jnp.allclose(h_n, ref_h, atol=3e-2, rtol=3e-2)
    assert jnp.allclose(c_n, ref_c, atol=3e-2, rtol=3e-2)

    # Config 2: odd sizes exercise batch/hidden padding, the static-tail guard
    # and stacked layers: MultiRNN('LSTM', 12, 24, num_layers=2), B=3, T=11.
    B2, T2, I2, H2, L2 = 3, 11, 12, 24, 2
    key, kx2, kp2 = jax.random.split(key, 3)
    x2 = jax.random.normal(kx2, (B2, T2, I2), jnp.float32)
    params2 = init_multirnn_params(kp2, I2, H2, L2)
    out2, (h2, c2) = fwd(x2, params2)
    out2 = jax.block_until_ready(out2)
    h2 = jax.block_until_ready(h2)
    c2 = jax.block_until_ready(c2)

    assert out2.shape == (B2, T2, H2) and h2.shape == (L2, B2, H2) and c2.shape == (L2, B2, H2)
    r_out2, (r_h2, r_c2) = _lstm_reference(x2, params2)
    assert jnp.allclose(out2, r_out2, atol=8e-2, rtol=5e-2)
    assert jnp.allclose(h2, r_h2, atol=8e-2, rtol=5e-2)
    assert jnp.allclose(c2, r_c2, atol=8e-2, rtol=5e-2)

    print("KERNEL_OK")
</pallas_src>

<mosaic_0001>
module attributes {stable_mosaic.version = 11 : i64} {
  func.func @_lstm_layer_kernel(%arg0: i32, %arg1: memref<64x128xbf16, #tpu.memory_space<vmem>>, %arg2: memref<128x512xbf16, #tpu.memory_space<any>>, %arg3: memref<128x512xbf16, #tpu.memory_space<any>>, %arg4: memref<1x512xf32, #tpu.memory_space<vmem>>, %arg5: memref<64x128xbf16, #tpu.memory_space<vmem>>, %arg6: memref<8x128xf32, #tpu.memory_space<vmem>>, %arg7: memref<8x128xf32, #tpu.memory_space<vmem>>, %arg8: memref<128x512xbf16, #tpu.memory_space<vmem>>, %arg9: memref<128x512xbf16, #tpu.memory_space<vmem>>, %arg10: memref<2x!tpu.dma_semaphore, #tpu.memory_space<semaphore_mem>>, %arg11: memref<64x512xf32, #tpu.memory_space<vmem>>, %arg12: memref<8x128xf32, #tpu.memory_space<vmem>>, %arg13: memref<8x128xbf16, #tpu.memory_space<vmem>>, %arg14: memref<8x128xf32, #tpu.memory_space<vmem>>) attributes {dimension_semantics = [#tpu.dimension_semantics<arbitrary>], iteration_bounds = array<i64: 1>, scalar_prefetch = 0 : i64, scratch_operands = 7 : i64, tpu.core_type = #tpu.core_type<tc>, window_params = [{transform_indices = @transform_0, window_bounds = array<i64: 64, 128>}, {}, {}, {pipeline_mode = #tpu.pipeline_mode<synchronous>, transform_indices = @transform_3, window_bounds = array<i64: 1, 512>}, {transform_indices = @transform_4, window_bounds = array<i64: 64, 128>}, {pipeline_mode = #tpu.pipeline_mode<synchronous>, transform_indices = @transform_5, window_bounds = array<i64: 8, 128>}, {pipeline_mode = #tpu.pipeline_mode<synchronous>, transform_indices = @transform_6, window_bounds = array<i64: 8, 128>}]} {
    %c0_i32 = arith.constant 0 : i32
    %0 = arith.cmpi eq, %arg0, %c0_i32 : i32
    %1 = arith.extui %0 : i1 to i32
    %c0_i32_0 = arith.constant 0 : i32
    %2 = arith.cmpi ne, %1, %c0_i32_0 : i32
    scf.if %2 {
      %c0_i32_149 = arith.constant 0 : i32
      %238 = tpu.memref_slice %arg10[%c0_i32_149] : memref<2x!tpu.dma_semaphore, #tpu.memory_space<semaphore_mem>> -> memref<1x!tpu.dma_semaphore, #tpu.memory_space<semaphore_mem>>
      %239 = tpu.memref_squeeze %238 : memref<1x!tpu.dma_semaphore, #tpu.memory_space<semaphore_mem>> -> memref<!tpu.dma_semaphore, #tpu.memory_space<semaphore_mem>>
      tpu.enqueue_dma source(%arg2 : memref<128x512xbf16, #tpu.memory_space<any>>) target(%arg8 : memref<128x512xbf16, #tpu.memory_space<vmem>>) target_semaphore(%239 : memref<!tpu.dma_semaphore, #tpu.memory_space<semaphore_mem>>)
      %c1_i32 = arith.constant 1 : i32
      %240 = tpu.memref_slice %arg10[%c1_i32] : memref<2x!tpu.dma_semaphore, #tpu.memory_space<semaphore_mem>> -> memref<1x!tpu.dma_semaphore, #tpu.memory_space<semaphore_mem>>
      %241 = tpu.memref_squeeze %240 : memref<1x!tpu.dma_semaphore, #tpu.memory_space<semaphore_mem>> -> memref<!tpu.dma_semaphore, #tpu.memory_space<semaphore_mem>>
      tpu.enqueue_dma source(%arg3 : memref<128x512xbf16, #tpu.memory_space<any>>) target(%arg9 : memref<128x512xbf16, #tpu.memory_space<vmem>>) target_semaphore(%241 : memref<!tpu.dma_semaphore, #tpu.memory_space<semaphore_mem>>)
      %cst_150 = arith.constant 0.000000e+00 : f32
      %242 = vector.broadcast %cst_150 : f32 to vector<8x128xf32>
      %c0_151 = arith.constant 0 : index
      %c0_152 = arith.constant 0 : index
      %243 = vector.load %arg12[%c0_151, %c0_152] : memref<8x128xf32, #tpu.memory_space<vmem>>, vector<8x128xf32>
      tpu.vector_store %arg12[%c0_151, %c0_152], %242 {strides = array<i32>} : memref<8x128xf32, #tpu.memory_space<vmem>>, vector<8x128xf32>,
      %cst_153 = arith.constant 0.000000e+00 : bf16
      %244 = vector.broadcast %cst_153 : bf16 to vector<8x128xbf16>
      %c0_154 = arith.constant 0 : index
      %c0_155 = arith.constant 0 : index
      %245 = vector.load %arg13[%c0_154, %c0_155] : memref<8x128xbf16, #tpu.memory_space<vmem>>, vector<8x128xbf16>
      tpu.vector_store %arg13[%c0_154, %c0_155], %244 {strides = array<i32>} : memref<8x128xbf16, #tpu.memory_space<vmem>>, vector<8x128xbf16>,
      %cst_156 = arith.constant 0.000000e+00 : f32
      %246 = vector.broadcast %cst_156 : f32 to vector<8x128xf32>
      %c0_157 = arith.constant 0 : index
      %c0_158 = arith.constant 0 : index
      %247 = vector.load %arg14[%c0_157, %c0_158] : memref<8x128xf32, #tpu.memory_space<vmem>>, vector<8x128xf32>
      tpu.vector_store %arg14[%c0_157, %c0_158], %246 {strides = array<i32>} : memref<8x128xf32, #tpu.memory_space<vmem>>, vector<8x128xf32>,
      %c0_i32_159 = arith.constant 0 : i32
      %248 = tpu.memref_slice %arg10[%c0_i32_159] : memref<2x!tpu.dma_semaphore, #tpu.memory_space<semaphore_mem>> -> memref<1x!tpu.dma_semaphore, #tpu.memory_space<semaphore_mem>>
      %249 = tpu.memref_squeeze %248 : memref<1x!tpu.dma_semaphore, #tpu.memory_space<semaphore_mem>> -> memref<!tpu.dma_semaphore, #tpu.memory_space<semaphore_mem>>
      tpu.wait_dma2 semaphore(%249 : memref<!tpu.dma_semaphore, #tpu.memory_space<semaphore_mem>>) src(%arg2 : memref<128x512xbf16, #tpu.memory_space<any>>) dst(%arg8 : memref<128x512xbf16, #tpu.memory_space<vmem>>)
      %c1_i32_160 = arith.constant 1 : i32
      %250 = tpu.memref_slice %arg10[%c1_i32_160] : memref<2x!tpu.dma_semaphore, #tpu.memory_space<semaphore_mem>> -> memref<1x!tpu.dma_semaphore, #tpu.memory_space<semaphore_mem>>
      %251 = tpu.memref_squeeze %250 : memref<1x!tpu.dma_semaphore, #tpu.memory_space<semaphore_mem>> -> memref<!tpu.dma_semaphore, #tpu.memory_space<semaphore_mem>>
      tpu.wait_dma2 semaphore(%251 : memref<!tpu.dma_semaphore, #tpu.memory_space<semaphore_mem>>) src(%arg3 : memref<128x512xbf16, #tpu.memory_space<any>>) dst(%arg9 : memref<128x512xbf16, #tpu.memory_space<vmem>>)
    } else {
    }
    %c0 = arith.constant 0 : index
    %c0_1 = arith.constant 0 : index
    %3 = vector.load %arg1[%c0, %c0_1] : memref<64x128xbf16, #tpu.memory_space<vmem>>, vector<64x128xbf16>
    %c0_2 = arith.constant 0 : index
    %c0_3 = arith.constant 0 : index
    %4 = vector.load %arg8[%c0_2, %c0_3] : memref<128x512xbf16, #tpu.memory_space<vmem>>, vector<128x512xbf16>
    %cst = arith.constant dense<0.000000e+00> : vector<64x512xf32>
    %5 = tpu.matmul %3, %4, %cst {dimension_numbers = #tpu.dot_dimension_numbers<[1], [0], [0], [1], [0, 0, 1, 1], [], []>} : vector<64x128xbf16>, vector<128x512xbf16>, vector<64x512xf32> -> vector<64x512xf32>
    %c0_4 = arith.constant 0 : index
    %c0_5 = arith.constant 0 : index
    %6 = vector.load %arg4[%c0_4, %c0_5] : memref<1x512xf32, #tpu.memory_space<vmem>>, vector<1x512xf32>
    %7 = vector.broadcast %6 : vector<1x512xf32> to vector<64x512xf32>
    %8 = arith.addf %5, %7 : vector<64x512xf32>
    %c0_6 = arith.constant 0 : index
    %c0_7 = arith.constant 0 : index
    %9 = vector.load %arg11[%c0_6, %c0_7] : memref<64x512xf32, #tpu.memory_space<vmem>>, vector<64x512xf32>
    tpu.vector_store %arg11[%c0_6, %c0_7], %8 {strides = array<i32>} : memref<64x512xf32, #tpu.memory_space<vmem>>, vector<64x512xf32>,
    %c0_8 = arith.constant 0 : index
    %c0_9 = arith.constant 0 : index
    %10 = vector.load %arg9[%c0_8, %c0_9] : memref<128x512xbf16, #tpu.memory_space<vmem>>, vector<128x512xbf16>
    %c0_10 = arith.constant 0 : index
    %c0_11 = arith.constant 0 : index
    %11 = vector.load %arg13[%c0_10, %c0_11] : memref<8x128xbf16, #tpu.memory_space<vmem>>, vector<8x128xbf16>
    %c0_12 = arith.constant 0 : index
    %c0_13 = arith.constant 0 : index
    %12 = vector.load %arg11[%c0_12, %c0_13] : memref<64x512xf32, #tpu.memory_space<vmem>>, vector<8x512xf32>
    %cst_14 = arith.constant dense<0.000000e+00> : vector<8x512xf32>
    %13 = tpu.matmul %11, %10, %cst_14 {dimension_numbers = #tpu.dot_dimension_numbers<[1], [0], [0], [1], [0, 0, 1, 1], [], []>} : vector<8x128xbf16>, vector<128x512xbf16>, vector<8x512xf32> -> vector<8x512xf32>
    %14 = arith.addf %12, %13 : vector<8x512xf32>
    %15 = vector.extract_strided_slice %14 {offsets = [0, 0], sizes = [8, 384], strides = [1, 1]} : vector<8x512xf32> to vector<8x384xf32>
    %cst_15 = arith.constant 5.000000e-01 : f32
    %16 = vector.broadcast %cst_15 : f32 to vector<8x384xf32>
    %17 = arith.mulf %16, %15 : vector<8x384xf32>
    %18 = math.tanh %17 : vector<8x384xf32>
    %cst_16 = arith.constant 5.000000e-01 : f32
    %19 = vector.broadcast %cst_16 : f32 to vector<8x384xf32>
    %20 = arith.mulf %19, %18 : vector<8x384xf32>
    %cst_17 = arith.constant 5.000000e-01 : f32
    %21 = vector.broadcast %cst_17 : f32 to vector<8x384xf32>
    %22 = arith.addf %20, %21 : vector<8x384xf32>
    %23 = vector.extract_strided_slice %14 {offsets = [0, 384], sizes = [8, 128], strides = [1, 1]} : vector<8x512xf32> to vector<8x128xf32>
    %24 = math.tanh %23 : vector<8x128xf32>
    %25 = vector.extract_strided_slice %22 {offsets = [0, 0], sizes = [8, 128], strides = [1, 1]} : vector<8x384xf32> to vector<8x128xf32>
    %26 = vector.extract_strided_slice %22 {offsets = [0, 128], sizes = [8, 128], strides = [1, 1]} : vector<8x384xf32> to vector<8x128xf32>
    %27 = vector.extract_strided_slice %22 {offsets = [0, 256], sizes = [8, 128], strides = [1, 1]} : vector<8x384xf32> to vector<8x128xf32>
    %c0_18 = arith.constant 0 : index
    %c0_19 = arith.constant 0 : index
    %28 = vector.load %arg14[%c0_18, %c0_19] : memref<8x128xf32, #tpu.memory_space<vmem>>, vector<8x128xf32>
    %29 = arith.mulf %26, %28 : vector<8x128xf32>
    %30 = arith.mulf %25, %24 : vector<8x128xf32>
    %31 = arith.addf %29, %30 : vector<8x128xf32>
    %32 = math.tanh %31 : vector<8x128xf32>
    %33 = arith.mulf %27, %32 : vector<8x128xf32>
    %c0_20 = arith.constant 0 : index
    %c0_21 = arith.constant 0 : index
    %34 = vector.load %arg14[%c0_20, %c0_21] : memref<8x128xf32, #tpu.memory_space<vmem>>, vector<8x128xf32>
    tpu.vector_store %arg14[%c0_20, %c0_21], %31 {strides = array<i32>} : memref<8x128xf32, #tpu.memory_space<vmem>>, vector<8x128xf32>,
    %c0_22 = arith.constant 0 : index
    %c0_23 = arith.constant 0 : index
    %35 = vector.load %arg12[%c0_22, %c0_23] : memref<8x128xf32, #tpu.memory_space<vmem>>, vector<8x128xf32>
    tpu.vector_store %arg12[%c0_22, %c0_23], %33 {strides = array<i32>} : memref<8x128xf32, #tpu.memory_space<vmem>>, vector<8x128xf32>,
    %36 = arith.truncf %33 : vector<8x128xf32> to vector<8x128xbf16>
    %c0_24 = arith.constant 0 : index
    %c0_25 = arith.constant 0 : index
    %37 = vector.load %arg13[%c0_24, %c0_25] : memref<8x128xbf16, #tpu.memory_space<vmem>>, vector<8x128xbf16>
    tpu.vector_store %arg13[%c0_24, %c0_25], %36 {strides = array<i32>} : memref<8x128xbf16, #tpu.memory_space<vmem>>, vector<8x128xbf16>,
    %c0_26 = arith.constant 0 : index
    %c0_27 = arith.constant 0 : index
    %38 = vector.load %arg5[%c0_26, %c0_27] : memref<64x128xbf16, #tpu.memory_space<vmem>>, vector<8x128xbf16>
    tpu.vector_store %arg5[%c0_26, %c0_27], %36 {strides = array<i32>} : memref<64x128xbf16, #tpu.memory_space<vmem>>, vector<8x128xbf16>,
    %c0_28 = arith.constant 0 : index
    %c0_29 = arith.constant 0 : index
    %39 = vector.load %arg13[%c0_28, %c0_29] : memref<8x128xbf16, #tpu.memory_space<vmem>>, vector<8x128xbf16>
    %c8 = arith.constant 8 : index
    %c0_30 = arith.constant 0 : index
    %40 = vector.load %arg11[%c8, %c0_30] : memref<64x512xf32, #tpu.memory_space<vmem>>, vector<8x512xf32>
    %cst_31 = arith.constant dense<0.000000e+00> : vector<8x512xf32>
    %41 = tpu.matmul %39, %10, %cst_31 {dimension_numbers = #tpu.dot_dimension_numbers<[1], [0], [0], [1], [0, 0, 1, 1], [], []>} : vector<8x128xbf16>, vector<128x512xbf16>, vector<8x512xf32> -> vector<8x512xf32>
    %42 = arith.addf %40, %41 : vector<8x512xf32>
    %43 = vector.extract_strided_slice %42 {offsets = [0, 0], sizes = [8, 384], strides = [1, 1]} : vector<8x512xf32> to vector<8x384xf32>
    %cst_32 = arith.constant 5.000000e-01 : f32
    %44 = vector.broadcast %cst_32 : f32 to vector<8x384xf32>
    %45 = arith.mulf %44, %43 : vector<8x384xf32>
    %46 = math.tanh %45 : vector<8x384xf32>
    %cst_33 = arith.constant 5.000000e-01 : f32
    %47 = vector.broadcast %cst_33 : f32 to vector<8x384xf32>
    %48 = arith.mulf %47, %46 : vector<8x384xf32>
    %cst_34 = arith.constant 5.000000e-01 : f32
    %49 = vector.broadcast %cst_34 : f32 to vector<8x384xf32>
    %50 = arith.addf %48, %49 : vector<8x384xf32>
    %51 = vector.extract_strided_slice %42 {offsets = [0, 384], sizes = [8, 128], strides = [1, 1]} : vector<8x512xf32> to vector<8x128xf32>
    %52 = math.tanh %51 : vector<8x128xf32>
    %53 = vector.extract_strided_slice %50 {offsets = [0, 0], sizes = [8, 128], strides = [1, 1]} : vector<8x384xf32> to vector<8x128xf32>
    %54 = vector.extract_strided_slice %50 {offsets = [0, 128], sizes = [8, 128], strides = [1, 1]} : vector<8x384xf32> to vector<8x128xf32>
    %55 = vector.extract_strided_slice %50 {offsets = [0, 256], sizes = [8, 128], strides = [1, 1]} : vector<8x384xf32> to vector<8x128xf32>
    %c0_35 = arith.constant 0 : index
    %c0_36 = arith.constant 0 : index
    %56 = vector.load %arg14[%c0_35, %c0_36] : memref<8x128xf32, #tpu.memory_space<vmem>>, vector<8x128xf32>
    %57 = arith.mulf %54, %56 : vector<8x128xf32>
    %58 = arith.mulf %53, %52 : vector<8x128xf32>
    %59 = arith.addf %57, %58 : vector<8x128xf32>
    %60 = math.tanh %59 : vector<8x128xf32>
    %61 = arith.mulf %55, %60 : vector<8x128xf32>
    %c0_37 = arith.constant 0 : index
    %c0_38 = arith.constant 0 : index
    %62 = vector.load %arg14[%c0_37, %c0_38] : memref<8x128xf32, #tpu.memory_space<vmem>>, vector<8x128xf32>
    tpu.vector_store %arg14[%c0_37, %c0_38], %59 {strides = array<i32>} : memref<8x128xf32, #tpu.memory_space<vmem>>, vector<8x128xf32>,
    %c0_39 = arith.constant 0 : index
    %c0_40 = arith.constant 0 : index
    %63 = vector.load %arg12[%c0_39, %c0_40] : memref<8x128xf32, #tpu.memory_space<vmem>>, vector<8x128xf32>
    tpu.vector_store %arg12[%c0_39, %c0_40], %61 {strides = array<i32>} : memref<8x128xf32, #tpu.memory_space<vmem>>, vector<8x128xf32>,
    %64 = arith.truncf %61 : vector<8x128xf32> to vector<8x128xbf16>
    %c0_41 = arith.constant 0 : index
    %c0_42 = arith.constant 0 : index
    %65 = vector.load %arg13[%c0_41, %c0_42] : memref<8x128xbf16, #tpu.memory_space<vmem>>, vector<8x128xbf16>
    tpu.vector_store %arg13[%c0_41, %c0_42], %64 {strides = array<i32>} : memref<8x128xbf16, #tpu.memory_space<vmem>>, vector<8x128xbf16>,
    %c8_43 = arith.constant 8 : index
    %c0_44 = arith.constant 0 : index
    %66 = vector.load %arg5[%c8_43, %c0_44] : memref<64x128xbf16, #tpu.memory_space<vmem>>, vector<8x128xbf16>
    tpu.vector_store %arg5[%c8_43, %c0_44], %64 {strides = array<i32>} : memref<64x128xbf16, #tpu.memory_space<vmem>>, vector<8x128xbf16>,
    %c0_45 = arith.constant 0 : index
    %c0_46 = arith.constant 0 : index
    %67 = vector.load %arg13[%c0_45, %c0_46] : memref<8x128xbf16, #tpu.memory_space<vmem>>, vector<8x128xbf16>
    %c16 = arith.constant 16 : index
    %c0_47 = arith.constant 0 : index
    %68 = vector.load %arg11[%c16, %c0_47] : memref<64x512xf32, #tpu.memory_space<vmem>>, vector<8x512xf32>
    %cst_48 = arith.constant dense<0.000000e+00> : vector<8x512xf32>
    %69 = tpu.matmul %67, %10, %cst_48 {dimension_numbers = #tpu.dot_dimension_numbers<[1], [0], [0], [1], [0, 0, 1, 1], [], []>} : vector<8x128xbf16>, vector<128x512xbf16>, vector<8x512xf32> -> vector<8x512xf32>
    %70 = arith.addf %68, %69 : vector<8x512xf32>
    %71 = vector.extract_strided_slice %70 {offsets = [0, 0], sizes = [8, 384], strides = [1, 1]} : vector<8x512xf32> to vector<8x384xf32>
    %cst_49 = arith.constant 5.000000e-01 : f32
    %72 = vector.broadcast %cst_49 : f32 to vector<8x384xf32>
    %73 = arith.mulf %72, %71 : vector<8x384xf32>
    %74 = math.tanh %73 : vector<8x384xf32>
    %cst_50 = arith.constant 5.000000e-01 : f32
    %75 = vector.broadcast %cst_50 : f32 to vector<8x384xf32>
    %76 = arith.mulf %75, %74 : vector<8x384xf32>
    %cst_51 = arith.constant 5.000000e-01 : f32
    %77 = vector.broadcast %cst_51 : f32 to vector<8x384xf32>
    %78 = arith.addf %76, %77 : vector<8x384xf32>
    %79 = vector.extract_strided_slice %70 {offsets = [0, 384], sizes = [8, 128], strides = [1, 1]} : vector<8x512xf32> to vector<8x128xf32>
    %80 = math.tanh %79 : vector<8x128xf32>
    %81 = vector.extract_strided_slice %78 {offsets = [0, 0], sizes = [8, 128], strides = [1, 1]} : vector<8x384xf32> to vector<8x128xf32>
    %82 = vector.extract_strided_slice %78 {offsets = [0, 128], sizes = [8, 128], strides = [1, 1]} : vector<8x384xf32> to vector<8x128xf32>
    %83 = vector.extract_strided_slice %78 {offsets = [0, 256], sizes = [8, 128], strides = [1, 1]} : vector<8x384xf32> to vector<8x128xf32>
    %c0_52 = arith.constant 0 : index
    %c0_53 = arith.constant 0 : index
    %84 = vector.load %arg14[%c0_52, %c0_53] : memref<8x128xf32, #tpu.memory_space<vmem>>, vector<8x128xf32>
    %85 = arith.mulf %82, %84 : vector<8x128xf32>
    %86 = arith.mulf %81, %80 : vector<8x128xf32>
    %87 = arith.addf %85, %86 : vector<8x128xf32>
    %88 = math.tanh %87 : vector<8x128xf32>
    %89 = arith.mulf %83, %88 : vector<8x128xf32>
    %c0_54 = arith.constant 0 : index
    %c0_55 = arith.constant 0 : index
    %90 = vector.load %arg14[%c0_54, %c0_55] : memref<8x128xf32, #tpu.memory_space<vmem>>, vector<8x128xf32>
    tpu.vector_store %arg14[%c0_54, %c0_55], %87 {strides = array<i32>} : memref<8x128xf32, #tpu.memory_space<vmem>>, vector<8x128xf32>,
    %c0_56 = arith.constant 0 : index
    %c0_57 = arith.constant 0 : index
    %91 = vector.load %arg12[%c0_56, %c0_57] : memref<8x128xf32, #tpu.memory_space<vmem>>, vector<8x128xf32>
    tpu.vector_store %arg12[%c0_56, %c0_57], %89 {strides = array<i32>} : memref<8x128xf32, #tpu.memory_space<vmem>>, vector<8x128xf32>,
    %92 = arith.truncf %89 : vector<8x128xf32> to vector<8x128xbf16>
    %c0_58 = arith.constant 0 : index
    %c0_59 = arith.constant 0 : index
    %93 = vector.load %arg13[%c0_58, %c0_59] : memref<8x128xbf16, #tpu.memory_space<vmem>>, vector<8x128xbf16>
    tpu.vector_store %arg13[%c0_58, %c0_59], %92 {strides = array<i32>} : memref<8x128xbf16, #tpu.memory_space<vmem>>, vector<8x128xbf16>,
    %c16_60 = arith.constant 16 : index
    %c0_61 = arith.constant 0 : index
    %94 = vector.load %arg5[%c16_60, %c0_61] : memref<64x128xbf16, #tpu.memory_space<vmem>>, vector<8x128xbf16>
    tpu.vector_store %arg5[%c16_60, %c0_61], %92 {strides = array<i32>} : memref<64x128xbf16, #tpu.memory_space<vmem>>, vector<8x128xbf16>,
    %c0_62 = arith.constant 0 : index
    %c0_63 = arith.constant 0 : index
    %95 = vector.load %arg13[%c0_62, %c0_63] : memref<8x128xbf16, #tpu.memory_space<vmem>>, vector<8x128xbf16>
    %c24 = arith.constant 24 : index
    %c0_64 = arith.constant 0 : index
    %96 = vector.load %arg11[%c24, %c0_64] : memref<64x512xf32, #tpu.memory_space<vmem>>, vector<8x512xf32>
    %cst_65 = arith.constant dense<0.000000e+00> : vector<8x512xf32>
    %97 = tpu.matmul %95, %10, %cst_65 {dimension_numbers = #tpu.dot_dimension_numbers<[1], [0], [0], [1], [0, 0, 1, 1], [], []>} : vector<8x128xbf16>, vector<128x512xbf16>, vector<8x512xf32> -> vector<8x512xf32>
    %98 = arith.addf %96, %97 : vector<8x512xf32>
    %99 = vector.extract_strided_slice %98 {offsets = [0, 0], sizes = [8, 384], strides = [1, 1]} : vector<8x512xf32> to vector<8x384xf32>
    %cst_66 = arith.constant 5.000000e-01 : f32
    %100 = vector.broadcast %cst_66 : f32 to vector<8x384xf32>
    %101 = arith.mulf %100, %99 : vector<8x384xf32>
    %102 = math.tanh %101 : vector<8x384xf32>
    %cst_67 = arith.constant 5.000000e-01 : f32
    %103 = vector.broadcast %cst_67 : f32 to vector<8x384xf32>
    %104 = arith.mulf %103, %102 : vector<8x384xf32>
    %cst_68 = arith.constant 5.000000e-01 : f32
    %105 = vector.broadcast %cst_68 : f32 to vector<8x384xf32>
    %106 = arith.addf %104, %105 : vector<8x384xf32>
    %107 = vector.extract_strided_slice %98 {offsets = [0, 384], sizes = [8, 128], strides = [1, 1]} : vector<8x512xf32> to vector<8x128xf32>
    %108 = math.tanh %107 : vector<8x128xf32>
    %109 = vector.extract_strided_slice %106 {offsets = [0, 0], sizes = [8, 128], strides = [1, 1]} : vector<8x384xf32> to vector<8x128xf32>
    %110 = vector.extract_strided_slice %106 {offsets = [0, 128], sizes = [8, 128], strides = [1, 1]} : vector<8x384xf32> to vector<8x128xf32>
    %111 = vector.extract_strided_slice %106 {offsets = [0, 256], sizes = [8, 128], strides = [1, 1]} : vector<8x384xf32> to vector<8x128xf32>
    %c0_69 = arith.constant 0 : index
    %c0_70 = arith.constant 0 : index
    %112 = vector.load %arg14[%c0_69, %c0_70] : memref<8x128xf32, #tpu.memory_space<vmem>>, vector<8x128xf32>
    %113 = arith.mulf %110, %112 : vector<8x128xf32>
    %114 = arith.mulf %109, %108 : vector<8x128xf32>
    %115 = arith.addf %113, %114 : vector<8x128xf32>
    %116 = math.tanh %115 : vector<8x128xf32>
    %117 = arith.mulf %111, %116 : vector<8x128xf32>
    %c0_71 = arith.constant 0 : index
    %c0_72 = arith.constant 0 : index
    %118 = vector.load %arg14[%c0_71, %c0_72] : memref<8x128xf32, #tpu.memory_space<vmem>>, vector<8x128xf32>
    tpu.vector_store %arg14[%c0_71, %c0_72], %115 {strides = array<i32>} : memref<8x128xf32, #tpu.memory_space<vmem>>, vector<8x128xf32>,
    %c0_73 = arith.constant 0 : index
    %c0_74 = arith.constant 0 : index
    %119 = vector.load %arg12[%c0_73, %c0_74] : memref<8x128xf32, #tpu.memory_space<vmem>>, vector<8x128xf32>
    tpu.vector_store %arg12[%c0_73, %c0_74], %117 {strides = array<i32>} : memref<8x128xf32, #tpu.memory_space<vmem>>, vector<8x128xf32>,
    %120 = arith.truncf %117 : vector<8x128xf32> to vector<8x128xbf16>
    %c0_75 = arith.constant 0 : index
    %c0_76 = arith.constant 0 : index
    %121 = vector.load %arg13[%c0_75, %c0_76] : memref<8x128xbf16, #tpu.memory_space<vmem>>, vector<8x128xbf16>
    tpu.vector_store %arg13[%c0_75, %c0_76], %120 {strides = array<i32>} : memref<8x128xbf16, #tpu.memory_space<vmem>>, vector<8x128xbf16>,
    %c24_77 = arith.constant 24 : index
    %c0_78 = arith.constant 0 : index
    %122 = vector.load %arg5[%c24_77, %c0_78] : memref<64x128xbf16, #tpu.memory_space<vmem>>, vector<8x128xbf16>
    tpu.vector_store %arg5[%c24_77, %c0_78], %120 {strides = array<i32>} : memref<64x128xbf16, #tpu.memory_space<vmem>>, vector<8x128xbf16>,
    %c0_79 = arith.constant 0 : index
    %c0_80 = arith.constant 0 : index
    %123 = vector.load %arg13[%c0_79, %c0_80] : memref<8x128xbf16, #tpu.memory_space<vmem>>, vector<8x128xbf16>
    %c32 = arith.constant 32 : index
    %c0_81 = arith.constant 0 : index
    %124 = vector.load %arg11[%c32, %c0_81] : memref<64x512xf32, #tpu.memory_space<vmem>>, vector<8x512xf32>
    %cst_82 = arith.constant dense<0.000000e+00> : vector<8x512xf32>
    %125 = tpu.matmul %123, %10, %cst_82 {dimension_numbers = #tpu.dot_dimension_numbers<[1], [0], [0], [1], [0, 0, 1, 1], [], []>} : vector<8x128xbf16>, vector<128x512xbf16>, vector<8x512xf32> -> vector<8x512xf32>
    %126 = arith.addf %124, %125 : vector<8x512xf32>
    %127 = vector.extract_strided_slice %126 {offsets = [0, 0], sizes = [8, 384], strides = [1, 1]} : vector<8x512xf32> to vector<8x384xf32>
    %cst_83 = arith.constant 5.000000e-01 : f32
    %128 = vector.broadcast %cst_83 : f32 to vector<8x384xf32>
    %129 = arith.mulf %128, %127 : vector<8x384xf32>
    %130 = math.tanh %129 : vector<8x384xf32>
    %cst_84 = arith.constant 5.000000e-01 : f32
    %131 = vector.broadcast %cst_84 : f32 to vector<8x384xf32>
    %132 = arith.mulf %131, %130 : vector<8x384xf32>
    %cst_85 = arith.constant 5.000000e-01 : f32
    %133 = vector.broadcast %cst_85 : f32 to vector<8x384xf32>
    %134 = arith.addf %132, %133 : vector<8x384xf32>
    %135 = vector.extract_strided_slice %126 {offsets = [0, 384], sizes = [8, 128], strides = [1, 1]} : vector<8x512xf32> to vector<8x128xf32>
    %136 = math.tanh %135 : vector<8x128xf32>
    %137 = vector.extract_strided_slice %134 {offsets = [0, 0], sizes = [8, 128], strides = [1, 1]} : vector<8x384xf32> to vector<8x128xf32>
    %138 = vector.extract_strided_slice %134 {offsets = [0, 128], sizes = [8, 128], strides = [1, 1]} : vector<8x384xf32> to vector<8x128xf32>
    %139 = vector.extract_strided_slice %134 {offsets = [0, 256], sizes = [8, 128], strides = [1, 1]} : vector<8x384xf32> to vector<8x128xf32>
    %c0_86 = arith.constant 0 : index
    %c0_87 = arith.constant 0 : index
    %140 = vector.load %arg14[%c0_86, %c0_87] : memref<8x128xf32, #tpu.memory_space<vmem>>, vector<8x128xf32>
    %141 = arith.mulf %138, %140 : vector<8x128xf32>
    %142 = arith.mulf %137, %136 : vector<8x128xf32>
    %143 = arith.addf %141, %142 : vector<8x128xf32>
    %144 = math.tanh %143 : vector<8x128xf32>
    %145 = arith.mulf %139, %144 : vector<8x128xf32>
    %c0_88 = arith.constant 0 : index
    %c0_89 = arith.constant 0 : index
    %146 = vector.load %arg14[%c0_88, %c0_89] : memref<8x128xf32, #tpu.memory_space<vmem>>, vector<8x128xf32>
    tpu.vector_store %arg14[%c0_88, %c0_89], %143 {strides = array<i32>} : memref<8x128xf32, #tpu.memory_space<vmem>>, vector<8x128xf32>,
    %c0_90 = arith.constant 0 : index
    %c0_91 = arith.constant 0 : index
    %147 = vector.load %arg12[%c0_90, %c0_91] : memref<8x128xf32, #tpu.memory_space<vmem>>, vector<8x128xf32>
    tpu.vector_store %arg12[%c0_90, %c0_91], %145 {strides = array<i32>} : memref<8x128xf32, #tpu.memory_space<vmem>>, vector<8x128xf32>,
    %148 = arith.truncf %145 : vector<8x128xf32> to vector<8x128xbf16>
    %c0_92 = arith.constant 0 : index
    %c0_93 = arith.constant 0 : index
    %149 = vector.load %arg13[%c0_92, %c0_93] : memref<8x128xbf16, #tpu.memory_space<vmem>>, vector<8x128xbf16>
    tpu.vector_store %arg13[%c0_92, %c0_93], %148 {strides = array<i32>} : memref<8x128xbf16, #tpu.memory_space<vmem>>, vector<8x128xbf16>,
    %c32_94 = arith.constant 32 : index
    %c0_95 = arith.constant 0 : index
    %150 = vector.load %arg5[%c32_94, %c0_95] : memref<64x128xbf16, #tpu.memory_space<vmem>>, vector<8x128xbf16>
    tpu.vector_store %arg5[%c32_94, %c0_95], %148 {strides = array<i32>} : memref<64x128xbf16, #tpu.memory_space<vmem>>, vector<8x128xbf16>,
    %c0_96 = arith.constant 0 : index
    %c0_97 = arith.constant 0 : index
    %151 = vector.load %arg13[%c0_96, %c0_97] : memref<8x128xbf16, #tpu.memory_space<vmem>>, vector<8x128xbf16>
    %c40 = arith.constant 40 : index
    %c0_98 = arith.constant 0 : index
    %152 = vector.load %arg11[%c40, %c0_98] : memref<64x512xf32, #tpu.memory_space<vmem>>, vector<8x512xf32>
    %cst_99 = arith.constant dense<0.000000e+00> : vector<8x512xf32>
    %153 = tpu.matmul %151, %10, %cst_99 {dimension_numbers = #tpu.dot_dimension_numbers<[1], [0], [0], [1], [0, 0, 1, 1], [], []>} : vector<8x128xbf16>, vector<128x512xbf16>, vector<8x512xf32> -> vector<8x512xf32>
    %154 = arith.addf %152, %153 : vector<8x512xf32>
    %155 = vector.extract_strided_slice %154 {offsets = [0, 0], sizes = [8, 384], strides = [1, 1]} : vector<8x512xf32> to vector<8x384xf32>
    %cst_100 = arith.constant 5.000000e-01 : f32
    %156 = vector.broadcast %cst_100 : f32 to vector<8x384xf32>
    %157 = arith.mulf %156, %155 : vector<8x384xf32>
    %158 = math.tanh %157 : vector<8x384xf32>
    %cst_101 = arith.constant 5.000000e-01 : f32
    %159 = vector.broadcast %cst_101 : f32 to vector<8x384xf32>
    %160 = arith.mulf %159, %158 : vector<8x384xf32>
    %cst_102 = arith.constant 5.000000e-01 : f32
    %161 = vector.broadcast %cst_102 : f32 to vector<8x384xf32>
    %162 = arith.addf %160, %161 : vector<8x384xf32>
    %163 = vector.extract_strided_slice %154 {offsets = [0, 384], sizes = [8, 128], strides = [1, 1]} : vector<8x512xf32> to vector<8x128xf32>
    %164 = math.tanh %163 : vector<8x128xf32>
    %165 = vector.extract_strided_slice %162 {offsets = [0, 0], sizes = [8, 128], strides = [1, 1]} : vector<8x384xf32> to vector<8x128xf32>
    %166 = vector.extract_strided_slice %162 {offsets = [0, 128], sizes = [8, 128], strides = [1, 1]} : vector<8x384xf32> to vector<8x128xf32>
    %167 = vector.extract_strided_slice %162 {offsets = [0, 256], sizes = [8, 128], strides = [1, 1]} : vector<8x384xf32> to vector<8x128xf32>
    %c0_103 = arith.constant 0 : index
    %c0_104 = arith.constant 0 : index
    %168 = vector.load %arg14[%c0_103, %c0_104] : memref<8x128xf32, #tpu.memory_space<vmem>>, vector<8x128xf32>
    %169 = arith.mulf %166, %168 : vector<8x128xf32>
    %170 = arith.mulf %165, %164 : vector<8x128xf32>
    %171 = arith.addf %169, %170 : vector<8x128xf32>
    %172 = math.tanh %171 : vector<8x128xf32>
    %173 = arith.mulf %167, %172 : vector<8x128xf32>
    %c0_105 = arith.constant 0 : index
    %c0_106 = arith.constant 0 : index
    %174 = vector.load %arg14[%c0_105, %c0_106] : memref<8x128xf32, #tpu.memory_space<vmem>>, vector<8x128xf32>
    tpu.vector_store %arg14[%c0_105, %c0_106], %171 {strides = array<i32>} : memref<8x128xf32, #tpu.memory_space<vmem>>, vector<8x128xf32>,
    %c0_107 = arith.constant 0 : index
    %c0_108 = arith.constant 0 : index
    %175 = vector.load %arg12[%c0_107, %c0_108] : memref<8x128xf32, #tpu.memory_space<vmem>>, vector<8x128xf32>
    tpu.vector_store %arg12[%c0_107, %c0_108], %173 {strides = array<i32>} : memref<8x128xf32, #tpu.memory_space<vmem>>, vector<8x128xf32>,
    %176 = arith.truncf %173 : vector<8x128xf32> to vector<8x128xbf16>
    %c0_109 = arith.constant 0 : index
    %c0_110 = arith.constant 0 : index
    %177 = vector.load %arg13[%c0_109, %c0_110] : memref<8x128xbf16, #tpu.memory_space<vmem>>, vector<8x128xbf16>
    tpu.vector_store %arg13[%c0_109, %c0_110], %176 {strides = array<i32>} : memref<8x128xbf16, #tpu.memory_space<vmem>>, vector<8x128xbf16>,
    %c40_111 = arith.constant 40 : index
    %c0_112 = arith.constant 0 : index
    %178 = vector.load %arg5[%c40_111, %c0_112] : memref<64x128xbf16, #tpu.memory_space<vmem>>, vector<8x128xbf16>
    tpu.vector_store %arg5[%c40_111, %c0_112], %176 {strides = array<i32>} : memref<64x128xbf16, #tpu.memory_space<vmem>>, vector<8x128xbf16>,
    %c0_113 = arith.constant 0 : index
    %c0_114 = arith.constant 0 : index
    %179 = vector.load %arg13[%c0_113, %c0_114] : memref<8x128xbf16, #tpu.memory_space<vmem>>, vector<8x128xbf16>
    %c48 = arith.constant 48 : index
    %c0_115 = arith.constant 0 : index
    %180 = vector.load %arg11[%c48, %c0_115] : memref<64x512xf32, #tpu.memory_space<vmem>>, vector<8x512xf32>
    %cst_116 = arith.constant dense<0.000000e+00> : vector<8x512xf32>
    %181 = tpu.matmul %179, %10, %cst_116 {dimension_numbers = #tpu.dot_dimension_numbers<[1], [0], [0], [1], [0, 0, 1, 1], [], []>} : vector<8x128xbf16>, vector<128x512xbf16>, vector<8x512xf32> -> vector<8x512xf32>
    %182 = arith.addf %180, %181 : vector<8x512xf32>
    %183 = vector.extract_strided_slice %182 {offsets = [0, 0], sizes = [8, 384], strides = [1, 1]} : vector<8x512xf32> to vector<8x384xf32>
    %cst_117 = arith.constant 5.000000e-01 : f32
    %184 = vector.broadcast %cst_117 : f32 to vector<8x384xf32>
    %185 = arith.mulf %184, %183 : vector<8x384xf32>
    %186 = math.tanh %185 : vector<8x384xf32>
    %cst_118 = arith.constant 5.000000e-01 : f32
    %187 = vector.broadcast %cst_118 : f32 to vector<8x384xf32>
    %188 = arith.mulf %187, %186 : vector<8x384xf32>
    %cst_119 = arith.constant 5.000000e-01 : f32
    %189 = vector.broadcast %cst_119 : f32 to vector<8x384xf32>
    %190 = arith.addf %188, %189 : vector<8x384xf32>
    %191 = vector.extract_strided_slice %182 {offsets = [0, 384], sizes = [8, 128], strides = [1, 1]} : vector<8x512xf32> to vector<8x128xf32>
    %192 = math.tanh %191 : vector<8x128xf32>
    %193 = vector.extract_strided_slice %190 {offsets = [0, 0], sizes = [8, 128], strides = [1, 1]} : vector<8x384xf32> to vector<8x128xf32>
    %194 = vector.extract_strided_slice %190 {offsets = [0, 128], sizes = [8, 128], strides = [1, 1]} : vector<8x384xf32> to vector<8x128xf32>
    %195 = vector.extract_strided_slice %190 {offsets = [0, 256], sizes = [8, 128], strides = [1, 1]} : vector<8x384xf32> to vector<8x128xf32>
    %c0_120 = arith.constant 0 : index
    %c0_121 = arith.constant 0 : index
    %196 = vector.load %arg14[%c0_120, %c0_121] : memref<8x128xf32, #tpu.memory_space<vmem>>, vector<8x128xf32>
    %197 = arith.mulf %194, %196 : vector<8x128xf32>
    %198 = arith.mulf %193, %192 : vector<8x128xf32>
    %199 = arith.addf %197, %198 : vector<8x128xf32>
    %200 = math.tanh %199 : vector<8x128xf32>
    %201 = arith.mulf %195, %200 : vector<8x128xf32>
    %c0_122 = arith.constant 0 : index
    %c0_123 = arith.constant 0 : index
    %202 = vector.load %arg14[%c0_122, %c0_123] : memref<8x128xf32, #tpu.memory_space<vmem>>, vector<8x128xf32>
    tpu.vector_store %arg14[%c0_122, %c0_123], %199 {strides = array<i32>} : memref<8x128xf32, #tpu.memory_space<vmem>>, vector<8x128xf32>,
    %c0_124 = arith.constant 0 : index
    %c0_125 = arith.constant 0 : index
    %203 = vector.load %arg12[%c0_124, %c0_125] : memref<8x128xf32, #tpu.memory_space<vmem>>, vector<8x128xf32>
    tpu.vector_store %arg12[%c0_124, %c0_125], %201 {strides = array<i32>} : memref<8x128xf32, #tpu.memory_space<vmem>>, vector<8x128xf32>,
    %204 = arith.truncf %201 : vector<8x128xf32> to vector<8x128xbf16>
    %c0_126 = arith.constant 0 : index
    %c0_127 = arith.constant 0 : index
    %205 = vector.load %arg13[%c0_126, %c0_127] : memref<8x128xbf16, #tpu.memory_space<vmem>>, vector<8x128xbf16>
    tpu.vector_store %arg13[%c0_126, %c0_127], %204 {strides = array<i32>} : memref<8x128xbf16, #tpu.memory_space<vmem>>, vector<8x128xbf16>,
    %c48_128 = arith.constant 48 : index
    %c0_129 = arith.constant 0 : index
    %206 = vector.load %arg5[%c48_128, %c0_129] : memref<64x128xbf16, #tpu.memory_space<vmem>>, vector<8x128xbf16>
    tpu.vector_store %arg5[%c48_128, %c0_129], %204 {strides = array<i32>} : memref<64x128xbf16, #tpu.memory_space<vmem>>, vector<8x128xbf16>,
    %c0_130 = arith.constant 0 : index
    %c0_131 = arith.constant 0 : index
    %207 = vector.load %arg13[%c0_130, %c0_131] : memref<8x128xbf16, #tpu.memory_space<vmem>>, vector<8x128xbf16>
    %c56 = arith.constant 56 : index
    %c0_132 = arith.constant 0 : index
    %208 = vector.load %arg11[%c56, %c0_132] : memref<64x512xf32, #tpu.memory_space<vmem>>, vector<8x512xf32>
    %cst_133 = arith.constant dense<0.000000e+00> : vector<8x512xf32>
    %209 = tpu.matmul %207, %10, %cst_133 {dimension_numbers = #tpu.dot_dimension_numbers<[1], [0], [0], [1], [0, 0, 1, 1], [], []>} : vector<8x128xbf16>, vector<128x512xbf16>, vector<8x512xf32> -> vector<8x512xf32>
    %210 = arith.addf %208, %209 : vector<8x512xf32>
    %211 = vector.extract_strided_slice %210 {offsets = [0, 0], sizes = [8, 384], strides = [1, 1]} : vector<8x512xf32> to vector<8x384xf32>
    %cst_134 = arith.constant 5.000000e-01 : f32
    %212 = vector.broadcast %cst_134 : f32 to vector<8x384xf32>
    %213 = arith.mulf %212, %211 : vector<8x384xf32>
    %214 = math.tanh %213 : vector<8x384xf32>
    %cst_135 = arith.constant 5.000000e-01 : f32
    %215 = vector.broadcast %cst_135 : f32 to vector<8x384xf32>
    %216 = arith.mulf %215, %214 : vector<8x384xf32>
    %cst_136 = arith.constant 5.000000e-01 : f32
    %217 = vector.broadcast %cst_136 : f32 to vector<8x384xf32>
    %218 = arith.addf %216, %217 : vector<8x384xf32>
    %219 = vector.extract_strided_slice %210 {offsets = [0, 384], sizes = [8, 128], strides = [1, 1]} : vector<8x512xf32> to vector<8x128xf32>
    %220 = math.tanh %219 : vector<8x128xf32>
    %221 = vector.extract_strided_slice %218 {offsets = [0, 0], sizes = [8, 128], strides = [1, 1]} : vector<8x384xf32> to vector<8x128xf32>
    %222 = vector.extract_strided_slice %218 {offsets = [0, 128], sizes = [8, 128], strides = [1, 1]} : vector<8x384xf32> to vector<8x128xf32>
    %223 = vector.extract_strided_slice %218 {offsets = [0, 256], sizes = [8, 128], strides = [1, 1]} : vector<8x384xf32> to vector<8x128xf32>
    %c0_137 = arith.constant 0 : index
    %c0_138 = arith.constant 0 : index
    %224 = vector.load %arg14[%c0_137, %c0_138] : memref<8x128xf32, #tpu.memory_space<vmem>>, vector<8x128xf32>
    %225 = arith.mulf %222, %224 : vector<8x128xf32>
    %226 = arith.mulf %221, %220 : vector<8x128xf32>
    %227 = arith.addf %225, %226 : vector<8x128xf32>
    %228 = math.tanh %227 : vector<8x128xf32>
    %229 = arith.mulf %223, %228 : vector<8x128xf32>
    %c0_139 = arith.constant 0 : index
    %c0_140 = arith.constant 0 : index
    %230 = vector.load %arg14[%c0_139, %c0_140] : memref<8x128xf32, #tpu.memory_space<vmem>>, vector<8x128xf32>
    tpu.vector_store %arg14[%c0_139, %c0_140], %227 {strides = array<i32>} : memref<8x128xf32, #tpu.memory_space<vmem>>, vector<8x128xf32>,
    %c0_141 = arith.constant 0 : index
    %c0_142 = arith.constant 0 : index
    %231 = vector.load %arg12[%c0_141, %c0_142] : memref<8x128xf32, #tpu.memory_space<vmem>>, vector<8x128xf32>
    tpu.vector_store %arg12[%c0_141, %c0_142], %229 {strides = array<i32>} : memref<8x128xf32, #tpu.memory_space<vmem>>, vector<8x128xf32>,
    %232 = arith.truncf %229 : vector<8x128xf32> to vector<8x128xbf16>
    %c0_143 = arith.constant 0 : index
    %c0_144 = arith.constant 0 : index
    %233 = vector.load %arg13[%c0_143, %c0_144] : memref<8x128xbf16, #tpu.memory_space<vmem>>, vector<8x128xbf16>
    tpu.vector_store %arg13[%c0_143, %c0_144], %232 {strides = array<i32>} : memref<8x128xbf16, #tpu.memory_space<vmem>>, vector<8x128xbf16>,
    %c56_145 = arith.constant 56 : index
    %c0_146 = arith.constant 0 : index
    %234 = vector.load %arg5[%c56_145, %c0_146] : memref<64x128xbf16, #tpu.memory_space<vmem>>, vector<8x128xbf16>
    tpu.vector_store %arg5[%c56_145, %c0_146], %232 {strides = array<i32>} : memref<64x128xbf16, #tpu.memory_space<vmem>>, vector<8x128xbf16>,
    %c0_i32_147 = arith.constant 0 : i32
    %235 = arith.cmpi eq, %arg0, %c0_i32_147 : i32
    %236 = arith.extui %235 : i1 to i32
    %c0_i32_148 = arith.constant 0 : i32
    %237 = arith.cmpi ne, %236, %c0_i32_148 : i32
    scf.if %237 {
      %c0_149 = arith.constant 0 : index
      %c0_150 = arith.constant 0 : index
      %238 = vector.load %arg12[%c0_149, %c0_150] : memref<8x128xf32, #tpu.memory_space<vmem>>, vector<8x128xf32>
      %c0_151 = arith.constant 0 : index
      %c0_152 = arith.constant 0 : index
      %239 = vector.load %arg6[%c0_151, %c0_152] : memref<8x128xf32, #tpu.memory_space<vmem>>, vector<8x128xf32>
      tpu.vector_store %arg6[%c0_151, %c0_152], %238 {strides = array<i32>} : memref<8x128xf32, #tpu.memory_space<vmem>>, vector<8x128xf32>,
      %c0_153 = arith.constant 0 : index
      %c0_154 = arith.constant 0 : index
      %240 = vector.load %arg14[%c0_153, %c0_154] : memref<8x128xf32, #tpu.memory_space<vmem>>, vector<8x128xf32>
      %c0_155 = arith.constant 0 : index
      %c0_156 = arith.constant 0 : index
      %241 = vector.load %arg7[%c0_155, %c0_156] : memref<8x128xf32, #tpu.memory_space<vmem>>, vector<8x128xf32>
      tpu.vector_store %arg7[%c0_155, %c0_156], %240 {strides = array<i32>} : memref<8x128xf32, #tpu.memory_space<vmem>>, vector<8x128xf32>,
    } else {
    }
    return
  }
  func.func @transform_0(%arg0: i32) -> (i32, i32) {
    %c0_i32 = arith.constant 0 : i32
    %c0_i32_0 = arith.constant 0 : i32
    return %arg0, %c0_i32 : i32, i32
  }
  func.func @transform_3(%arg0: i32) -> (i32, i32) {
    %c0_i32 = arith.constant 0 : i32
    %c0_i32_0 = arith.constant 0 : i32
    %c0_i32_1 = arith.constant 0 : i32
    return %c0_i32, %c0_i32_0 : i32, i32
  }
  func.func @transform_4(%arg0: i32) -> (i32, i32) {
    %c0_i32 = arith.constant 0 : i32
    %c0_i32_0 = arith.constant 0 : i32
    return %arg0, %c0_i32 : i32, i32
  }
  func.func @transform_5(%arg0: i32) -> (i32, i32) {
    %c0_i32 = arith.constant 0 : i32
    %c0_i32_0 = arith.constant 0 : i32
    %c0_i32_1 = arith.constant 0 : i32
    return %c0_i32, %c0_i32_0 : i32, i32
  }
  func.func @transform_6(%arg0: i32) -> (i32, i32) {
    %c0_i32 = arith.constant 0 : i32
    %c0_i32_0 = arith.constant 0 : i32
    %c0_i32_1 = arith.constant 0 : i32
    return %c0_i32, %c0_i32_0 : i32, i32
  }
}

</mosaic_0001>

<llo_original>
// kernel: multirnn_forward.1
$region0: #{multirnn_forward.1}
  #allocation0 [shape = 'u32[]', space=smem, size = 0x4, offset = 0x4, fixed_abs, tag = 'smem constant byte address 0x4 - core index']
  #allocation1 [shape = 'u32[144,128]{1,0:T(1,128)}', space=vmem, size = 0x12000, scoped, tag = 'internal scratch']
  #allocation2 [shape = 'bf16[128,512]{1,0:T(16,128)(2,1)}', space=vmem, size = 0x20000, scoped, tag = 'scratch operand']
  #allocation3 [shape = 'bf16[128,512]{1,0:T(16,128)(2,1)}', space=vmem, size = 0x20000, scoped, tag = 'scratch operand']
  #allocation4 [shape = 's32[2]{0}', space=sflag, size = 0x8, scoped, tag = 'scratch operand']
  #allocation5 [shape = 'f32[64,512]{1,0:T(8,128)}', space=vmem, size = 0x20000, scoped, tag = 'scratch operand']
  #allocation6 [shape = 'f32[8,128]{1,0:T(8,128)}', space=vmem, size = 0x1000, scoped, tag = 'scratch operand']
  #allocation7 [shape = 'bf16[8,128]{1,0:T(8,128)(2,1)}', space=vmem, size = 0x800, scoped, tag = 'scratch operand']
  #allocation8 [shape = 'f32[8,128]{1,0:T(8,128)}', space=vmem, size = 0x1000, scoped, tag = 'scratch operand']
  #allocation9 [shape = 's32[]', space=sflag, size = 0x4, offset = 0, fixed_abs, tag = 'sflag constant byte address 0x0 - dummy sync flag']
  #allocation10 [shape = 's32[]', space=sflag, size = 0x4, offset = 0, fixed_abs, tag = 'sflag constant byte address 0x0 - dummy sync flag']
  %s0 = inlined_call_operand.vmem [shape: bf16[64,128], index: 0, kind: input, shape index: {}]
  %s1 = inlined_call_operand.vmem [shape: bf16[128,512], index: 1, kind: input, shape index: {}]
  %s2 = inlined_call_operand.vmem [shape: bf16[128,512], index: 2, kind: input, shape index: {}]
  %s3 = inlined_call_operand.vmem [shape: f32[1,512], index: 3, kind: input, shape index: {}]
  %s4 = inlined_call_operand.vmem [shape: bf16[64,128], index: 4, kind: output, shape index: {0}]
  %s5 = inlined_call_operand.vmem [shape: f32[8,128], index: 5, kind: output, shape index: {1}]
  %s6 = inlined_call_operand.vmem [shape: f32[8,128], index: 6, kind: output, shape index: {2}]
  %7 = xla_tuple %s4, %s5, %s6
  %s8 = sld [smem:[#allocation0]]
  $region116: #{multirnn_forward.1} parent=0
    _
  %s10 = ssub.s32 1, %s8
  %s11 = scalar_select 0, %s10, %s8
  // Predicated region
  $region2: #{multirnn_forward.1} parent=0 // pred_check
    _
  $region3: #{multirnn_forward.1} parent=0 // pred_check_branch
    %13 = sbr.rel (0) target = $region5
  $region4: #{multirnn_forward.1} parent=0 // pred_region
    _
  $region5: #{multirnn_forward.1} parent=0 // pred_fallthru
    _
  // Predicated region
  $region6: #{multirnn_forward.1} parent=0 // pred_check
    _
  $region7: #{multirnn_forward.1} parent=0 // pred_check_branch
    %15 = sbr.rel (0) target = $region9
  $region8: #{multirnn_forward.1} parent=0 // pred_region
    _
  $region9: #{multirnn_forward.1} parent=0 // pred_fallthru
    _
  %p17 = scmp.eq.s32.totalorder 0, 0
  // Predicated region
  $region10: #{multirnn_forward.1} parent=0 // pred_check
    %p18 = pneg %p17
  $region11: #{multirnn_forward.1} parent=0 // pred_check_branch
    %20 = sbr.rel (%p18) target = $region13
  $region12: #{multirnn_forward.1} parent=0 // pred_region
    %p22 = scmp.lt.u32.totalorder 4, 8
    %p23 = pneg %p22
    // Predicated region
    $region14: #{multirnn_forward.1} parent=12 // pred_check
      _
    $region15: #{multirnn_forward.1} parent=12 // pred_check_branch
      %25 = sbr.rel (%p22) target = $region17
    $region16: #{multirnn_forward.1} parent=12 // pred_region
      %s166 = sand.u32 4, 7
      %p167 = scmp.eq.s32.totalorder %s166, 0
      %p168 = pneg %p167
      // Predicated region
      $region29: #{multirnn_forward.1} parent=16 // pred_check
        _
      $region30: #{multirnn_forward.1} parent=16 // pred_check_branch
        %170 = sbr.rel (%p167) target = $region32
      $region31: #{multirnn_forward.1} parent=16 // pred_region
        %s171 = sand.u32 4, 7
        %s172 = ssub.s32 4, %s171
        %s173 = scalar_lea.vmem %s1, %s172
        %s174 = ssub.s32 4, %s171
        %s175 = scalar_lea.vmem [#allocation2], %s174
        loop: start=0, step=1, limit=1
        $region33: #{multirnn_forward.1} parent=31 // loop_pre_header
          _
        $region34: #{multirnn_forward.1} parent=31 // loop_header
          %s177 = sphi 0, %s181
          %p178 = scmp.ge.s32.totalorder %s177, 1
          %s182 = sphi %s1, %s1
          %s183 = sphi [#allocation2], [#allocation2]
        $region35: #{multirnn_forward.1} parent=31 // loop_header_branch
          %180 = sbr.rel (%p178) target = $region39
        $region36: #{multirnn_forward.1} parent=31 // loop_body
          _
        $region37: #{multirnn_forward.1} parent=31 // loop_footer
          %s181 = sadd.s32 1, %s177
        $region38: #{multirnn_forward.1} parent=31 // loop_footer_branch
          %176 = sbr.rel target = $region34
        $region39: #{multirnn_forward.1} parent=31 // loop_exit
          _
        %s184 = sshllo.u32 0, %s171
        loop: start=0, step=1, limit=1
        $region40: #{multirnn_forward.1} parent=31 // loop_pre_header
          _
        $region41: #{multirnn_forward.1} parent=31 // loop_header
          %s186 = sphi 0, %s190
          %p187 = scmp.ge.s32.totalorder %s186, 1
          %s191 = sphi %s173, %s173
          %s192 = sphi %s175, %s175
        $region42: #{multirnn_forward.1} parent=31 // loop_header_branch
          %189 = sbr.rel (%p187) target = $region46
        $region43: #{multirnn_forward.1} parent=31 // loop_body
          %v193 = vld [vmem:[%s191] sm:%s184]
          %194 = vst [vmem:[%s192] sm:%s184] %v193
          %v195 = vld [vmem:[%s191 + $0x10] sm:%s184]
          %196 = vst [vmem:[%s192 + $0x4] sm:%s184] %v195
          %v197 = vld [vmem:[%s191 + $0x4] sm:%s184]
          %198 = vst [vmem:[%s192 + $0x8] sm:%s184] %v197
          %v199 = vld [vmem:[%s191 + $0x14] sm:%s184]
          %200 = vst [vmem:[%s192 + $0xc] sm:%s184] %v199
          %v201 = vld [vmem:[%s191 + $0x8] sm:%s184]
          %202 = vst [vmem:[%s192 + $0x10] sm:%s184] %v201
          %v203 = vld [vmem:[%s191 + $0x18] sm:%s184]
          %204 = vst [vmem:[%s192 + $0x14] sm:%s184] %v203
          %v205 = vld [vmem:[%s191 + $0xc] sm:%s184]
          %206 = vst [vmem:[%s192 + $0x18] sm:%s184] %v205
          %v207 = vld [vmem:[%s191 + $0x1c] sm:%s184]
          %208 = vst [vmem:[%s192 + $0x1c] sm:%s184] %v207
          %v209 = vld [vmem:[%s191 + $0x20] sm:%s184]
          %210 = vst [vmem:[%s192 + $0x20] sm:%s184] %v209
          %v211 = vld [vmem:[%s191 + $0x30] sm:%s184]
          %212 = vst [vmem:[%s192 + $0x24] sm:%s184] %v211
          %v213 = vld [vmem:[%s191 + $0x24] sm:%s184]
          %214 = vst [vmem:[%s192 + $0x28] sm:%s184] %v213
          %v215 = vld [vmem:[%s191 + $0x34] sm:%s184]
          %216 = vst [vmem:[%s192 + $0x2c] sm:%s184] %v215
          %v217 = vld [vmem:[%s191 + $0x28] sm:%s184]
          %218 = vst [vmem:[%s192 + $0x30] sm:%s184] %v217
          %v219 = vld [vmem:[%s191 + $0x38] sm:%s184]
          %220 = vst [vmem:[%s192 + $0x34] sm:%s184] %v219
          %v221 = vld [vmem:[%s191 + $0x2c] sm:%s184]
          %222 = vst [vmem:[%s192 + $0x38] sm:%s184] %v221
          %v223 = vld [vmem:[%s191 + $0x3c] sm:%s184]
          %224 = vst [vmem:[%s192 + $0x3c] sm:%s184] %v223
          %v225 = vld [vmem:[%s191 + $0x40] sm:%s184]
          %226 = vst [vmem:[%s192 + $0x40] sm:%s184] %v225
          %v227 = vld [vmem:[%s191 + $0x50] sm:%s184]
          %228 = vst [vmem:[%s192 + $0x44] sm:%s184] %v227
          %v229 = vld [vmem:[%s191 + $0x44] sm:%s184]
          %230 = vst [vmem:[%s192 + $0x48] sm:%s184] %v229
          %v231 = vld [vmem:[%s191 + $0x54] sm:%s184]
          %232 = vst [vmem:[%s192 + $0x4c] sm:%s184] %v231
          %v233 = vld [vmem:[%s191 + $0x48] sm:%s184]
          %234 = vst [vmem:[%s192 + $0x50] sm:%s184] %v233
          %v235 = vld [vmem:[%s191 + $0x58] sm:%s184]
          %236 = vst [vmem:[%s192 + $0x54] sm:%s184] %v235
          %v237 = vld [vmem:[%s191 + $0x4c] sm:%s184]
          %238 = vst [vmem:[%s192 + $0x58] sm:%s184] %v237
          %v239 = vld [vmem:[%s191 + $0x5c] sm:%s184]
          %240 = vst [vmem:[%s192 + $0x5c] sm:%s184] %v239
          %v241 = vld [vmem:[%s191 + $0x60] sm:%s184]
          %242 = vst [vmem:[%s192 + $0x60] sm:%s184] %v241
          %v243 = vld [vmem:[%s191 + $0x70] sm:%s184]
          %244 = vst [vmem:[%s192 + $0x64] sm:%s184] %v243
          %v245 = vld [vmem:[%s191 + $0x64] sm:%s184]
          %246 = vst [vmem:[%s192 + $0x68] sm:%s184] %v245
          %v247 = vld [vmem:[%s191 + $0x74] sm:%s184]
          %248 = vst [vmem:[%s192 + $0x6c] sm:%s184] %v247
          %v249 = vld [vmem:[%s191 + $0x68] sm:%s184]
          %250 = vst [vmem:[%s192 + $0x70] sm:%s184] %v249
          %v251 = vld [vmem:[%s191 + $0x78] sm:%s184]
          %252 = vst [vmem:[%s192 + $0x74] sm:%s184] %v251
          %v253 = vld [vmem:[%s191 + $0x6c] sm:%s184]
          %254 = vst [vmem:[%s192 + $0x78] sm:%s184] %v253
          %v255 = vld [vmem:[%s191 + $0x7c] sm:%s184]
          %256 = vst [vmem:[%s192 + $0x7c] sm:%s184] %v255
          %v257 = vld [vmem:[%s191 + $0x80] sm:%s184]
          %258 = vst [vmem:[%s192 + $0x80] sm:%s184] %v257
          %v259 = vld [vmem:[%s191 + $0x90] sm:%s184]
          %260 = vst [vmem:[%s192 + $0x84] sm:%s184] %v259
          %v261 = vld [vmem:[%s191 + $0x84] sm:%s184]
          %262 = vst [vmem:[%s192 + $0x88] sm:%s184] %v261
          %v263 = vld [vmem:[%s191 + $0x94] sm:%s184]
          %264 = vst [vmem:[%s192 + $0x8c] sm:%s184] %v263
          %v265 = vld [vmem:[%s191 + $0x88] sm:%s184]
          %266 = vst [vmem:[%s192 + $0x90] sm:%s184] %v265
          %v267 = vld [vmem:[%s191 + $0x98] sm:%s184]
          %268 = vst [vmem:[%s192 + $0x94] sm:%s184] %v267
          %v269 = vld [vmem:[%s191 + $0x8c] sm:%s184]
          %270 = vst [vmem:[%s192 + $0x98] sm:%s184] %v269
          %v271 = vld [vmem:[%s191 + $0x9c] sm:%s184]
          %272 = vst [vmem:[%s192 + $0x9c] sm:%s184] %v271
          %v273 = vld [vmem:[%s191 + $0xa0] sm:%s184]
          %274 = vst [vmem:[%s192 + $0xa0] sm:%s184] %v273
          %v275 = vld [vmem:[%s191 + $0xb0] sm:%s184]
          %276 = vst [vmem:[%s192 + $0xa4] sm:%s184] %v275
          %v277 = vld [vmem:[%s191 + $0xa4] sm:%s184]
          %278 = vst [vmem:[%s192 + $0xa8] sm:%s184] %v277
          %v279 = vld [vmem:[%s191 + $0xb4] sm:%s184]
          %280 = vst [vmem:[%s192 + $0xac] sm:%s184] %v279
          %v281 = vld [vmem:[%s191 + $0xa8] sm:%s184]
          %282 = vst [vmem:[%s192 + $0xb0] sm:%s184] %v281
          %v283 = vld [vmem:[%s191 + $0xb8] sm:%s184]
          %284 = vst [vmem:[%s192 + $0xb4] sm:%s184] %v283
          %v285 = vld [vmem:[%s191 + $0xac] sm:%s184]
          %286 = vst [vmem:[%s192 + $0xb8] sm:%s184] %v285
          %v287 = vld [vmem:[%s191 + $0xbc] sm:%s184]
          %288 = vst [vmem:[%s192 + $0xbc] sm:%s184] %v287
          %v289 = vld [vmem:[%s191 + $0xc0] sm:%s184]
          %290 = vst [vmem:[%s192 + $0xc0] sm:%s184] %v289
          %v291 = vld [vmem:[%s191 + $0xd0] sm:%s184]
          %292 = vst [vmem:[%s192 + $0xc4] sm:%s184] %v291
          %v293 = vld [vmem:[%s191 + $0xc4] sm:%s184]
          %294 = vst [vmem:[%s192 + $0xc8] sm:%s184] %v293
          %v295 = vld [vmem:[%s191 + $0xd4] sm:%s184]
          %296 = vst [vmem:[%s192 + $0xcc] sm:%s184] %v295
          %v297 = vld [vmem:[%s191 + $0xc8] sm:%s184]
          %298 = vst [vmem:[%s192 + $0xd0] sm:%s184] %v297
          %v299 = vld [vmem:[%s191 + $0xd8] sm:%s184]
          %300 = vst [vmem:[%s192 + $0xd4] sm:%s184] %v299
          %v301 = vld [vmem:[%s191 + $0xcc] sm:%s184]
          %302 = vst [vmem:[%s192 + $0xd8] sm:%s184] %v301
          %v303 = vld [vmem:[%s191 + $0xdc] sm:%s184]
          %304 = vst [vmem:[%s192 + $0xdc] sm:%s184] %v303
          %v305 = vld [vmem:[%s191 + $0xe0] sm:%s184]
          %306 = vst [vmem:[%s192 + $0xe0] sm:%s184] %v305
          %v307 = vld [vmem:[%s191 + $0xf0] sm:%s184]
          %308 = vst [vmem:[%s192 + $0xe4] sm:%s184] %v307
          %v309 = vld [vmem:[%s191 + $0xe4] sm:%s184]
          %310 = vst [vmem:[%s192 + $0xe8] sm:%s184] %v309
          %v311 = vld [vmem:[%s191 + $0xf4] sm:%s184]
          %312 = vst [vmem:[%s192 + $0xec] sm:%s184] %v311
          %v313 = vld [vmem:[%s191 + $0xe8] sm:%s184]
          %314 = vst [vmem:[%s192 + $0xf0] sm:%s184] %v313
          %v315 = vld [vmem:[%s191 + $0xf8] sm:%s184]
          %316 = vst [vmem:[%s192 + $0xf4] sm:%s184] %v315
          %v317 = vld [vmem:[%s191 + $0xec] sm:%s184]
          %318 = vst [vmem:[%s192 + $0xf8] sm:%s184] %v317
          %v319 = vld [vmem:[%s191 + $0xfc] sm:%s184]
          %320 = vst [vmem:[%s192 + $0xfc] sm:%s184] %v319
        $region44: #{multirnn_forward.1} parent=31 // loop_footer
          %s190 = sadd.s32 1, %s186
        $region45: #{multirnn_forward.1} parent=31 // loop_footer_branch
          %185 = sbr.rel target = $region41
        $region46: #{multirnn_forward.1} parent=31 // loop_exit
          _
      $region32: #{multirnn_forward.1} parent=16 // pred_fallthru
        _
    $region17: #{multirnn_forward.1} parent=12 // pred_fallthru
      _
    // Predicated region
    $region18: #{multirnn_forward.1} parent=12 // pred_check
      %p26 = pneg %p22
    $region19: #{multirnn_forward.1} parent=12 // pred_check_branch
      %28 = sbr.rel (%p26) target = $region21
    $region20: #{multirnn_forward.1} parent=12 // pred_region
      %s29 = sshllo.u32 0, 4
      loop: start=0, step=1, limit=1
      $region22: #{multirnn_forward.1} parent=20 // loop_pre_header
        _
      $region23: #{multirnn_forward.1} parent=20 // loop_header
        %s31 = sphi 0, %s35
        %p32 = scmp.ge.s32.totalorder %s31, 1
        %s36 = sphi %s1, %s1
        %s37 = sphi [#allocation2], [#allocation2]
      $region24: #{multirnn_forward.1} parent=20 // loop_header_branch
        %34 = sbr.rel (%p32) target = $region28
      $region25: #{multirnn_forward.1} parent=20 // loop_body
        %v38 = vld [vmem:[%s36] sm:%s29]
        %39 = vst [vmem:[%s37] sm:%s29] %v38
        %v40 = vld [vmem:[%s36 + $0x10] sm:%s29]
        %41 = vst [vmem:[%s37 + $0x4] sm:%s29] %v40
        %v42 = vld [vmem:[%s36 + $0x4] sm:%s29]
        %43 = vst [vmem:[%s37 + $0x8] sm:%s29] %v42
        %v44 = vld [vmem:[%s36 + $0x14] sm:%s29]
        %45 = vst [vmem:[%s37 + $0xc] sm:%s29] %v44
        %v46 = vld [vmem:[%s36 + $0x8] sm:%s29]
        %47 = vst [vmem:[%s37 + $0x10] sm:%s29] %v46
        %v48 = vld [vmem:[%s36 + $0x18] sm:%s29]
        %49 = vst [vmem:[%s37 + $0x14] sm:%s29] %v48
        %v50 = vld [vmem:[%s36 + $0xc] sm:%s29]
        %51 = vst [vmem:[%s37 + $0x18] sm:%s29] %v50
        %v52 = vld [vmem:[%s36 + $0x1c] sm:%s29]
        %53 = vst [vmem:[%s37 + $0x1c] sm:%s29] %v52
        %v54 = vld [vmem:[%s36 + $0x20] sm:%s29]
        %55 = vst [vmem:[%s37 + $0x20] sm:%s29] %v54
        %v56 = vld [vmem:[%s36 + $0x30] sm:%s29]
        %57 = vst [vmem:[%s37 + $0x24] sm:%s29] %v56
        %v58 = vld [vmem:[%s36 + $0x24] sm:%s29]
        %59 = vst [vmem:[%s37 + $0x28] sm:%s29] %v58
        %v60 = vld [vmem:[%s36 + $0x34] sm:%s29]
        %61 = vst [vmem:[%s37 + $0x2c] sm:%s29] %v60
        %v62 = vld [vmem:[%s36 + $0x28] sm:%s29]
        %63 = vst [vmem:[%s37 + $0x30] sm:%s29] %v62
        %v64 = vld [vmem:[%s36 + $0x38] sm:%s29]
        %65 = vst [vmem:[%s37 + $0x34] sm:%s29] %v64
        %v66 = vld [vmem:[%s36 + $0x2c] sm:%s29]
        %67 = vst [vmem:[%s37 + $0x38] sm:%s29] %v66
        %v68 = vld [vmem:[%s36 + $0x3c] sm:%s29]
        %69 = vst [vmem:[%s37 + $0x3c] sm:%s29] %v68
        %v70 = vld [vmem:[%s36 + $0x40] sm:%s29]
        %71 = vst [vmem:[%s37 + $0x40] sm:%s29] %v70
        %v72 = vld [vmem:[%s36 + $0x50] sm:%s29]
        %73 = vst [vmem:[%s37 + $0x44] sm:%s29] %v72
        %v74 = vld [vmem:[%s36 + $0x44] sm:%s29]
        %75 = vst [vmem:[%s37 + $0x48] sm:%s29] %v74
        %v76 = vld [vmem:[%s36 + $0x54] sm:%s29]
        %77 = vst [vmem:[%s37 + $0x4c] sm:%s29] %v76
        %v78 = vld [vmem:[%s36 + $0x48] sm:%s29]
        %79 = vst [vmem:[%s37 + $0x50] sm:%s29] %v78
        %v80 = vld [vmem:[%s36 + $0x58] sm:%s29]
        %81 = vst [vmem:[%s37 + $0x54] sm:%s29] %v80
        %v82 = vld [vmem:[%s36 + $0x4c] sm:%s29]
        %83 = vst [vmem:[%s37 + $0x58] sm:%s29] %v82
        %v84 = vld [vmem:[%s36 + $0x5c] sm:%s29]
        %85 = vst [vmem:[%s37 + $0x5c] sm:%s29] %v84
        %v86 = vld [vmem:[%s36 + $0x60] sm:%s29]
        %87 = vst [vmem:[%s37 + $0x60] sm:%s29] %v86
        %v88 = vld [vmem:[%s36 + $0x70] sm:%s29]
        %89 = vst [vmem:[%s37 + $0x64] sm:%s29] %v88
        %v90 = vld [vmem:[%s36 + $0x64] sm:%s29]
        %91 = vst [vmem:[%s37 + $0x68] sm:%s29] %v90
        %v92 = vld [vmem:[%s36 + $0x74] sm:%s29]
        %93 = vst [vmem:[%s37 + $0x6c] sm:%s29] %v92
        %v94 = vld [vmem:[%s36 + $0x68] sm:%s29]
        %95 = vst [vmem:[%s37 + $0x70] sm:%s29] %v94
        %v96 = vld [vmem:[%s36 + $0x78] sm:%s29]
        %97 = vst [vmem:[%s37 + $0x74] sm:%s29] %v96
        %v98 = vld [vmem:[%s36 + $0x6c] sm:%s29]
        %99 = vst [vmem:[%s37 + $0x78] sm:%s29] %v98
        %v100 = vld [vmem:[%s36 + $0x7c] sm:%s29]
        %101 = vst [vmem:[%s37 + $0x7c] sm:%s29] %v100
        %v102 = vld [vmem:[%s36 + $0x80] sm:%s29]
        %103 = vst [vmem:[%s37 + $0x80] sm:%s29] %v102
        %v104 = vld [vmem:[%s36 + $0x90] sm:%s29]
        %105 = vst [vmem:[%s37 + $0x84] sm:%s29] %v104
        %v106 = vld [vmem:[%s36 + $0x84] sm:%s29]
        %107 = vst [vmem:[%s37 + $0x88] sm:%s29] %v106
        %v108 = vld [vmem:[%s36 + $0x94] sm:%s29]
        %109 = vst [vmem:[%s37 + $0x8c] sm:%s29] %v108
        %v110 = vld [vmem:[%s36 + $0x88] sm:%s29]
        %111 = vst [vmem:[%s37 + $0x90] sm:%s29] %v110
        %v112 = vld [vmem:[%s36 + $0x98] sm:%s29]
        %113 = vst [vmem:[%s37 + $0x94] sm:%s29] %v112
        %v114 = vld [vmem:[%s36 + $0x8c] sm:%s29]
        %115 = vst [vmem:[%s37 + $0x98] sm:%s29] %v114
        %v116 = vld [vmem:[%s36 + $0x9c] sm:%s29]
        %117 = vst [vmem:[%s37 + $0x9c] sm:%s29] %v116
        %v118 = vld [vmem:[%s36 + $0xa0] sm:%s29]
        %119 = vst [vmem:[%s37 + $0xa0] sm:%s29] %v118
        %v120 = vld [vmem:[%s36 + $0xb0] sm:%s29]
        %121 = vst [vmem:[%s37 + $0xa4] sm:%s29] %v120
        %v122 = vld [vmem:[%s36 + $0xa4] sm:%s29]
        %123 = vst [vmem:[%s37 + $0xa8] sm:%s29] %v122
        %v124 = vld [vmem:[%s36 + $0xb4] sm:%s29]
        %125 = vst [vmem:[%s37 + $0xac] sm:%s29] %v124
        %v126 = vld [vmem:[%s36 + $0xa8] sm:%s29]
        %127 = vst [vmem:[%s37 + $0xb0] sm:%s29] %v126
        %v128 = vld [vmem:[%s36 + $0xb8] sm:%s29]
        %129 = vst [vmem:[%s37 + $0xb4] sm:%s29] %v128
        %v130 = vld [vmem:[%s36 + $0xac] sm:%s29]
        %131 = vst [vmem:[%s37 + $0xb8] sm:%s29] %v130
        %v132 = vld [vmem:[%s36 + $0xbc] sm:%s29]
        %133 = vst [vmem:[%s37 + $0xbc] sm:%s29] %v132
        %v134 = vld [vmem:[%s36 + $0xc0] sm:%s29]
        %135 = vst [vmem:[%s37 + $0xc0] sm:%s29] %v134
        %v136 = vld [vmem:[%s36 + $0xd0] sm:%s29]
        %137 = vst [vmem:[%s37 + $0xc4] sm:%s29] %v136
        %v138 = vld [vmem:[%s36 + $0xc4] sm:%s29]
        %139 = vst [vmem:[%s37 + $0xc8] sm:%s29] %v138
        %v140 = vld [vmem:[%s36 + $0xd4] sm:%s29]
        %141 = vst [vmem:[%s37 + $0xcc] sm:%s29] %v140
        %v142 = vld [vmem:[%s36 + $0xc8] sm:%s29]
        %143 = vst [vmem:[%s37 + $0xd0] sm:%s29] %v142
        %v144 = vld [vmem:[%s36 + $0xd8] sm:%s29]
        %145 = vst [vmem:[%s37 + $0xd4] sm:%s29] %v144
        %v146 = vld [vmem:[%s36 + $0xcc] sm:%s29]
        %147 = vst [vmem:[%s37 + $0xd8] sm:%s29] %v146
        %v148 = vld [vmem:[%s36 + $0xdc] sm:%s29]
        %149 = vst [vmem:[%s37 + $0xdc] sm:%s29] %v148
        %v150 = vld [vmem:[%s36 + $0xe0] sm:%s29]
        %151 = vst [vmem:[%s37 + $0xe0] sm:%s29] %v150
        %v152 = vld [vmem:[%s36 + $0xf0] sm:%s29]
        %153 = vst [vmem:[%s37 + $0xe4] sm:%s29] %v152
        %v154 = vld [vmem:[%s36 + $0xe4] sm:%s29]
        %155 = vst [vmem:[%s37 + $0xe8] sm:%s29] %v154
        %v156 = vld [vmem:[%s36 + $0xf4] sm:%s29]
        %157 = vst [vmem:[%s37 + $0xec] sm:%s29] %v156
        %v158 = vld [vmem:[%s36 + $0xe8] sm:%s29]
        %159 = vst [vmem:[%s37 + $0xf0] sm:%s29] %v158
        %v160 = vld [vmem:[%s36 + $0xf8] sm:%s29]
        %161 = vst [vmem:[%s37 + $0xf4] sm:%s29] %v160
        %v162 = vld [vmem:[%s36 + $0xec] sm:%s29]
        %163 = vst [vmem:[%s37 + $0xf8] sm:%s29] %v162
        %v164 = vld [vmem:[%s36 + $0xfc] sm:%s29]
        %165 = vst [vmem:[%s37 + $0xfc] sm:%s29] %v164
      $region26: #{multirnn_forward.1} parent=20 // loop_footer
        %s35 = sadd.s32 1, %s31
      $region27: #{multirnn_forward.1} parent=20 // loop_footer_branch
        %30 = sbr.rel target = $region23
      $region28: #{multirnn_forward.1} parent=20 // loop_exit
        _
    $region21: #{multirnn_forward.1} parent=12 // pred_fallthru
      _
    // Predicated region
    $region47: #{multirnn_forward.1} parent=12 // pred_check
      _
    $region48: #{multirnn_forward.1} parent=12 // pred_check_branch
      %323 = sbr.rel (0) target = $region50
    $region49: #{multirnn_forward.1} parent=12 // pred_region
      %324 = vsyncadd [#allocation4], 4096
    $region50: #{multirnn_forward.1} parent=12 // pred_fallthru
      _
    %s325 = scalar_lea.sflag [#allocation4], 1
    %p327 = scmp.lt.u32.totalorder 4, 8
    %p328 = pneg %p327
    // Predicated region
    $region51: #{multirnn_forward.1} parent=12 // pred_check
      _
    $region52: #{multirnn_forward.1} parent=12 // pred_check_branch
      %330 = sbr.rel (%p327) target = $region54
    $region53: #{multirnn_forward.1} parent=12 // pred_region
      %s471 = sand.u32 4, 7
      %p472 = scmp.eq.s32.totalorder %s471, 0
      %p473 = pneg %p472
      // Predicated region
      $region66: #{multirnn_forward.1} parent=53 // pred_check
        _
      $region67: #{multirnn_forward.1} parent=53 // pred_check_branch
        %475 = sbr.rel (%p472) target = $region69
      $region68: #{multirnn_forward.1} parent=53 // pred_region
        %s476 = sand.u32 4, 7
        %s477 = ssub.s32 4, %s476
        %s478 = scalar_lea.vmem %s2, %s477
        %s479 = ssub.s32 4, %s476
        %s480 = scalar_lea.vmem [#allocation3], %s479
        loop: start=0, step=1, limit=1
        $region70: #{multirnn_forward.1} parent=68 // loop_pre_header
          _
        $region71: #{multirnn_forward.1} parent=68 // loop_header
          %s482 = sphi 0, %s486
          %p483 = scmp.ge.s32.totalorder %s482, 1
          %s487 = sphi %s2, %s2
          %s488 = sphi [#allocation3], [#allocation3]
        $region72: #{multirnn_forward.1} parent=68 // loop_header_branch
          %485 = sbr.rel (%p483) target = $region76
        $region73: #{multirnn_forward.1} parent=68 // loop_body
          _
        $region74: #{multirnn_forward.1} parent=68 // loop_footer
          %s486 = sadd.s32 1, %s482
        $region75: #{multirnn_forward.1} parent=68 // loop_footer_branch
          %481 = sbr.rel target = $region71
        $region76: #{multirnn_forward.1} parent=68 // loop_exit
          _
        %s489 = sshllo.u32 0, %s476
        loop: start=0, step=1, limit=1
        $region77: #{multirnn_forward.1} parent=68 // loop_pre_header
          _
        $region78: #{multirnn_forward.1} parent=68 // loop_header
          %s491 = sphi 0, %s495
          %p492 = scmp.ge.s32.totalorder %s491, 1
          %s496 = sphi %s478, %s478
          %s497 = sphi %s480, %s480
        $region79: #{multirnn_forward.1} parent=68 // loop_header_branch
          %494 = sbr.rel (%p492) target = $region83
        $region80: #{multirnn_forward.1} parent=68 // loop_body
          %v498 = vld [vmem:[%s496] sm:%s489]
          %499 = vst [vmem:[%s497] sm:%s489] %v498
          %v500 = vld [vmem:[%s496 + $0x10] sm:%s489]
          %501 = vst [vmem:[%s497 + $0x4] sm:%s489] %v500
          %v502 = vld [vmem:[%s496 + $0x4] sm:%s489]
          %503 = vst [vmem:[%s497 + $0x8] sm:%s489] %v502
          %v504 = vld [vmem:[%s496 + $0x14] sm:%s489]
          %505 = vst [vmem:[%s497 + $0xc] sm:%s489] %v504
          %v506 = vld [vmem:[%s496 + $0x8] sm:%s489]
          %507 = vst [vmem:[%s497 + $0x10] sm:%s489] %v506
          %v508 = vld [vmem:[%s496 + $0x18] sm:%s489]
          %509 = vst [vmem:[%s497 + $0x14] sm:%s489] %v508
          %v510 = vld [vmem:[%s496 + $0xc] sm:%s489]
          %511 = vst [vmem:[%s497 + $0x18] sm:%s489] %v510
          %v512 = vld [vmem:[%s496 + $0x1c] sm:%s489]
          %513 = vst [vmem:[%s497 + $0x1c] sm:%s489] %v512
          %v514 = vld [vmem:[%s496 + $0x20] sm:%s489]
          %515 = vst [vmem:[%s497 + $0x20] sm:%s489] %v514
          %v516 = vld [vmem:[%s496 + $0x30] sm:%s489]
          %517 = vst [vmem:[%s497 + $0x24] sm:%s489] %v516
          %v518 = vld [vmem:[%s496 + $0x24] sm:%s489]
          %519 = vst [vmem:[%s497 + $0x28] sm:%s489] %v518
          %v520 = vld [vmem:[%s496 + $0x34] sm:%s489]
          %521 = vst [vmem:[%s497 + $0x2c] sm:%s489] %v520
          %v522 = vld [vmem:[%s496 + $0x28] sm:%s489]
          %523 = vst [vmem:[%s497 + $0x30] sm:%s489] %v522
          %v524 = vld [vmem:[%s496 + $0x38] sm:%s489]
          %525 = vst [vmem:[%s497 + $0x34] sm:%s489] %v524
          %v526 = vld [vmem:[%s496 + $0x2c] sm:%s489]
          %527 = vst [vmem:[%s497 + $0x38] sm:%s489] %v526
          %v528 = vld [vmem:[%s496 + $0x3c] sm:%s489]
          %529 = vst [vmem:[%s497 + $0x3c] sm:%s489] %v528
          %v530 = vld [vmem:[%s496 + $0x40] sm:%s489]
          %531 = vst [vmem:[%s497 + $0x40] sm:%s489] %v530
          %v532 = vld [vmem:[%s496 + $0x50] sm:%s489]
          %533 = vst [vmem:[%s497 + $0x44] sm:%s489] %v532
          %v534 = vld [vmem:[%s496 + $0x44] sm:%s489]
          %535 = vst [vmem:[%s497 + $0x48] sm:%s489] %v534
          %v536 = vld [vmem:[%s496 + $0x54] sm:%s489]
          %537 = vst [vmem:[%s497 + $0x4c] sm:%s489] %v536
          %v538 = vld [vmem:[%s496 + $0x48] sm:%s489]
          %539 = vst [vmem:[%s497 + $0x50] sm:%s489] %v538
          %v540 = vld [vmem:[%s496 + $0x58] sm:%s489]
          %541 = vst [vmem:[%s497 + $0x54] sm:%s489] %v540
          %v542 = vld [vmem:[%s496 + $0x4c] sm:%s489]
          %543 = vst [vmem:[%s497 + $0x58] sm:%s489] %v542
          %v544 = vld [vmem:[%s496 + $0x5c] sm:%s489]
          %545 = vst [vmem:[%s497 + $0x5c] sm:%s489] %v544
          %v546 = vld [vmem:[%s496 + $0x60] sm:%s489]
          %547 = vst [vmem:[%s497 + $0x60] sm:%s489] %v546
          %v548 = vld [vmem:[%s496 + $0x70] sm:%s489]
          %549 = vst [vmem:[%s497 + $0x64] sm:%s489] %v548
          %v550 = vld [vmem:[%s496 + $0x64] sm:%s489]
          %551 = vst [vmem:[%s497 + $0x68] sm:%s489] %v550
          %v552 = vld [vmem:[%s496 + $0x74] sm:%s489]
          %553 = vst [vmem:[%s497 + $0x6c] sm:%s489] %v552
          %v554 = vld [vmem:[%s496 + $0x68] sm:%s489]
          %555 = vst [vmem:[%s497 + $0x70] sm:%s489] %v554
          %v556 = vld [vmem:[%s496 + $0x78] sm:%s489]
          %557 = vst [vmem:[%s497 + $0x74] sm:%s489] %v556
          %v558 = vld [vmem:[%s496 + $0x6c] sm:%s489]
          %559 = vst [vmem:[%s497 + $0x78] sm:%s489] %v558
          %v560 = vld [vmem:[%s496 + $0x7c] sm:%s489]
          %561 = vst [vmem:[%s497 + $0x7c] sm:%s489] %v560
          %v562 = vld [vmem:[%s496 + $0x80] sm:%s489]
          %563 = vst [vmem:[%s497 + $0x80] sm:%s489] %v562
          %v564 = vld [vmem:[%s496 + $0x90] sm:%s489]
          %565 = vst [vmem:[%s497 + $0x84] sm:%s489] %v564
          %v566 = vld [vmem:[%s496 + $0x84] sm:%s489]
          %567 = vst [vmem:[%s497 + $0x88] sm:%s489] %v566
          %v568 = vld [vmem:[%s496 + $0x94] sm:%s489]
          %569 = vst [vmem:[%s497 + $0x8c] sm:%s489] %v568
          %v570 = vld [vmem:[%s496 + $0x88] sm:%s489]
          %571 = vst [vmem:[%s497 + $0x90] sm:%s489] %v570
          %v572 = vld [vmem:[%s496 + $0x98] sm:%s489]
          %573 = vst [vmem:[%s497 + $0x94] sm:%s489] %v572
          %v574 = vld [vmem:[%s496 + $0x8c] sm:%s489]
          %575 = vst [vmem:[%s497 + $0x98] sm:%s489] %v574
          %v576 = vld [vmem:[%s496 + $0x9c] sm:%s489]
          %577 = vst [vmem:[%s497 + $0x9c] sm:%s489] %v576
          %v578 = vld [vmem:[%s496 + $0xa0] sm:%s489]
          %579 = vst [vmem:[%s497 + $0xa0] sm:%s489] %v578
          %v580 = vld [vmem:[%s496 + $0xb0] sm:%s489]
          %581 = vst [vmem:[%s497 + $0xa4] sm:%s489] %v580
          %v582 = vld [vmem:[%s496 + $0xa4] sm:%s489]
          %583 = vst [vmem:[%s497 + $0xa8] sm:%s489] %v582
          %v584 = vld [vmem:[%s496 + $0xb4] sm:%s489]
          %585 = vst [vmem:[%s497 + $0xac] sm:%s489] %v584
          %v586 = vld [vmem:[%s496 + $0xa8] sm:%s489]
          %587 = vst [vmem:[%s497 + $0xb0] sm:%s489] %v586
          %v588 = vld [vmem:[%s496 + $0xb8] sm:%s489]
          %589 = vst [vmem:[%s497 + $0xb4] sm:%s489] %v588
          %v590 = vld [vmem:[%s496 + $0xac] sm:%s489]
          %591 = vst [vmem:[%s497 + $0xb8] sm:%s489] %v590
          %v592 = vld [vmem:[%s496 + $0xbc] sm:%s489]
          %593 = vst [vmem:[%s497 + $0xbc] sm:%s489] %v592
          %v594 = vld [vmem:[%s496 + $0xc0] sm:%s489]
          %595 = vst [vmem:[%s497 + $0xc0] sm:%s489] %v594
          %v596 = vld [vmem:[%s496 + $0xd0] sm:%s489]
          %597 = vst [vmem:[%s497 + $0xc4] sm:%s489] %v596
          %v598 = vld [vmem:[%s496 + $0xc4] sm:%s489]
          %599 = vst [vmem:[%s497 + $0xc8] sm:%s489] %v598
          %v600 = vld [vmem:[%s496 + $0xd4] sm:%s489]
          %601 = vst [vmem:[%s497 + $0xcc] sm:%s489] %v600
          %v602 = vld [vmem:[%s496 + $0xc8] sm:%s489]
          %603 = vst [vmem:[%s497 + $0xd0] sm:%s489] %v602
          %v604 = vld [vmem:[%s496 + $0xd8] sm:%s489]
          %605 = vst [vmem:[%s497 + $0xd4] sm:%s489] %v604
          %v606 = vld [vmem:[%s496 + $0xcc] sm:%s489]
          %607 = vst [vmem:[%s497 + $0xd8] sm:%s489] %v606
          %v608 = vld [vmem:[%s496 + $0xdc] sm:%s489]
          %609 = vst [vmem:[%s497 + $0xdc] sm:%s489] %v608
          %v610 = vld [vmem:[%s496 + $0xe0] sm:%s489]
          %611 = vst [vmem:[%s497 + $0xe0] sm:%s489] %v610
          %v612 = vld [vmem:[%s496 + $0xf0] sm:%s489]
          %613 = vst [vmem:[%s497 + $0xe4] sm:%s489] %v612
          %v614 = vld [vmem:[%s496 + $0xe4] sm:%s489]
          %615 = vst [vmem:[%s497 + $0xe8] sm:%s489] %v614
          %v616 = vld [vmem:[%s496 + $0xf4] sm:%s489]
          %617 = vst [vmem:[%s497 + $0xec] sm:%s489] %v616
          %v618 = vld [vmem:[%s496 + $0xe8] sm:%s489]
          %619 = vst [vmem:[%s497 + $0xf0] sm:%s489] %v618
          %v620 = vld [vmem:[%s496 + $0xf8] sm:%s489]
          %621 = vst [vmem:[%s497 + $0xf4] sm:%s489] %v620
          %v622 = vld [vmem:[%s496 + $0xec] sm:%s489]
          %623 = vst [vmem:[%s497 + $0xf8] sm:%s489] %v622
          %v624 = vld [vmem:[%s496 + $0xfc] sm:%s489]
          %625 = vst [vmem:[%s497 + $0xfc] sm:%s489] %v624
        $region81: #{multirnn_forward.1} parent=68 // loop_footer
          %s495 = sadd.s32 1, %s491
        $region82: #{multirnn_forward.1} parent=68 // loop_footer_branch
          %490 = sbr.rel target = $region78
        $region83: #{multirnn_forward.1} parent=68 // loop_exit
          _
      $region69: #{multirnn_forward.1} parent=53 // pred_fallthru
        _
    $region54: #{multirnn_forward.1} parent=12 // pred_fallthru
      _
    // Predicated region
    $region55: #{multirnn_forward.1} parent=12 // pred_check
      %p331 = pneg %p327
    $region56: #{multirnn_forward.1} parent=12 // pred_check_branch
      %333 = sbr.rel (%p331) target = $region58
    $region57: #{multirnn_forward.1} parent=12 // pred_region
      %s334 = sshllo.u32 0, 4
      loop: start=0, step=1, limit=1
      $region59: #{multirnn_forward.1} parent=57 // loop_pre_header
        _
      $region60: #{multirnn_forward.1} parent=57 // loop_header
        %s336 = sphi 0, %s340
        %p337 = scmp.ge.s32.totalorder %s336, 1
        %s341 = sphi %s2, %s2
        %s342 = sphi [#allocation3], [#allocation3]
      $region61: #{multirnn_forward.1} parent=57 // loop_header_branch
        %339 = sbr.rel (%p337) target = $region65
      $region62: #{multirnn_forward.1} parent=57 // loop_body
        %v343 = vld [vmem:[%s341] sm:%s334]
        %344 = vst [vmem:[%s342] sm:%s334] %v343
        %v345 = vld [vmem:[%s341 + $0x10] sm:%s334]
        %346 = vst [vmem:[%s342 + $0x4] sm:%s334] %v345
        %v347 = vld [vmem:[%s341 + $0x4] sm:%s334]
        %348 = vst [vmem:[%s342 + $0x8] sm:%s334] %v347
        %v349 = vld [vmem:[%s341 + $0x14] sm:%s334]
        %350 = vst [vmem:[%s342 + $0xc] sm:%s334] %v349
        %v351 = vld [vmem:[%s341 + $0x8] sm:%s334]
        %352 = vst [vmem:[%s342 + $0x10] sm:%s334] %v351
        %v353 = vld [vmem:[%s341 + $0x18] sm:%s334]
        %354 = vst [vmem:[%s342 + $0x14] sm:%s334] %v353
        %v355 = vld [vmem:[%s341 + $0xc] sm:%s334]
        %356 = vst [vmem:[%s342 + $0x18] sm:%s334] %v355
        %v357 = vld [vmem:[%s341 + $0x1c] sm:%s334]
        %358 = vst [vmem:[%s342 + $0x1c] sm:%s334] %v357
        %v359 = vld [vmem:[%s341 + $0x20] sm:%s334]
        %360 = vst [vmem:[%s342 + $0x20] sm:%s334] %v359
        %v361 = vld [vmem:[%s341 + $0x30] sm:%s334]
        %362 = vst [vmem:[%s342 + $0x24] sm:%s334] %v361
        %v363 = vld [vmem:[%s341 + $0x24] sm:%s334]
        %364 = vst [vmem:[%s342 + $0x28] sm:%s334] %v363
        %v365 = vld [vmem:[%s341 + $0x34] sm:%s334]
        %366 = vst [vmem:[%s342 + $0x2c] sm:%s334] %v365
        %v367 = vld [vmem:[%s341 + $0x28] sm:%s334]
        %368 = vst [vmem:[%s342 + $0x30] sm:%s334] %v367
        %v369 = vld [vmem:[%s341 + $0x38] sm:%s334]
        %370 = vst [vmem:[%s342 + $0x34] sm:%s334] %v369
        %v371 = vld [vmem:[%s341 + $0x2c] sm:%s334]
        %372 = vst [vmem:[%s342 + $0x38] sm:%s334] %v371
        %v373 = vld [vmem:[%s341 + $0x3c] sm:%s334]
        %374 = vst [vmem:[%s342 + $0x3c] sm:%s334] %v373
        %v375 = vld [vmem:[%s341 + $0x40] sm:%s334]
        %376 = vst [vmem:[%s342 + $0x40] sm:%s334] %v375
        %v377 = vld [vmem:[%s341 + $0x50] sm:%s334]
        %378 = vst [vmem:[%s342 + $0x44] sm:%s334] %v377
        %v379 = vld [vmem:[%s341 + $0x44] sm:%s334]
        %380 = vst [vmem:[%s342 + $0x48] sm:%s334] %v379
        %v381 = vld [vmem:[%s341 + $0x54] sm:%s334]
        %382 = vst [vmem:[%s342 + $0x4c] sm:%s334] %v381
        %v383 = vld [vmem:[%s341 + $0x48] sm:%s334]
        %384 = vst [vmem:[%s342 + $0x50] sm:%s334] %v383
        %v385 = vld [vmem:[%s341 + $0x58] sm:%s334]
        %386 = vst [vmem:[%s342 + $0x54] sm:%s334] %v385
        %v387 = vld [vmem:[%s341 + $0x4c] sm:%s334]
        %388 = vst [vmem:[%s342 + $0x58] sm:%s334] %v387
        %v389 = vld [vmem:[%s341 + $0x5c] sm:%s334]
        %390 = vst [vmem:[%s342 + $0x5c] sm:%s334] %v389
        %v391 = vld [vmem:[%s341 + $0x60] sm:%s334]
        %392 = vst [vmem:[%s342 + $0x60] sm:%s334] %v391
        %v393 = vld [vmem:[%s341 + $0x70] sm:%s334]
        %394 = vst [vmem:[%s342 + $0x64] sm:%s334] %v393
        %v395 = vld [vmem:[%s341 + $0x64] sm:%s334]
        %396 = vst [vmem:[%s342 + $0x68] sm:%s334] %v395
        %v397 = vld [vmem:[%s341 + $0x74] sm:%s334]
        %398 = vst [vmem:[%s342 + $0x6c] sm:%s334] %v397
        %v399 = vld [vmem:[%s341 + $0x68] sm:%s334]
        %400 = vst [vmem:[%s342 + $0x70] sm:%s334] %v399
        %v401 = vld [vmem:[%s341 + $0x78] sm:%s334]
        %402 = vst [vmem:[%s342 + $0x74] sm:%s334] %v401
        %v403 = vld [vmem:[%s341 + $0x6c] sm:%s334]
        %404 = vst [vmem:[%s342 + $0x78] sm:%s334] %v403
        %v405 = vld [vmem:[%s341 + $0x7c] sm:%s334]
        %406 = vst [vmem:[%s342 + $0x7c] sm:%s334] %v405
        %v407 = vld [vmem:[%s341 + $0x80] sm:%s334]
        %408 = vst [vmem:[%s342 + $0x80] sm:%s334] %v407
        %v409 = vld [vmem:[%s341 + $0x90] sm:%s334]
        %410 = vst [vmem:[%s342 + $0x84] sm:%s334] %v409
        %v411 = vld [vmem:[%s341 + $0x84] sm:%s334]
        %412 = vst [vmem:[%s342 + $0x88] sm:%s334] %v411
        %v413 = vld [vmem:[%s341 + $0x94] sm:%s334]
        %414 = vst [vmem:[%s342 + $0x8c] sm:%s334] %v413
        %v415 = vld [vmem:[%s341 + $0x88] sm:%s334]
        %416 = vst [vmem:[%s342 + $0x90] sm:%s334] %v415
        %v417 = vld [vmem:[%s341 + $0x98] sm:%s334]
        %418 = vst [vmem:[%s342 + $0x94] sm:%s334] %v417
        %v419 = vld [vmem:[%s341 + $0x8c] sm:%s334]
        %420 = vst [vmem:[%s342 + $0x98] sm:%s334] %v419
        %v421 = vld [vmem:[%s341 + $0x9c] sm:%s334]
        %422 = vst [vmem:[%s342 + $0x9c] sm:%s334] %v421
        %v423 = vld [vmem:[%s341 + $0xa0] sm:%s334]
        %424 = vst [vmem:[%s342 + $0xa0] sm:%s334] %v423
        %v425 = vld [vmem:[%s341 + $0xb0] sm:%s334]
        %426 = vst [vmem:[%s342 + $0xa4] sm:%s334] %v425
        %v427 = vld [vmem:[%s341 + $0xa4] sm:%s334]
        %428 = vst [vmem:[%s342 + $0xa8] sm:%s334] %v427
        %v429 = vld [vmem:[%s341 + $0xb4] sm:%s334]
        %430 = vst [vmem:[%s342 + $0xac] sm:%s334] %v429
        %v431 = vld [vmem:[%s341 + $0xa8] sm:%s334]
        %432 = vst [vmem:[%s342 + $0xb0] sm:%s334] %v431
        %v433 = vld [vmem:[%s341 + $0xb8] sm:%s334]
        %434 = vst [vmem:[%s342 + $0xb4] sm:%s334] %v433
        %v435 = vld [vmem:[%s341 + $0xac] sm:%s334]
        %436 = vst [vmem:[%s342 + $0xb8] sm:%s334] %v435
        %v437 = vld [vmem:[%s341 + $0xbc] sm:%s334]
        %438 = vst [vmem:[%s342 + $0xbc] sm:%s334] %v437
        %v439 = vld [vmem:[%s341 + $0xc0] sm:%s334]
        %440 = vst [vmem:[%s342 + $0xc0] sm:%s334] %v439
        %v441 = vld [vmem:[%s341 + $0xd0] sm:%s334]
        %442 = vst [vmem:[%s342 + $0xc4] sm:%s334] %v441
        %v443 = vld [vmem:[%s341 + $0xc4] sm:%s334]
        %444 = vst [vmem:[%s342 + $0xc8] sm:%s334] %v443
        %v445 = vld [vmem:[%s341 + $0xd4] sm:%s334]
        %446 = vst [vmem:[%s342 + $0xcc] sm:%s334] %v445
        %v447 = vld [vmem:[%s341 + $0xc8] sm:%s334]
        %448 = vst [vmem:[%s342 + $0xd0] sm:%s334] %v447
        %v449 = vld [vmem:[%s341 + $0xd8] sm:%s334]
        %450 = vst [vmem:[%s342 + $0xd4] sm:%s334] %v449
        %v451 = vld [vmem:[%s341 + $0xcc] sm:%s334]
        %452 = vst [vmem:[%s342 + $0xd8] sm:%s334] %v451
        %v453 = vld [vmem:[%s341 + $0xdc] sm:%s334]
        %454 = vst [vmem:[%s342 + $0xdc] sm:%s334] %v453
        %v455 = vld [vmem:[%s341 + $0xe0] sm:%s334]
        %456 = vst [vmem:[%s342 + $0xe0] sm:%s334] %v455
        %v457 = vld [vmem:[%s341 + $0xf0] sm:%s334]
        %458 = vst [vmem:[%s342 + $0xe4] sm:%s334] %v457
        %v459 = vld [vmem:[%s341 + $0xe4] sm:%s334]
        %460 = vst [vmem:[%s342 + $0xe8] sm:%s334] %v459
        %v461 = vld [vmem:[%s341 + $0xf4] sm:%s334]
        %462 = vst [vmem:[%s342 + $0xec] sm:%s334] %v461
        %v463 = vld [vmem:[%s341 + $0xe8] sm:%s334]
        %464 = vst [vmem:[%s342 + $0xf0] sm:%s334] %v463
        %v465 = vld [vmem:[%s341 + $0xf8] sm:%s334]
        %466 = vst [vmem:[%s342 + $0xf4] sm:%s334] %v465
        %v467 = vld [vmem:[%s341 + $0xec] sm:%s334]
        %468 = vst [vmem:[%s342 + $0xf8] sm:%s334] %v467
        %v469 = vld [vmem:[%s341 + $0xfc] sm:%s334]
        %470 = vst [vmem:[%s342 + $0xfc] sm:%s334] %v469
      $region63: #{multirnn_forward.1} parent=57 // loop_footer
        %s340 = sadd.s32 1, %s336
      $region64: #{multirnn_forward.1} parent=57 // loop_footer_branch
        %335 = sbr.rel target = $region60
      $region65: #{multirnn_forward.1} parent=57 // loop_exit
        _
    $region58: #{multirnn_forward.1} parent=12 // pred_fallthru
      _
    // Predicated region
    $region84: #{multirnn_forward.1} parent=12 // pred_check
      _
    $region85: #{multirnn_forward.1} parent=12 // pred_check_branch
      %628 = sbr.rel (0) target = $region87
    $region86: #{multirnn_forward.1} parent=12 // pred_region
      %629 = vsyncadd %s325, 4096
    $region87: #{multirnn_forward.1} parent=12 // pred_fallthru
      _
    %630 = vst [vmem:[#allocation6] sm:$0xff] 0.0
    %631 = vst [vmem:[#allocation7] sm:$0xf] 0
    %632 = vst [vmem:[#allocation8] sm:$0xff] 0.0
    %s633 = smul.u32 4, 16
    %s634 = smul.u32 %s633, 4
    %s635 = sshll.u32 %s634, 4
    %636 = dma.done [#allocation4], %s635
    %s637 = sshll.u32 %s634, 4
    %638 = dma.done %s325, %s637
  $region13: #{multirnn_forward.1} parent=0 // pred_fallthru
    _
  %v639 = vld [vmem:[%s0] sm:$0xf]
  %v640 = vld [vmem:[%s0 + $0x4] sm:$0xf]
  %v641 = vld [vmem:[%s0 + $0x8] sm:$0xf]
  %v642 = vld [vmem:[%s0 + $0xc] sm:$0xf]
  %v643 = vld [vmem:[%s0 + $0x10] sm:$0xf]
  %v644 = vld [vmem:[%s0 + $0x14] sm:$0xf]
  %v645 = vld [vmem:[%s0 + $0x18] sm:$0xf]
  %v646 = vld [vmem:[%s0 + $0x1c] sm:$0xf]
  %v647 = vld [vmem:[#allocation2] sm:$0xff]
  %v648 = vld [vmem:[#allocation2 + $0x8] sm:$0xff]
  %v649 = vld [vmem:[#allocation2 + $0x10] sm:$0xff]
  %v650 = vld [vmem:[#allocation2 + $0x18] sm:$0xff]
  %v651 = vld [vmem:[#allocation2 + $0x20] sm:$0xff]
  %v652 = vld [vmem:[#allocation2 + $0x28] sm:$0xff]
  %v653 = vld [vmem:[#allocation2 + $0x30] sm:$0xff]
  %v654 = vld [vmem:[#allocation2 + $0x38] sm:$0xff]
  %v655 = vld [vmem:[#allocation2 + $0x40] sm:$0xff]
  %v656 = vld [vmem:[#allocation2 + $0x48] sm:$0xff]
  %v657 = vld [vmem:[#allocation2 + $0x50] sm:$0xff]
  %v658 = vld [vmem:[#allocation2 + $0x58] sm:$0xff]
  %v659 = vld [vmem:[#allocation2 + $0x60] sm:$0xff]
  %v660 = vld [vmem:[#allocation2 + $0x68] sm:$0xff]
  %v661 = vld [vmem:[#allocation2 + $0x70] sm:$0xff]
  %v662 = vld [vmem:[#allocation2 + $0x78] sm:$0xff]
  %v663 = vld [vmem:[#allocation2 + $0x80] sm:$0xff]
  %v664 = vld [vmem:[#allocation2 + $0x88] sm:$0xff]
  %v665 = vld [vmem:[#allocation2 + $0x90] sm:$0xff]
  %v666 = vld [vmem:[#allocation2 + $0x98] sm:$0xff]
  %v667 = vld [vmem:[#allocation2 + $0xa0] sm:$0xff]
  %v668 = vld [vmem:[#allocation2 + $0xa8] sm:$0xff]
  %v669 = vld [vmem:[#allocation2 + $0xb0] sm:$0xff]
  %v670 = vld [vmem:[#allocation2 + $0xb8] sm:$0xff]
  %v671 = vld [vmem:[#allocation2 + $0xc0] sm:$0xff]
  %v672 = vld [vmem:[#allocation2 + $0xc8] sm:$0xff]
  %v673 = vld [vmem:[#allocation2 + $0xd0] sm:$0xff]
  %v674 = vld [vmem:[#allocation2 + $0xd8] sm:$0xff]
  %v675 = vld [vmem:[#allocation2 + $0xe0] sm:$0xff]
  %v676 = vld [vmem:[#allocation2 + $0xe8] sm:$0xff]
  %v677 = vld [vmem:[#allocation2 + $0xf0] sm:$0xff]
  %v678 = vld [vmem:[#allocation2 + $0xf8] sm:$0xff]
  %v679 = vld [vmem:[%s3] sm:$0xf]
  %v681 = vlaneseq
  %v682 = vshrl.u32 %v681, 7
  %v683 = vsub.s32 0, %v682
  %v684 = vrot.slane %v679, %v683
  %v685 = vlaneseq
  %v686 = vshrl.u32 %v685, 7
  %v687 = vsub.s32 1, %v686
  %v688 = vrot.slane %v679, %v687
  %v689 = vlaneseq
  %v690 = vshrl.u32 %v689, 7
  %v691 = vsub.s32 2, %v690
  %v692 = vrot.slane %v679, %v691
  %v693 = vlaneseq
  %v694 = vshrl.u32 %v693, 7
  %v695 = vsub.s32 3, %v694
  %v696 = vrot.slane %v679, %v695
  %v709 = vunpack.c.l.b16 %v639
  %v710 = vunpack.c.l.b16 %v640
  %v711 = vunpack.c.l.b16 %v641
  %v712 = vunpack.c.l.b16 %v642
  %v713 = vunpack.c.l.b16 %v643
  %v714 = vunpack.c.l.b16 %v644
  %v715 = vunpack.c.l.b16 %v645
  %v716 = vunpack.c.l.b16 %v646
  %v717 = vpack.c.b16 %v710, %v709
  %v718 = vpack.c.b16 %v712, %v711
  %v719 = vpack.c.b16 %v714, %v713
  %v720 = vpack.c.b16 %v716, %v715
  %725 = vmatprep.subr.bf16.mxu0 %v648
  %726 = vmatpush1.bf16.msra.mxu0 %v647
  %727 = vmatprep.subr.bf16.mxu0 %v652
  %728 = vmatpush1.bf16.msra.mxu0 %v651
  %729 = vmatprep.subr.bf16.mxu0 %v656
  %730 = vmatpush1.bf16.msra.mxu0 %v655
  %731 = vmatprep.subr.bf16.mxu0 %v660
  %732 = vmatpush1.bf16.msra.mxu0 %v659
  %733 = vmatprep.subr.bf16.mxu0 %v664
  %734 = vmatpush1.bf16.msra.mxu0 %v663
  %735 = vmatprep.subr.bf16.mxu0 %v668
  %736 = vmatpush1.bf16.msra.mxu0 %v667
  %737 = vmatprep.subr.bf16.mxu0 %v672
  %738 = vmatpush1.bf16.msra.mxu0 %v671
  %739 = vmatprep.subr.bf16.mxu0 %v676
  %740 = vmatpush1.bf16.msra.mxu0 %v675
  %741 = vmatprep.subr.bf16.mxu0 0
  %742 = vmatpush1.bf16.msra.mxu0 0
  %743 = vmatprep.subr.bf16.mxu0 0
  %744 = vmatpush1.bf16.msra.mxu0 0
  %745 = vmatprep.subr.bf16.mxu0 0
  %746 = vmatpush1.bf16.msra.mxu0 0
  %747 = vmatprep.subr.bf16.mxu0 0
  %748 = vmatpush1.bf16.msra.mxu0 0
  %749 = vmatprep.subr.bf16.mxu0 0
  %750 = vmatpush1.bf16.msra.mxu0 0
  %751 = vmatprep.subr.bf16.mxu0 0
  %752 = vmatpush1.bf16.msra.mxu0 0
  %753 = vmatprep.subr.bf16.mxu0 0
  %754 = vmatpush1.bf16.msra.mxu0 0
  %755 = vmatprep.subr.bf16.mxu0 0
  %756 = vmatpush1.bf16.msra.mxu0 0
  %757 = vmatprep.mubr.bf16.mxu0 0
  %758 = vmatmul.mubr.bf16.gmra.mrb[0].mxu0 %v717
  %v759 = vpop.f32.mrb[0].mxu0
  %v760 = vadd.f32 %v684, %v759
  %v761 = vpop.f32.mrb[0].mxu0
  %v762 = vadd.f32 %v688, %v761
  %v763 = vpop.f32.mrb[0].mxu0
  %v764 = vadd.f32 %v684, %v763
  %v765 = vpop.f32.mrb[0].mxu0
  %v766 = vadd.f32 %v688, %v765
  %767 = vmatprep.mubr.bf16.mxu0 0
  %768 = vmatmul.mubr.bf16.gmra.mrb[0].mxu0 %v718
  %v769 = vpop.f32.mrb[0].mxu0
  %v770 = vadd.f32 %v684, %v769
  %v771 = vpop.f32.mrb[0].mxu0
  %v772 = vadd.f32 %v688, %v771
  %v773 = vpop.f32.mrb[0].mxu0
  %v774 = vadd.f32 %v684, %v773
  %v775 = vpop.f32.mrb[0].mxu0
  %v776 = vadd.f32 %v688, %v775
  %777 = vmatprep.mubr.bf16.mxu0 0
  %778 = vmatmul.mubr.bf16.gmra.mrb[0].mxu0 %v719
  %v779 = vpop.f32.mrb[0].mxu0
  %v780 = vadd.f32 %v684, %v779
  %v781 = vpop.f32.mrb[0].mxu0
  %v782 = vadd.f32 %v688, %v781
  %v783 = vpop.f32.mrb[0].mxu0
  %v784 = vadd.f32 %v684, %v783
  %v785 = vpop.f32.mrb[0].mxu0
  %v786 = vadd.f32 %v688, %v785
  %787 = vmatprep.mubr.bf16.mxu0 0
  %788 = vmatmul.mubr.bf16.gmra.mrb[0].mxu0 %v720
  %v789 = vpop.f32.mrb[0].mxu0
  %v790 = vadd.f32 %v684, %v789
  %v791 = vpop.f32.mrb[0].mxu0
  %v792 = vadd.f32 %v688, %v791
  %v793 = vpop.f32.mrb[0].mxu0
  %v794 = vadd.f32 %v684, %v793
  %v795 = vpop.f32.mrb[0].mxu0
  %v796 = vadd.f32 %v688, %v795
  %797 = vdwg.mxu0
  %798 = vmatprep.subr.bf16.mxu0 %v650
  %799 = vmatpush1.bf16.msra.mxu0 %v649
  %800 = vmatprep.subr.bf16.mxu0 %v654
  %801 = vmatpush1.bf16.msra.mxu0 %v653
  %802 = vmatprep.subr.bf16.mxu0 %v658
  %803 = vmatpush1.bf16.msra.mxu0 %v657
  %804 = vmatprep.subr.bf16.mxu0 %v662
  %805 = vmatpush1.bf16.msra.mxu0 %v661
  %806 = vmatprep.subr.bf16.mxu0 %v666
  %807 = vmatpush1.bf16.msra.mxu0 %v665
  %808 = vmatprep.subr.bf16.mxu0 %v670
  %809 = vmatpush1.bf16.msra.mxu0 %v669
  %810 = vmatprep.subr.bf16.mxu0 %v674
  %811 = vmatpush1.bf16.msra.mxu0 %v673
  %812 = vmatprep.subr.bf16.mxu0 %v678
  %813 = vmatpush1.bf16.msra.mxu0 %v677
  %814 = vmatprep.subr.bf16.mxu0 0
  %815 = vmatpush1.bf16.msra.mxu0 0
  %816 = vmatprep.subr.bf16.mxu0 0
  %817 = vmatpush1.bf16.msra.mxu0 0
  %818 = vmatprep.subr.bf16.mxu0 0
  %819 = vmatpush1.bf16.msra.mxu0 0
  %820 = vmatprep.subr.bf16.mxu0 0
  %821 = vmatpush1.bf16.msra.mxu0 0
  %822 = vmatprep.subr.bf16.mxu0 0
  %823 = vmatpush1.bf16.msra.mxu0 0
  %824 = vmatprep.subr.bf16.mxu0 0
  %825 = vmatpush1.bf16.msra.mxu0 0
  %826 = vmatprep.subr.bf16.mxu0 0
  %827 = vmatpush1.bf16.msra.mxu0 0
  %828 = vmatprep.subr.bf16.mxu0 0
  %829 = vmatpush1.bf16.msra.mxu0 0
  %830 = vmatprep.mubr.bf16.mxu0 0
  %831 = vmatmul.mubr.bf16.gmra.mrb[0].mxu0 %v717
  %v832 = vpop.f32.mrb[0].mxu0
  %v833 = vadd.f32 %v692, %v832
  %v834 = vpop.f32.mrb[0].mxu0
  %v835 = vadd.f32 %v696, %v834
  %v836 = vpop.f32.mrb[0].mxu0
  %v837 = vadd.f32 %v692, %v836
  %v838 = vpop.f32.mrb[0].mxu0
  %v839 = vadd.f32 %v696, %v838
  %840 = vmatprep.mubr.bf16.mxu0 0
  %841 = vmatmul.mubr.bf16.gmra.mrb[0].mxu0 %v718
  %v842 = vpop.f32.mrb[0].mxu0
  %v843 = vadd.f32 %v692, %v842
  %v844 = vpop.f32.mrb[0].mxu0
  %v845 = vadd.f32 %v696, %v844
  %v846 = vpop.f32.mrb[0].mxu0
  %v847 = vadd.f32 %v692, %v846
  %v848 = vpop.f32.mrb[0].mxu0
  %v849 = vadd.f32 %v696, %v848
  %850 = vmatprep.mubr.bf16.mxu0 0
  %851 = vmatmul.mubr.bf16.gmra.mrb[0].mxu0 %v719
  %v852 = vpop.f32.mrb[0].mxu0
  %v853 = vadd.f32 %v692, %v852
  %v854 = vpop.f32.mrb[0].mxu0
  %v855 = vadd.f32 %v696, %v854
  %v856 = vpop.f32.mrb[0].mxu0
  %v857 = vadd.f32 %v692, %v856
  %v858 = vpop.f32.mrb[0].mxu0
  %v859 = vadd.f32 %v696, %v858
  %860 = vmatprep.mubr.bf16.mxu0 0
  %861 = vmatmul.mubr.bf16.gmra.mrb[0].mxu0 %v720
  %v862 = vpop.f32.mrb[0].mxu0
  %v863 = vadd.f32 %v692, %v862
  %v864 = vpop.f32.mrb[0].mxu0
  %v865 = vadd.f32 %v696, %v864
  %v866 = vpop.f32.mrb[0].mxu0
  %v867 = vadd.f32 %v692, %v866
  %v868 = vpop.f32.mrb[0].mxu0
  %v869 = vadd.f32 %v696, %v868
  %870 = vdwg.mxu0
  %871 = vst [vmem:[#allocation5] sm:$0xff] %v760
  %872 = vst [vmem:[#allocation5 + $0x8] sm:$0xff] %v762
  %873 = vst [vmem:[#allocation5 + $0x10] sm:$0xff] %v833
  %874 = vst [vmem:[#allocation5 + $0x18] sm:$0xff] %v835
  %875 = vst [vmem:[#allocation5 + $0x20] sm:$0xff] %v764
  %876 = vst [vmem:[#allocation5 + $0x28] sm:$0xff] %v766
  %877 = vst [vmem:[#allocation5 + $0x30] sm:$0xff] %v837
  %878 = vst [vmem:[#allocation5 + $0x38] sm:$0xff] %v839
  %879 = vst [vmem:[#allocation5 + $0x40] sm:$0xff] %v770
  %880 = vst [vmem:[#allocation5 + $0x48] sm:$0xff] %v772
  %881 = vst [vmem:[#allocation5 + $0x50] sm:$0xff] %v843
  %882 = vst [vmem:[#allocation5 + $0x58] sm:$0xff] %v845
  %883 = vst [vmem:[#allocation5 + $0x60] sm:$0xff] %v774
  %884 = vst [vmem:[#allocation5 + $0x68] sm:$0xff] %v776
  %885 = vst [vmem:[#allocation5 + $0x70] sm:$0xff] %v847
  %886 = vst [vmem:[#allocation5 + $0x78] sm:$0xff] %v849
  %887 = vst [vmem:[#allocation5 + $0x80] sm:$0xff] %v780
  %888 = vst [vmem:[#allocation5 + $0x88] sm:$0xff] %v782
  %889 = vst [vmem:[#allocation5 + $0x90] sm:$0xff] %v853
  %890 = vst [vmem:[#allocation5 + $0x98] sm:$0xff] %v855
  %891 = vst [vmem:[#allocation5 + $0xa0] sm:$0xff] %v784
  %892 = vst [vmem:[#allocation5 + $0xa8] sm:$0xff] %v786
  %893 = vst [vmem:[#allocation5 + $0xb0] sm:$0xff] %v857
  %894 = vst [vmem:[#allocation5 + $0xb8] sm:$0xff] %v859
  %895 = vst [vmem:[#allocation5 + $0xc0] sm:$0xff] %v790
  %896 = vst [vmem:[#allocation5 + $0xc8] sm:$0xff] %v792
  %897 = vst [vmem:[#allocation5 + $0xd0] sm:$0xff] %v863
  %898 = vst [vmem:[#allocation5 + $0xd8] sm:$0xff] %v865
  %899 = vst [vmem:[#allocation5 + $0xe0] sm:$0xff] %v794
  %900 = vst [vmem:[#allocation5 + $0xe8] sm:$0xff] %v796
  %901 = vst [vmem:[#allocation5 + $0xf0] sm:$0xff] %v867
  %902 = vst [vmem:[#allocation5 + $0xf8] sm:$0xff] %v869
  %v903 = vld [vmem:[#allocation3] sm:$0xff]
  %v904 = vld [vmem:[#allocation3 + $0x8] sm:$0xff]
  %v905 = vld [vmem:[#allocation3 + $0x10] sm:$0xff]
  %v906 = vld [vmem:[#allocation3 + $0x18] sm:$0xff]
  %v907 = vld [vmem:[#allocation3 + $0x20] sm:$0xff]
  %v908 = vld [vmem:[#allocation3 + $0x28] sm:$0xff]
  %v909 = vld [vmem:[#allocation3 + $0x30] sm:$0xff]
  %v910 = vld [vmem:[#allocation3 + $0x38] sm:$0xff]
  %v911 = vld [vmem:[#allocation3 + $0x40] sm:$0xff]
  %v912 = vld [vmem:[#allocation3 + $0x48] sm:$0xff]
  %v913 = vld [vmem:[#allocation3 + $0x50] sm:$0xff]
  %v914 = vld [vmem:[#allocation3 + $0x58] sm:$0xff]
  %v915 = vld [vmem:[#allocation3 + $0x60] sm:$0xff]
  %v916 = vld [vmem:[#allocation3 + $0x68] sm:$0xff]
  %v917 = vld [vmem:[#allocation3 + $0x70] sm:$0xff]
  %v918 = vld [vmem:[#allocation3 + $0x78] sm:$0xff]
  %v919 = vld [vmem:[#allocation3 + $0x80] sm:$0xff]
  %v920 = vld [vmem:[#allocation3 + $0x88] sm:$0xff]
  %v921 = vld [vmem:[#allocation3 + $0x90] sm:$0xff]
  %v922 = vld [vmem:[#allocation3 + $0x98] sm:$0xff]
  %v923 = vld [vmem:[#allocation3 + $0xa0] sm:$0xff]
  %v924 = vld [vmem:[#allocation3 + $0xa8] sm:$0xff]
  %v925 = vld [vmem:[#allocation3 + $0xb0] sm:$0xff]
  %v926 = vld [vmem:[#allocation3 + $0xb8] sm:$0xff]
  %v927 = vld [vmem:[#allocation3 + $0xc0] sm:$0xff]
  %v928 = vld [vmem:[#allocation3 + $0xc8] sm:$0xff]
  %v929 = vld [vmem:[#allocation3 + $0xd0] sm:$0xff]
  %v930 = vld [vmem:[#allocation3 + $0xd8] sm:$0xff]
  %v931 = vld [vmem:[#allocation3 + $0xe0] sm:$0xff]
  %v932 = vld [vmem:[#allocation3 + $0xe8] sm:$0xff]
  %v933 = vld [vmem:[#allocation3 + $0xf0] sm:$0xff]
  %v934 = vld [vmem:[#allocation3 + $0xf8] sm:$0xff]
  %v935 = vld [vmem:[#allocation7] sm:$0xf]
  %v936 = vld [vmem:[#allocation5] sm:$0xff]
  %v937 = vld [vmem:[#allocation5 + $0x8] sm:$0xff]
  %v938 = vld [vmem:[#allocation5 + $0x10] sm:$0xff]
  %v939 = vld [vmem:[#allocation5 + $0x18] sm:$0xff]
  %940 = vmatprep.subr.bf16.mxu0 %v904
  %941 = vmatpush1.bf16.msra.mxu0 %v903
  %942 = vmatprep.subr.bf16.mxu0 %v908
  %943 = vmatpush1.bf16.msra.mxu0 %v907
  %944 = vmatprep.subr.bf16.mxu0 %v912
  %945 = vmatpush1.bf16.msra.mxu0 %v911
  %946 = vmatprep.subr.bf16.mxu0 %v916
  %947 = vmatpush1.bf16.msra.mxu0 %v915
  %948 = vmatprep.subr.bf16.mxu0 %v920
  %949 = vmatpush1.bf16.msra.mxu0 %v919
  %950 = vmatprep.subr.bf16.mxu0 %v924
  %951 = vmatpush1.bf16.msra.mxu0 %v923
  %952 = vmatprep.subr.bf16.mxu0 %v928
  %953 = vmatpush1.bf16.msra.mxu0 %v927
  %954 = vmatprep.subr.bf16.mxu0 %v932
  %955 = vmatpush1.bf16.msra.mxu0 %v931
  %956 = vmatprep.subr.bf16.mxu0 0
  %957 = vmatpush1.bf16.msra.mxu0 0
  %958 = vmatprep.subr.bf16.mxu0 0
  %959 = vmatpush1.bf16.msra.mxu0 0
  %960 = vmatprep.subr.bf16.mxu0 0
  %961 = vmatpush1.bf16.msra.mxu0 0
  %962 = vmatprep.subr.bf16.mxu0 0
  %963 = vmatpush1.bf16.msra.mxu0 0
  %964 = vmatprep.subr.bf16.mxu0 0
  %965 = vmatpush1.bf16.msra.mxu0 0
  %966 = vmatprep.subr.bf16.mxu0 0
  %967 = vmatpush1.bf16.msra.mxu0 0
  %968 = vmatprep.subr.bf16.mxu0 0
  %969 = vmatpush1.bf16.msra.mxu0 0
  %970 = vmatprep.subr.bf16.mxu0 0
  %971 = vmatpush1.bf16.msra.mxu0 0
  %972 = vmatprep.mubr.bf16.mxu0 0
  %973 = vmatmul.mubr.bf16.gmra.mrb[0].mxu0 %v935
  %v974 = vpop.f32.mrb[0].mxu0
  %v975 = vadd.f32 0.0, %v974
  %v976 = vpop.f32.mrb[0].mxu0
  %v977 = vadd.f32 0.0, %v976
  %v978 = vpop.f32.mrb[0].mxu0
  %v979 = vpop.f32.mrb[0].mxu0
  %980 = vdwg.mxu0
  %981 = vmatprep.subr.bf16.mxu0 %v906
  %982 = vmatpush1.bf16.msra.mxu0 %v905
  %983 = vmatprep.subr.bf16.mxu0 %v910
  %984 = vmatpush1.bf16.msra.mxu0 %v909
  %985 = vmatprep.subr.bf16.mxu0 %v914
  %986 = vmatpush1.bf16.msra.mxu0 %v913
  %987 = vmatprep.subr.bf16.mxu0 %v918
  %988 = vmatpush1.bf16.msra.mxu0 %v917
  %989 = vmatprep.subr.bf16.mxu0 %v922
  %990 = vmatpush1.bf16.msra.mxu0 %v921
  %991 = vmatprep.subr.bf16.mxu0 %v926
  %992 = vmatpush1.bf16.msra.mxu0 %v925
  %993 = vmatprep.subr.bf16.mxu0 %v930
  %994 = vmatpush1.bf16.msra.mxu0 %v929
  %995 = vmatprep.subr.bf16.mxu0 %v934
  %996 = vmatpush1.bf16.msra.mxu0 %v933
  %997 = vmatprep.subr.bf16.mxu0 0
  %998 = vmatpush1.bf16.msra.mxu0 0
  %999 = vmatprep.subr.bf16.mxu0 0
  %1000 = vmatpush1.bf16.msra.mxu0 0
  %1001 = vmatprep.subr.bf16.mxu0 0
  %1002 = vmatpush1.bf16.msra.mxu0 0
  %1003 = vmatprep.subr.bf16.mxu0 0
  %1004 = vmatpush1.bf16.msra.mxu0 0
  %1005 = vmatprep.subr.bf16.mxu0 0
  %1006 = vmatpush1.bf16.msra.mxu0 0
  %1007 = vmatprep.subr.bf16.mxu0 0
  %1008 = vmatpush1.bf16.msra.mxu0 0
  %1009 = vmatprep.subr.bf16.mxu0 0
  %1010 = vmatpush1.bf16.msra.mxu0 0
  %1011 = vmatprep.subr.bf16.mxu0 0
  %1012 = vmatpush1.bf16.msra.mxu0 0
  %1013 = vmatprep.mubr.bf16.mxu0 0
  %1014 = vmatmul.mubr.bf16.gmra.mrb[0].mxu0 %v935
  %v1015 = vpop.f32.mrb[0].mxu0
  %v1016 = vadd.f32 0.0, %v1015
  %v1017 = vpop.f32.mrb[0].mxu0
  %v1018 = vadd.f32 0.0, %v1017
  %v1019 = vpop.f32.mrb[0].mxu0
  %v1020 = vpop.f32.mrb[0].mxu0
  %1021 = vdwg.mxu0
  %v1022 = vadd.f32 %v936, %v975
  %v1023 = vadd.f32 %v937, %v977
  %v1024 = vadd.f32 %v938, %v1016
  %v1025 = vadd.f32 %v939, %v1018
  %v1026 = vmul.f32 %v1022, 0.5
  %v1027 = vmul.f32 %v1023, 0.5
  %v1028 = vmul.f32 %v1024, 0.5
  %v1029 = vtanh.pop %v1026
  %v1030 = vtanh.pop %v1027
  %v1031 = vtanh.pop %v1028
  %v1032 = vmul.f32 %v1029, 0.5
  %v1033 = vmul.f32 %v1030, 0.5
  %v1034 = vmul.f32 %v1031, 0.5
  %v1035 = vadd.f32 %v1032, 0.5
  %v1036 = vadd.f32 %v1033, 0.5
  %v1037 = vadd.f32 %v1034, 0.5
  %v1038 = vtanh.pop %v1025
  %v1039 = vld [vmem:[#allocation8] sm:$0xff]
  %v1040 = vmul.f32 %v1036, %v1039
  %v1041 = vmul.f32 %v1035, %v1038
  %v1042 = vadd.f32 %v1040, %v1041
  %v1043 = vtanh.pop %v1042
  %v1044 = vmul.f32 %v1037, %v1043
  %1045 = vst [vmem:[#allocation8] sm:$0xff] %v1042
  %1046 = vst [vmem:[#allocation6] sm:$0xff] %v1044
  %v1047 = vpack.c.bf16 %v1044, %v1044
  %1048 = vst [vmem:[#allocation7] sm:$0xf] %v1047
  %1049 = vst [vmem:[%s4] sm:$0xf] %v1047
  %v1050 = vld [vmem:[#allocation7] sm:$0xf]
  %v1051 = vld [vmem:[#allocation5 + $0x20] sm:$0xff]
  %v1052 = vld [vmem:[#allocation5 + $0x28] sm:$0xff]
  %v1053 = vld [vmem:[#allocation5 + $0x30] sm:$0xff]
  %v1054 = vld [vmem:[#allocation5 + $0x38] sm:$0xff]
  %1055 = vmatprep.subr.bf16.mxu0 %v904
  %1056 = vmatpush1.bf16.msra.mxu0 %v903
  %1057 = vmatprep.subr.bf16.mxu0 %v908
  %1058 = vmatpush1.bf16.msra.mxu0 %v907
  %1059 = vmatprep.subr.bf16.mxu0 %v912
  %1060 = vmatpush1.bf16.msra.mxu0 %v911
  %1061 = vmatprep.subr.bf16.mxu0 %v916
  %1062 = vmatpush1.bf16.msra.mxu0 %v915
  %1063 = vmatprep.subr.bf16.mxu0 %v920
  %1064 = vmatpush1.bf16.msra.mxu0 %v919
  %1065 = vmatprep.subr.bf16.mxu0 %v924
  %1066 = vmatpush1.bf16.msra.mxu0 %v923
  %1067 = vmatprep.subr.bf16.mxu0 %v928
  %1068 = vmatpush1.bf16.msra.mxu0 %v927
  %1069 = vmatprep.subr.bf16.mxu0 %v932
  %1070 = vmatpush1.bf16.msra.mxu0 %v931
  %1071 = vmatprep.subr.bf16.mxu0 0
  %1072 = vmatpush1.bf16.msra.mxu0 0
  %1073 = vmatprep.subr.bf16.mxu0 0
  %1074 = vmatpush1.bf16.msra.mxu0 0
  %1075 = vmatprep.subr.bf16.mxu0 0
  %1076 = vmatpush1.bf16.msra.mxu0 0
  %1077 = vmatprep.subr.bf16.mxu0 0
  %1078 = vmatpush1.bf16.msra.mxu0 0
  %1079 = vmatprep.subr.bf16.mxu0 0
  %1080 = vmatpush1.bf16.msra.mxu0 0
  %1081 = vmatprep.subr.bf16.mxu0 0
  %1082 = vmatpush1.bf16.msra.mxu0 0
  %1083 = vmatprep.subr.bf16.mxu0 0
  %1084 = vmatpush1.bf16.msra.mxu0 0
  %1085 = vmatprep.subr.bf16.mxu0 0
  %1086 = vmatpush1.bf16.msra.mxu0 0
  %1087 = vmatprep.mubr.bf16.mxu0 0
  %1088 = vmatmul.mubr.bf16.gmra.mrb[0].mxu0 %v1050
  %v1089 = vpop.f32.mrb[0].mxu0
  %v1090 = vadd.f32 0.0, %v1089
  %v1091 = vpop.f32.mrb[0].mxu0
  %v1092 = vadd.f32 0.0, %v1091
  %v1093 = vpop.f32.mrb[0].mxu0
  %v1094 = vpop.f32.mrb[0].mxu0
  %1095 = vdwg.mxu0
  %1096 = vmatprep.subr.bf16.mxu0 %v906
  %1097 = vmatpush1.bf16.msra.mxu0 %v905
  %1098 = vmatprep.subr.bf16.mxu0 %v910
  %1099 = vmatpush1.bf16.msra.mxu0 %v909
  %1100 = vmatprep.subr.bf16.mxu0 %v914
  %1101 = vmatpush1.bf16.msra.mxu0 %v913
  %1102 = vmatprep.subr.bf16.mxu0 %v918
  %1103 = vmatpush1.bf16.msra.mxu0 %v917
  %1104 = vmatprep.subr.bf16.mxu0 %v922
  %1105 = vmatpush1.bf16.msra.mxu0 %v921
  %1106 = vmatprep.subr.bf16.mxu0 %v926
  %1107 = vmatpush1.bf16.msra.mxu0 %v925
  %1108 = vmatprep.subr.bf16.mxu0 %v930
  %1109 = vmatpush1.bf16.msra.mxu0 %v929
  %1110 = vmatprep.subr.bf16.mxu0 %v934
  %1111 = vmatpush1.bf16.msra.mxu0 %v933
  %1112 = vmatprep.subr.bf16.mxu0 0
  %1113 = vmatpush1.bf16.msra.mxu0 0
  %1114 = vmatprep.subr.bf16.mxu0 0
  %1115 = vmatpush1.bf16.msra.mxu0 0
  %1116 = vmatprep.subr.bf16.mxu0 0
  %1117 = vmatpush1.bf16.msra.mxu0 0
  %1118 = vmatprep.subr.bf16.mxu0 0
  %1119 = vmatpush1.bf16.msra.mxu0 0
  %1120 = vmatprep.subr.bf16.mxu0 0
  %1121 = vmatpush1.bf16.msra.mxu0 0
  %1122 = vmatprep.subr.bf16.mxu0 0
  %1123 = vmatpush1.bf16.msra.mxu0 0
  %1124 = vmatprep.subr.bf16.mxu0 0
  %1125 = vmatpush1.bf16.msra.mxu0 0
  %1126 = vmatprep.subr.bf16.mxu0 0
  %1127 = vmatpush1.bf16.msra.mxu0 0
  %1128 = vmatprep.mubr.bf16.mxu0 0
  %1129 = vmatmul.mubr.bf16.gmra.mrb[0].mxu0 %v1050
  %v1130 = vpop.f32.mrb[0].mxu0
  %v1131 = vadd.f32 0.0, %v1130
  %v1132 = vpop.f32.mrb[0].mxu0
  %v1133 = vadd.f32 0.0, %v1132
  %v1134 = vpop.f32.mrb[0].mxu0
  %v1135 = vpop.f32.mrb[0].mxu0
  %1136 = vdwg.mxu0
  %v1137 = vadd.f32 %v1051, %v1090
  %v1138 = vadd.f32 %v1052, %v1092
  %v1139 = vadd.f32 %v1053, %v1131
  %v1140 = vadd.f32 %v1054, %v1133
  %v1141 = vmul.f32 %v1137, 0.5
  %v1142 = vmul.f32 %v1138, 0.5
  %v1143 = vmul.f32 %v1139, 0.5
  %v1144 = vtanh.pop %v1141
  %v1145 = vtanh.pop %v1142
  %v1146 = vtanh.pop %v1143
  %v1147 = vmul.f32 %v1144, 0.5
  %v1148 = vmul.f32 %v1145, 0.5
  %v1149 = vmul.f32 %v1146, 0.5
  %v1150 = vadd.f32 %v1147, 0.5
  %v1151 = vadd.f32 %v1148, 0.5
  %v1152 = vadd.f32 %v1149, 0.5
  %v1153 = vtanh.pop %v1140
  %v1154 = vld [vmem:[#allocation8] sm:$0xff]
  %v1155 = vmul.f32 %v1151, %v1154
  %v1156 = vmul.f32 %v1150, %v1153
  %v1157 = vadd.f32 %v1155, %v1156
  %v1158 = vtanh.pop %v1157
  %v1159 = vmul.f32 %v1152, %v1158
  %1160 = vst [vmem:[#allocation8] sm:$0xff] %v1157
  %1161 = vst [vmem:[#allocation6] sm:$0xff] %v1159
  %v1162 = vpack.c.bf16 %v1159, %v1159
  %1163 = vst [vmem:[#allocation7] sm:$0xf] %v1162
  %1164 = vst [vmem:[%s4 + $0x4] sm:$0xf] %v1162
  %v1165 = vld [vmem:[#allocation7] sm:$0xf]
  %v1166 = vld [vmem:[#allocation5 + $0x40] sm:$0xff]
  %v1167 = vld [vmem:[#allocation5 + $0x48] sm:$0xff]
  %v1168 = vld [vmem:[#allocation5 + $0x50] sm:$0xff]
  %v1169 = vld [vmem:[#allocation5 + $0x58] sm:$0xff]
  %1170 = vmatprep.subr.bf16.mxu0 %v904
  %1171 = vmatpush1.bf16.msra.mxu0 %v903
  %1172 = vmatprep.subr.bf16.mxu0 %v908
  %1173 = vmatpush1.bf16.msra.mxu0 %v907
  %1174 = vmatprep.subr.bf16.mxu0 %v912
  %1175 = vmatpush1.bf16.msra.mxu0 %v911
  %1176 = vmatprep.subr.bf16.mxu0 %v916
  %1177 = vmatpush1.bf16.msra.mxu0 %v915
  %1178 = vmatprep.subr.bf16.mxu0 %v920
  %1179 = vmatpush1.bf16.msra.mxu0 %v919
  %1180 = vmatprep.subr.bf16.mxu0 %v924
  %1181 = vmatpush1.bf16.msra.mxu0 %v923
  %1182 = vmatprep.subr.bf16.mxu0 %v928
  %1183 = vmatpush1.bf16.msra.mxu0 %v927
  %1184 = vmatprep.subr.bf16.mxu0 %v932
  %1185 = vmatpush1.bf16.msra.mxu0 %v931
  %1186 = vmatprep.subr.bf16.mxu0 0
  %1187 = vmatpush1.bf16.msra.mxu0 0
  %1188 = vmatprep.subr.bf16.mxu0 0
  %1189 = vmatpush1.bf16.msra.mxu0 0
  %1190 = vmatprep.subr.bf16.mxu0 0
  %1191 = vmatpush1.bf16.msra.mxu0 0
  %1192 = vmatprep.subr.bf16.mxu0 0
  %1193 = vmatpush1.bf16.msra.mxu0 0
  %1194 = vmatprep.subr.bf16.mxu0 0
  %1195 = vmatpush1.bf16.msra.mxu0 0
  %1196 = vmatprep.subr.bf16.mxu0 0
  %1197 = vmatpush1.bf16.msra.mxu0 0
  %1198 = vmatprep.subr.bf16.mxu0 0
  %1199 = vmatpush1.bf16.msra.mxu0 0
  %1200 = vmatprep.subr.bf16.mxu0 0
  %1201 = vmatpush1.bf16.msra.mxu0 0
  %1202 = vmatprep.mubr.bf16.mxu0 0
  %1203 = vmatmul.mubr.bf16.gmra.mrb[0].mxu0 %v1165
  %v1204 = vpop.f32.mrb[0].mxu0
  %v1205 = vadd.f32 0.0, %v1204
  %v1206 = vpop.f32.mrb[0].mxu0
  %v1207 = vadd.f32 0.0, %v1206
  %v1208 = vpop.f32.mrb[0].mxu0
  %v1209 = vpop.f32.mrb[0].mxu0
  %1210 = vdwg.mxu0
  %1211 = vmatprep.subr.bf16.mxu0 %v906
  %1212 = vmatpush1.bf16.msra.mxu0 %v905
  %1213 = vmatprep.subr.bf16.mxu0 %v910
  %1214 = vmatpush1.bf16.msra.mxu0 %v909
  %1215 = vmatprep.subr.bf16.mxu0 %v914
  %1216 = vmatpush1.bf16.msra.mxu0 %v913
  %1217 = vmatprep.subr.bf16.mxu0 %v918
  %1218 = vmatpush1.bf16.msra.mxu0 %v917
  %1219 = vmatprep.subr.bf16.mxu0 %v922
  %1220 = vmatpush1.bf16.msra.mxu0 %v921
  %1221 = vmatprep.subr.bf16.mxu0 %v926
  %1222 = vmatpush1.bf16.msra.mxu0 %v925
  %1223 = vmatprep.subr.bf16.mxu0 %v930
  %1224 = vmatpush1.bf16.msra.mxu0 %v929
  %1225 = vmatprep.subr.bf16.mxu0 %v934
  %1226 = vmatpush1.bf16.msra.mxu0 %v933
  %1227 = vmatprep.subr.bf16.mxu0 0
  %1228 = vmatpush1.bf16.msra.mxu0 0
  %1229 = vmatprep.subr.bf16.mxu0 0
  %1230 = vmatpush1.bf16.msra.mxu0 0
  %1231 = vmatprep.subr.bf16.mxu0 0
  %1232 = vmatpush1.bf16.msra.mxu0 0
  %1233 = vmatprep.subr.bf16.mxu0 0
  %1234 = vmatpush1.bf16.msra.mxu0 0
  %1235 = vmatprep.subr.bf16.mxu0 0
  %1236 = vmatpush1.bf16.msra.mxu0 0
  %1237 = vmatprep.subr.bf16.mxu0 0
  %1238 = vmatpush1.bf16.msra.mxu0 0
  %1239 = vmatprep.subr.bf16.mxu0 0
  %1240 = vmatpush1.bf16.msra.mxu0 0
  %1241 = vmatprep.subr.bf16.mxu0 0
  %1242 = vmatpush1.bf16.msra.mxu0 0
  %1243 = vmatprep.mubr.bf16.mxu0 0
  %1244 = vmatmul.mubr.bf16.gmra.mrb[0].mxu0 %v1165
  %v1245 = vpop.f32.mrb[0].mxu0
  %v1246 = vadd.f32 0.0, %v1245
  %v1247 = vpop.f32.mrb[0].mxu0
  %v1248 = vadd.f32 0.0, %v1247
  %v1249 = vpop.f32.mrb[0].mxu0
  %v1250 = vpop.f32.mrb[0].mxu0
  %1251 = vdwg.mxu0
  %v1252 = vadd.f32 %v1166, %v1205
  %v1253 = vadd.f32 %v1167, %v1207
  %v1254 = vadd.f32 %v1168, %v1246
  %v1255 = vadd.f32 %v1169, %v1248
  %v1256 = vmul.f32 %v1252, 0.5
  %v1257 = vmul.f32 %v1253, 0.5
  %v1258 = vmul.f32 %v1254, 0.5
  %v1259 = vtanh.pop %v1256
  %v1260 = vtanh.pop %v1257
  %v1261 = vtanh.pop %v1258
  %v1262 = vmul.f32 %v1259, 0.5
  %v1263 = vmul.f32 %v1260, 0.5
  %v1264 = vmul.f32 %v1261, 0.5
  %v1265 = vadd.f32 %v1262, 0.5
  %v1266 = vadd.f32 %v1263, 0.5
  %v1267 = vadd.f32 %v1264, 0.5
  %v1268 = vtanh.pop %v1255
  %v1269 = vld [vmem:[#allocation8] sm:$0xff]
  %v1270 = vmul.f32 %v1266, %v1269
  %v1271 = vmul.f32 %v1265, %v1268
  %v1272 = vadd.f32 %v1270, %v1271
  %v1273 = vtanh.pop %v1272
  %v1274 = vmul.f32 %v1267, %v1273
  %1275 = vst [vmem:[#allocation8] sm:$0xff] %v1272
  %1276 = vst [vmem:[#allocation6] sm:$0xff] %v1274
  %v1277 = vpack.c.bf16 %v1274, %v1274
  %1278 = vst [vmem:[#allocation7] sm:$0xf] %v1277
  %1279 = vst [vmem:[%s4 + $0x8] sm:$0xf] %v1277
  %v1280 = vld [vmem:[#allocation7] sm:$0xf]
  %v1281 = vld [vmem:[#allocation5 + $0x60] sm:$0xff]
  %v1282 = vld [vmem:[#allocation5 + $0x68] sm:$0xff]
  %v1283 = vld [vmem:[#allocation5 + $0x70] sm:$0xff]
  %v1284 = vld [vmem:[#allocation5 + $0x78] sm:$0xff]
  %1285 = vmatprep.subr.bf16.mxu0 %v904
  %1286 = vmatpush1.bf16.msra.mxu0 %v903
  %1287 = vmatprep.subr.bf16.mxu0 %v908
  %1288 = vmatpush1.bf16.msra.mxu0 %v907
  %1289 = vmatprep.subr.bf16.mxu0 %v912
  %1290 = vmatpush1.bf16.msra.mxu0 %v911
  %1291 = vmatprep.subr.bf16.mxu0 %v916
  %1292 = vmatpush1.bf16.msra.mxu0 %v915
  %1293 = vmatprep.subr.bf16.mxu0 %v920
  %1294 = vmatpush1.bf16.msra.mxu0 %v919
  %1295 = vmatprep.subr.bf16.mxu0 %v924
  %1296 = vmatpush1.bf16.msra.mxu0 %v923
  %1297 = vmatprep.subr.bf16.mxu0 %v928
  %1298 = vmatpush1.bf16.msra.mxu0 %v927
  %1299 = vmatprep.subr.bf16.mxu0 %v932
  %1300 = vmatpush1.bf16.msra.mxu0 %v931
  %1301 = vmatprep.subr.bf16.mxu0 0
  %1302 = vmatpush1.bf16.msra.mxu0 0
  %1303 = vmatprep.subr.bf16.mxu0 0
  %1304 = vmatpush1.bf16.msra.mxu0 0
  %1305 = vmatprep.subr.bf16.mxu0 0
  %1306 = vmatpush1.bf16.msra.mxu0 0
  %1307 = vmatprep.subr.bf16.mxu0 0
  %1308 = vmatpush1.bf16.msra.mxu0 0
  %1309 = vmatprep.subr.bf16.mxu0 0
  %1310 = vmatpush1.bf16.msra.mxu0 0
  %1311 = vmatprep.subr.bf16.mxu0 0
  %1312 = vmatpush1.bf16.msra.mxu0 0
  %1313 = vmatprep.subr.bf16.mxu0 0
  %1314 = vmatpush1.bf16.msra.mxu0 0
  %1315 = vmatprep.subr.bf16.mxu0 0
  %1316 = vmatpush1.bf16.msra.mxu0 0
  %1317 = vmatprep.mubr.bf16.mxu0 0
  %1318 = vmatmul.mubr.bf16.gmra.mrb[0].mxu0 %v1280
  %v1319 = vpop.f32.mrb[0].mxu0
  %v1320 = vadd.f32 0.0, %v1319
  %v1321 = vpop.f32.mrb[0].mxu0
  %v1322 = vadd.f32 0.0, %v1321
  %v1323 = vpop.f32.mrb[0].mxu0
  %v1324 = vpop.f32.mrb[0].mxu0
  %1325 = vdwg.mxu0
  %1326 = vmatprep.subr.bf16.mxu0 %v906
  %1327 = vmatpush1.bf16.msra.mxu0 %v905
  %1328 = vmatprep.subr.bf16.mxu0 %v910
  %1329 = vmatpush1.bf16.msra.mxu0 %v909
  %1330 = vmatprep.subr.bf16.mxu0 %v914
  %1331 = vmatpush1.bf16.msra.mxu0 %v913
  %1332 = vmatprep.subr.bf16.mxu0 %v918
  %1333 = vmatpush1.bf16.msra.mxu0 %v917
  %1334 = vmatprep.subr.bf16.mxu0 %v922
  %1335 = vmatpush1.bf16.msra.mxu0 %v921
  %1336 = vmatprep.subr.bf16.mxu0 %v926
  %1337 = vmatpush1.bf16.msra.mxu0 %v925
  %1338 = vmatprep.subr.bf16.mxu0 %v930
  %1339 = vmatpush1.bf16.msra.mxu0 %v929
  %1340 = vmatprep.subr.bf16.mxu0 %v934
  %1341 = vmatpush1.bf16.msra.mxu0 %v933
  %1342 = vmatprep.subr.bf16.mxu0 0
  %1343 = vmatpush1.bf16.msra.mxu0 0
  %1344 = vmatprep.subr.bf16.mxu0 0
  %1345 = vmatpush1.bf16.msra.mxu0 0
  %1346 = vmatprep.subr.bf16.mxu0 0
  %1347 = vmatpush1.bf16.msra.mxu0 0
  %1348 = vmatprep.subr.bf16.mxu0 0
  %1349 = vmatpush1.bf16.msra.mxu0 0
  %1350 = vmatprep.subr.bf16.mxu0 0
  %1351 = vmatpush1.bf16.msra.mxu0 0
  %1352 = vmatprep.subr.bf16.mxu0 0
  %1353 = vmatpush1.bf16.msra.mxu0 0
  %1354 = vmatprep.subr.bf16.mxu0 0
  %1355 = vmatpush1.bf16.msra.mxu0 0
  %1356 = vmatprep.subr.bf16.mxu0 0
  %1357 = vmatpush1.bf16.msra.mxu0 0
  %1358 = vmatprep.mubr.bf16.mxu0 0
  %1359 = vmatmul.mubr.bf16.gmra.mrb[0].mxu0 %v1280
  %v1360 = vpop.f32.mrb[0].mxu0
  %v1361 = vadd.f32 0.0, %v1360
  %v1362 = vpop.f32.mrb[0].mxu0
  %v1363 = vadd.f32 0.0, %v1362
  %v1364 = vpop.f32.mrb[0].mxu0
  %v1365 = vpop.f32.mrb[0].mxu0
  %1366 = vdwg.mxu0
  %v1367 = vadd.f32 %v1281, %v1320
  %v1368 = vadd.f32 %v1282, %v1322
  %v1369 = vadd.f32 %v1283, %v1361
  %v1370 = vadd.f32 %v1284, %v1363
  %v1371 = vmul.f32 %v1367, 0.5
  %v1372 = vmul.f32 %v1368, 0.5
  %v1373 = vmul.f32 %v1369, 0.5
  %v1374 = vtanh.pop %v1371
  %v1375 = vtanh.pop %v1372
  %v1376 = vtanh.pop %v1373
  %v1377 = vmul.f32 %v1374, 0.5
  %v1378 = vmul.f32 %v1375, 0.5
  %v1379 = vmul.f32 %v1376, 0.5
  %v1380 = vadd.f32 %v1377, 0.5
  %v1381 = vadd.f32 %v1378, 0.5
  %v1382 = vadd.f32 %v1379, 0.5
  %v1383 = vtanh.pop %v1370
  %v1384 = vld [vmem:[#allocation8] sm:$0xff]
  %v1385 = vmul.f32 %v1381, %v1384
  %v1386 = vmul.f32 %v1380, %v1383
  %v1387 = vadd.f32 %v1385, %v1386
  %v1388 = vtanh.pop %v1387
  %v1389 = vmul.f32 %v1382, %v1388
  %1390 = vst [vmem:[#allocation8] sm:$0xff] %v1387
  %1391 = vst [vmem:[#allocation6] sm:$0xff] %v1389
  %v1392 = vpack.c.bf16 %v1389, %v1389
  %1393 = vst [vmem:[#allocation7] sm:$0xf] %v1392
  %1394 = vst [vmem:[%s4 + $0xc] sm:$0xf] %v1392
  %v1395 = vld [vmem:[#allocation7] sm:$0xf]
  %v1396 = vld [vmem:[#allocation5 + $0x80] sm:$0xff]
  %v1397 = vld [vmem:[#allocation5 + $0x88] sm:$0xff]
  %v1398 = vld [vmem:[#allocation5 + $0x90] sm:$0xff]
  %v1399 = vld [vmem:[#allocation5 + $0x98] sm:$0xff]
  %1400 = vmatprep.subr.bf16.mxu0 %v904
  %1401 = vmatpush1.bf16.msra.mxu0 %v903
  %1402 = vmatprep.subr.bf16.mxu0 %v908
  %1403 = vmatpush1.bf16.msra.mxu0 %v907
  %1404 = vmatprep.subr.bf16.mxu0 %v912
  %1405 = vmatpush1.bf16.msra.mxu0 %v911
  %1406 = vmatprep.subr.bf16.mxu0 %v916
  %1407 = vmatpush1.bf16.msra.mxu0 %v915
  %1408 = vmatprep.subr.bf16.mxu0 %v920
  %1409 = vmatpush1.bf16.msra.mxu0 %v919
  %1410 = vmatprep.subr.bf16.mxu0 %v924
  %1411 = vmatpush1.bf16.msra.mxu0 %v923
  %1412 = vmatprep.subr.bf16.mxu0 %v928
  %1413 = vmatpush1.bf16.msra.mxu0 %v927
  %1414 = vmatprep.subr.bf16.mxu0 %v932
  %1415 = vmatpush1.bf16.msra.mxu0 %v931
  %1416 = vmatprep.subr.bf16.mxu0 0
  %1417 = vmatpush1.bf16.msra.mxu0 0
  %1418 = vmatprep.subr.bf16.mxu0 0
  %1419 = vmatpush1.bf16.msra.mxu0 0
  %1420 = vmatprep.subr.bf16.mxu0 0
  %1421 = vmatpush1.bf16.msra.mxu0 0
  %1422 = vmatprep.subr.bf16.mxu0 0
  %1423 = vmatpush1.bf16.msra.mxu0 0
  %1424 = vmatprep.subr.bf16.mxu0 0
  %1425 = vmatpush1.bf16.msra.mxu0 0
  %1426 = vmatprep.subr.bf16.mxu0 0
  %1427 = vmatpush1.bf16.msra.mxu0 0
  %1428 = vmatprep.subr.bf16.mxu0 0
  %1429 = vmatpush1.bf16.msra.mxu0 0
  %1430 = vmatprep.subr.bf16.mxu0 0
  %1431 = vmatpush1.bf16.msra.mxu0 0
  %1432 = vmatprep.mubr.bf16.mxu0 0
  %1433 = vmatmul.mubr.bf16.gmra.mrb[0].mxu0 %v1395
  %v1434 = vpop.f32.mrb[0].mxu0
  %v1435 = vadd.f32 0.0, %v1434
  %v1436 = vpop.f32.mrb[0].mxu0
  %v1437 = vadd.f32 0.0, %v1436
  %v1438 = vpop.f32.mrb[0].mxu0
  %v1439 = vpop.f32.mrb[0].mxu0
  %1440 = vdwg.mxu0
  %1441 = vmatprep.subr.bf16.mxu0 %v906
  %1442 = vmatpush1.bf16.msra.mxu0 %v905
  %1443 = vmatprep.subr.bf16.mxu0 %v910
  %1444 = vmatpush1.bf16.msra.mxu0 %v909
  %1445 = vmatprep.subr.bf16.mxu0 %v914
  %1446 = vmatpush1.bf16.msra.mxu0 %v913
  %1447 = vmatprep.subr.bf16.mxu0 %v918
  %1448 = vmatpush1.bf16.msra.mxu0 %v917
  %1449 = vmatprep.subr.bf16.mxu0 %v922
  %1450 = vmatpush1.bf16.msra.mxu0 %v921
  %1451 = vmatprep.subr.bf16.mxu0 %v926
  %1452 = vmatpush1.bf16.msra.mxu0 %v925
  %1453 = vmatprep.subr.bf16.mxu0 %v930
  %1454 = vmatpush1.bf16.msra.mxu0 %v929
  %1455 = vmatprep.subr.bf16.mxu0 %v934
  %1456 = vmatpush1.bf16.msra.mxu0 %v933
  %1457 = vmatprep.subr.bf16.mxu0 0
  %1458 = vmatpush1.bf16.msra.mxu0 0
  %1459 = vmatprep.subr.bf16.mxu0 0
  %1460 = vmatpush1.bf16.msra.mxu0 0
  %1461 = vmatprep.subr.bf16.mxu0 0
  %1462 = vmatpush1.bf16.msra.mxu0 0
  %1463 = vmatprep.subr.bf16.mxu0 0
  %1464 = vmatpush1.bf16.msra.mxu0 0
  %1465 = vmatprep.subr.bf16.mxu0 0
  %1466 = vmatpush1.bf16.msra.mxu0 0
  %1467 = vmatprep.subr.bf16.mxu0 0
  %1468 = vmatpush1.bf16.msra.mxu0 0
  %1469 = vmatprep.subr.bf16.mxu0 0
  %1470 = vmatpush1.bf16.msra.mxu0 0
  %1471 = vmatprep.subr.bf16.mxu0 0
  %1472 = vmatpush1.bf16.msra.mxu0 0
  %1473 = vmatprep.mubr.bf16.mxu0 0
  %1474 = vmatmul.mubr.bf16.gmra.mrb[0].mxu0 %v1395
  %v1475 = vpop.f32.mrb[0].mxu0
  %v1476 = vadd.f32 0.0, %v1475
  %v1477 = vpop.f32.mrb[0].mxu0
  %v1478 = vadd.f32 0.0, %v1477
  %v1479 = vpop.f32.mrb[0].mxu0
  %v1480 = vpop.f32.mrb[0].mxu0
  %1481 = vdwg.mxu0
  %v1482 = vadd.f32 %v1396, %v1435
  %v1483 = vadd.f32 %v1397, %v1437
  %v1484 = vadd.f32 %v1398, %v1476
  %v1485 = vadd.f32 %v1399, %v1478
  %v1486 = vmul.f32 %v1482, 0.5
  %v1487 = vmul.f32 %v1483, 0.5
  %v1488 = vmul.f32 %v1484, 0.5
  %v1489 = vtanh.pop %v1486
  %v1490 = vtanh.pop %v1487
  %v1491 = vtanh.pop %v1488
  %v1492 = vmul.f32 %v1489, 0.5
  %v1493 = vmul.f32 %v1490, 0.5
  %v1494 = vmul.f32 %v1491, 0.5
  %v1495 = vadd.f32 %v1492, 0.5
  %v1496 = vadd.f32 %v1493, 0.5
  %v1497 = vadd.f32 %v1494, 0.5
  %v1498 = vtanh.pop %v1485
  %v1499 = vld [vmem:[#allocation8] sm:$0xff]
  %v1500 = vmul.f32 %v1496, %v1499
  %v1501 = vmul.f32 %v1495, %v1498
  %v1502 = vadd.f32 %v1500, %v1501
  %v1503 = vtanh.pop %v1502
  %v1504 = vmul.f32 %v1497, %v1503
  %1505 = vst [vmem:[#allocation8] sm:$0xff] %v1502
  %1506 = vst [vmem:[#allocation6] sm:$0xff] %v1504
  %v1507 = vpack.c.bf16 %v1504, %v1504
  %1508 = vst [vmem:[#allocation7] sm:$0xf] %v1507
  %1509 = vst [vmem:[%s4 + $0x10] sm:$0xf] %v1507
  %v1510 = vld [vmem:[#allocation7] sm:$0xf]
  %v1511 = vld [vmem:[#allocation5 + $0xa0] sm:$0xff]
  %v1512 = vld [vmem:[#allocation5 + $0xa8] sm:$0xff]
  %v1513 = vld [vmem:[#allocation5 + $0xb0] sm:$0xff]
  %v1514 = vld [vmem:[#allocation5 + $0xb8] sm:$0xff]
  %1515 = vmatprep.subr.bf16.mxu0 %v904
  %1516 = vmatpush1.bf16.msra.mxu0 %v903
  %1517 = vmatprep.subr.bf16.mxu0 %v908
  %1518 = vmatpush1.bf16.msra.mxu0 %v907
  %1519 = vmatprep.subr.bf16.mxu0 %v912
  %1520 = vmatpush1.bf16.msra.mxu0 %v911
  %1521 = vmatprep.subr.bf16.mxu0 %v916
  %1522 = vmatpush1.bf16.msra.mxu0 %v915
  %1523 = vmatprep.subr.bf16.mxu0 %v920
  %1524 = vmatpush1.bf16.msra.mxu0 %v919
  %1525 = vmatprep.subr.bf16.mxu0 %v924
  %1526 = vmatpush1.bf16.msra.mxu0 %v923
  %1527 = vmatprep.subr.bf16.mxu0 %v928
  %1528 = vmatpush1.bf16.msra.mxu0 %v927
  %1529 = vmatprep.subr.bf16.mxu0 %v932
  %1530 = vmatpush1.bf16.msra.mxu0 %v931
  %1531 = vmatprep.subr.bf16.mxu0 0
  %1532 = vmatpush1.bf16.msra.mxu0 0
  %1533 = vmatprep.subr.bf16.mxu0 0
  %1534 = vmatpush1.bf16.msra.mxu0 0
  %1535 = vmatprep.subr.bf16.mxu0 0
  %1536 = vmatpush1.bf16.msra.mxu0 0
  %1537 = vmatprep.subr.bf16.mxu0 0
  %1538 = vmatpush1.bf16.msra.mxu0 0
  %1539 = vmatprep.subr.bf16.mxu0 0
  %1540 = vmatpush1.bf16.msra.mxu0 0
  %1541 = vmatprep.subr.bf16.mxu0 0
  %1542 = vmatpush1.bf16.msra.mxu0 0
  %1543 = vmatprep.subr.bf16.mxu0 0
  %1544 = vmatpush1.bf16.msra.mxu0 0
  %1545 = vmatprep.subr.bf16.mxu0 0
  %1546 = vmatpush1.bf16.msra.mxu0 0
  %1547 = vmatprep.mubr.bf16.mxu0 0
  %1548 = vmatmul.mubr.bf16.gmra.mrb[0].mxu0 %v1510
  %v1549 = vpop.f32.mrb[0].mxu0
  %v1550 = vadd.f32 0.0, %v1549
  %v1551 = vpop.f32.mrb[0].mxu0
  %v1552 = vadd.f32 0.0, %v1551
  %v1553 = vpop.f32.mrb[0].mxu0
  %v1554 = vpop.f32.mrb[0].mxu0
  %1555 = vdwg.mxu0
  %1556 = vmatprep.subr.bf16.mxu0 %v906
  %1557 = vmatpush1.bf16.msra.mxu0 %v905
  %1558 = vmatprep.subr.bf16.mxu0 %v910
  %1559 = vmatpush1.bf16.msra.mxu0 %v909
  %1560 = vmatprep.subr.bf16.mxu0 %v914
  %1561 = vmatpush1.bf16.msra.mxu0 %v913
  %1562 = vmatprep.subr.bf16.mxu0 %v918
  %1563 = vmatpush1.bf16.msra.mxu0 %v917
  %1564 = vmatprep.subr.bf16.mxu0 %v922
  %1565 = vmatpush1.bf16.msra.mxu0 %v921
  %1566 = vmatprep.subr.bf16.mxu0 %v926
  %1567 = vmatpush1.bf16.msra.mxu0 %v925
  %1568 = vmatprep.subr.bf16.mxu0 %v930
  %1569 = vmatpush1.bf16.msra.mxu0 %v929
  %1570 = vmatprep.subr.bf16.mxu0 %v934
  %1571 = vmatpush1.bf16.msra.mxu0 %v933
  %1572 = vmatprep.subr.bf16.mxu0 0
  %1573 = vmatpush1.bf16.msra.mxu0 0
  %1574 = vmatprep.subr.bf16.mxu0 0
  %1575 = vmatpush1.bf16.msra.mxu0 0
  %1576 = vmatprep.subr.bf16.mxu0 0
  %1577 = vmatpush1.bf16.msra.mxu0 0
  %1578 = vmatprep.subr.bf16.mxu0 0
  %1579 = vmatpush1.bf16.msra.mxu0 0
  %1580 = vmatprep.subr.bf16.mxu0 0
  %1581 = vmatpush1.bf16.msra.mxu0 0
  %1582 = vmatprep.subr.bf16.mxu0 0
  %1583 = vmatpush1.bf16.msra.mxu0 0
  %1584 = vmatprep.subr.bf16.mxu0 0
  %1585 = vmatpush1.bf16.msra.mxu0 0
  %1586 = vmatprep.subr.bf16.mxu0 0
  %1587 = vmatpush1.bf16.msra.mxu0 0
  %1588 = vmatprep.mubr.bf16.mxu0 0
  %1589 = vmatmul.mubr.bf16.gmra.mrb[0].mxu0 %v1510
  %v1590 = vpop.f32.mrb[0].mxu0
  %v1591 = vadd.f32 0.0, %v1590
  %v1592 = vpop.f32.mrb[0].mxu0
  %v1593 = vadd.f32 0.0, %v1592
  %v1594 = vpop.f32.mrb[0].mxu0
  %v1595 = vpop.f32.mrb[0].mxu0
  %1596 = vdwg.mxu0
  %v1597 = vadd.f32 %v1511, %v1550
  %v1598 = vadd.f32 %v1512, %v1552
  %v1599 = vadd.f32 %v1513, %v1591
  %v1600 = vadd.f32 %v1514, %v1593
  %v1601 = vmul.f32 %v1597, 0.5
  %v1602 = vmul.f32 %v1598, 0.5
  %v1603 = vmul.f32 %v1599, 0.5
  %v1604 = vtanh.pop %v1601
  %v1605 = vtanh.pop %v1602
  %v1606 = vtanh.pop %v1603
  %v1607 = vmul.f32 %v1604, 0.5
  %v1608 = vmul.f32 %v1605, 0.5
  %v1609 = vmul.f32 %v1606, 0.5
  %v1610 = vadd.f32 %v1607, 0.5
  %v1611 = vadd.f32 %v1608, 0.5
  %v1612 = vadd.f32 %v1609, 0.5
  %v1613 = vtanh.pop %v1600
  %v1614 = vld [vmem:[#allocation8] sm:$0xff]
  %v1615 = vmul.f32 %v1611, %v1614
  %v1616 = vmul.f32 %v1610, %v1613
  %v1617 = vadd.f32 %v1615, %v1616
  %v1618 = vtanh.pop %v1617
  %v1619 = vmul.f32 %v1612, %v1618
  %1620 = vst [vmem:[#allocation8] sm:$0xff] %v1617
  %1621 = vst [vmem:[#allocation6] sm:$0xff] %v1619
  %v1622 = vpack.c.bf16 %v1619, %v1619
  %1623 = vst [vmem:[#allocation7] sm:$0xf] %v1622
  %1624 = vst [vmem:[%s4 + $0x14] sm:$0xf] %v1622
  %v1625 = vld [vmem:[#allocation7] sm:$0xf]
  %v1626 = vld [vmem:[#allocation5 + $0xc0] sm:$0xff]
  %v1627 = vld [vmem:[#allocation5 + $0xc8] sm:$0xff]
  %v1628 = vld [vmem:[#allocation5 + $0xd0] sm:$0xff]
  %v1629 = vld [vmem:[#allocation5 + $0xd8] sm:$0xff]
  %1630 = vmatprep.subr.bf16.mxu0 %v904
  %1631 = vmatpush1.bf16.msra.mxu0 %v903
  %1632 = vmatprep.subr.bf16.mxu0 %v908
  %1633 = vmatpush1.bf16.msra.mxu0 %v907
  %1634 = vmatprep.subr.bf16.mxu0 %v912
  %1635 = vmatpush1.bf16.msra.mxu0 %v911
  %1636 = vmatprep.subr.bf16.mxu0 %v916
  %1637 = vmatpush1.bf16.msra.mxu0 %v915
  %1638 = vmatprep.subr.bf16.mxu0 %v920
  %1639 = vmatpush1.bf16.msra.mxu0 %v919
  %1640 = vmatprep.subr.bf16.mxu0 %v924
  %1641 = vmatpush1.bf16.msra.mxu0 %v923
  %1642 = vmatprep.subr.bf16.mxu0 %v928
  %1643 = vmatpush1.bf16.msra.mxu0 %v927
  %1644 = vmatprep.subr.bf16.mxu0 %v932
  %1645 = vmatpush1.bf16.msra.mxu0 %v931
  %1646 = vmatprep.subr.bf16.mxu0 0
  %1647 = vmatpush1.bf16.msra.mxu0 0
  %1648 = vmatprep.subr.bf16.mxu0 0
  %1649 = vmatpush1.bf16.msra.mxu0 0
  %1650 = vmatprep.subr.bf16.mxu0 0
  %1651 = vmatpush1.bf16.msra.mxu0 0
  %1652 = vmatprep.subr.bf16.mxu0 0
  %1653 = vmatpush1.bf16.msra.mxu0 0
  %1654 = vmatprep.subr.bf16.mxu0 0
  %1655 = vmatpush1.bf16.msra.mxu0 0
  %1656 = vmatprep.subr.bf16.mxu0 0
  %1657 = vmatpush1.bf16.msra.mxu0 0
  %1658 = vmatprep.subr.bf16.mxu0 0
  %1659 = vmatpush1.bf16.msra.mxu0 0
  %1660 = vmatprep.subr.bf16.mxu0 0
  %1661 = vmatpush1.bf16.msra.mxu0 0
  %1662 = vmatprep.mubr.bf16.mxu0 0
  %1663 = vmatmul.mubr.bf16.gmra.mrb[0].mxu0 %v1625
  %v1664 = vpop.f32.mrb[0].mxu0
  %v1665 = vadd.f32 0.0, %v1664
  %v1666 = vpop.f32.mrb[0].mxu0
  %v1667 = vadd.f32 0.0, %v1666
  %v1668 = vpop.f32.mrb[0].mxu0
  %v1669 = vpop.f32.mrb[0].mxu0
  %1670 = vdwg.mxu0
  %1671 = vmatprep.subr.bf16.mxu0 %v906
  %1672 = vmatpush1.bf16.msra.mxu0 %v905
  %1673 = vmatprep.subr.bf16.mxu0 %v910
  %1674 = vmatpush1.bf16.msra.mxu0 %v909
  %1675 = vmatprep.subr.bf16.mxu0 %v914
  %1676 = vmatpush1.bf16.msra.mxu0 %v913
  %1677 = vmatprep.subr.bf16.mxu0 %v918
  %1678 = vmatpush1.bf16.msra.mxu0 %v917
  %1679 = vmatprep.subr.bf16.mxu0 %v922
  %1680 = vmatpush1.bf16.msra.mxu0 %v921
  %1681 = vmatprep.subr.bf16.mxu0 %v926
  %1682 = vmatpush1.bf16.msra.mxu0 %v925
  %1683 = vmatprep.subr.bf16.mxu0 %v930
  %1684 = vmatpush1.bf16.msra.mxu0 %v929
  %1685 = vmatprep.subr.bf16.mxu0 %v934
  %1686 = vmatpush1.bf16.msra.mxu0 %v933
  %1687 = vmatprep.subr.bf16.mxu0 0
  %1688 = vmatpush1.bf16.msra.mxu0 0
  %1689 = vmatprep.subr.bf16.mxu0 0
  %1690 = vmatpush1.bf16.msra.mxu0 0
  %1691 = vmatprep.subr.bf16.mxu0 0
  %1692 = vmatpush1.bf16.msra.mxu0 0
  %1693 = vmatprep.subr.bf16.mxu0 0
  %1694 = vmatpush1.bf16.msra.mxu0 0
  %1695 = vmatprep.subr.bf16.mxu0 0
  %1696 = vmatpush1.bf16.msra.mxu0 0
  %1697 = vmatprep.subr.bf16.mxu0 0
  %1698 = vmatpush1.bf16.msra.mxu0 0
  %1699 = vmatprep.subr.bf16.mxu0 0
  %1700 = vmatpush1.bf16.msra.mxu0 0
  %1701 = vmatprep.subr.bf16.mxu0 0
  %1702 = vmatpush1.bf16.msra.mxu0 0
  %1703 = vmatprep.mubr.bf16.mxu0 0
  %1704 = vmatmul.mubr.bf16.gmra.mrb[0].mxu0 %v1625
  %v1705 = vpop.f32.mrb[0].mxu0
  %v1706 = vadd.f32 0.0, %v1705
  %v1707 = vpop.f32.mrb[0].mxu0
  %v1708 = vadd.f32 0.0, %v1707
  %v1709 = vpop.f32.mrb[0].mxu0
  %v1710 = vpop.f32.mrb[0].mxu0
  %1711 = vdwg.mxu0
  %v1712 = vadd.f32 %v1626, %v1665
  %v1713 = vadd.f32 %v1627, %v1667
  %v1714 = vadd.f32 %v1628, %v1706
  %v1715 = vadd.f32 %v1629, %v1708
  %v1716 = vmul.f32 %v1712, 0.5
  %v1717 = vmul.f32 %v1713, 0.5
  %v1718 = vmul.f32 %v1714, 0.5
  %v1719 = vtanh.pop %v1716
  %v1720 = vtanh.pop %v1717
  %v1721 = vtanh.pop %v1718
  %v1722 = vmul.f32 %v1719, 0.5
  %v1723 = vmul.f32 %v1720, 0.5
  %v1724 = vmul.f32 %v1721, 0.5
  %v1725 = vadd.f32 %v1722, 0.5
  %v1726 = vadd.f32 %v1723, 0.5
  %v1727 = vadd.f32 %v1724, 0.5
  %v1728 = vtanh.pop %v1715
  %v1729 = vld [vmem:[#allocation8] sm:$0xff]
  %v1730 = vmul.f32 %v1726, %v1729
  %v1731 = vmul.f32 %v1725, %v1728
  %v1732 = vadd.f32 %v1730, %v1731
  %v1733 = vtanh.pop %v1732
  %v1734 = vmul.f32 %v1727, %v1733
  %1735 = vst [vmem:[#allocation8] sm:$0xff] %v1732
  %1736 = vst [vmem:[#allocation6] sm:$0xff] %v1734
  %v1737 = vpack.c.bf16 %v1734, %v1734
  %1738 = vst [vmem:[#allocation7] sm:$0xf] %v1737
  %1739 = vst [vmem:[%s4 + $0x18] sm:$0xf] %v1737
  %v1740 = vld [vmem:[#allocation7] sm:$0xf]
  %v1741 = vld [vmem:[#allocation5 + $0xe0] sm:$0xff]
  %v1742 = vld [vmem:[#allocation5 + $0xe8] sm:$0xff]
  %v1743 = vld [vmem:[#allocation5 + $0xf0] sm:$0xff]
  %v1744 = vld [vmem:[#allocation5 + $0xf8] sm:$0xff]
  %1745 = vmatprep.subr.bf16.mxu0 %v904
  %1746 = vmatpush1.bf16.msra.mxu0 %v903
  %1747 = vmatprep.subr.bf16.mxu0 %v908
  %1748 = vmatpush1.bf16.msra.mxu0 %v907
  %1749 = vmatprep.subr.bf16.mxu0 %v912
  %1750 = vmatpush1.bf16.msra.mxu0 %v911
  %1751 = vmatprep.subr.bf16.mxu0 %v916
  %1752 = vmatpush1.bf16.msra.mxu0 %v915
  %1753 = vmatprep.subr.bf16.mxu0 %v920
  %1754 = vmatpush1.bf16.msra.mxu0 %v919
  %1755 = vmatprep.subr.bf16.mxu0 %v924
  %1756 = vmatpush1.bf16.msra.mxu0 %v923
  %1757 = vmatprep.subr.bf16.mxu0 %v928
  %1758 = vmatpush1.bf16.msra.mxu0 %v927
  %1759 = vmatprep.subr.bf16.mxu0 %v932
  %1760 = vmatpush1.bf16.msra.mxu0 %v931
  %1761 = vmatprep.subr.bf16.mxu0 0
  %1762 = vmatpush1.bf16.msra.mxu0 0
  %1763 = vmatprep.subr.bf16.mxu0 0
  %1764 = vmatpush1.bf16.msra.mxu0 0
  %1765 = vmatprep.subr.bf16.mxu0 0
  %1766 = vmatpush1.bf16.msra.mxu0 0
  %1767 = vmatprep.subr.bf16.mxu0 0
  %1768 = vmatpush1.bf16.msra.mxu0 0
  %1769 = vmatprep.subr.bf16.mxu0 0
  %1770 = vmatpush1.bf16.msra.mxu0 0
  %1771 = vmatprep.subr.bf16.mxu0 0
  %1772 = vmatpush1.bf16.msra.mxu0 0
  %1773 = vmatprep.subr.bf16.mxu0 0
  %1774 = vmatpush1.bf16.msra.mxu0 0
  %1775 = vmatprep.subr.bf16.mxu0 0
  %1776 = vmatpush1.bf16.msra.mxu0 0
  %1777 = vmatprep.mubr.bf16.mxu0 0
  %1778 = vmatmul.mubr.bf16.gmra.mrb[0].mxu0 %v1740
  %v1779 = vpop.f32.mrb[0].mxu0
  %v1780 = vadd.f32 0.0, %v1779
  %v1781 = vpop.f32.mrb[0].mxu0
  %v1782 = vadd.f32 0.0, %v1781
  %v1783 = vpop.f32.mrb[0].mxu0
  %v1784 = vpop.f32.mrb[0].mxu0
  %1785 = vdwg.mxu0
  %1786 = vmatprep.subr.bf16.mxu0 %v906
  %1787 = vmatpush1.bf16.msra.mxu0 %v905
  %1788 = vmatprep.subr.bf16.mxu0 %v910
  %1789 = vmatpush1.bf16.msra.mxu0 %v909
  %1790 = vmatprep.subr.bf16.mxu0 %v914
  %1791 = vmatpush1.bf16.msra.mxu0 %v913
  %1792 = vmatprep.subr.bf16.mxu0 %v918
  %1793 = vmatpush1.bf16.msra.mxu0 %v917
  %1794 = vmatprep.subr.bf16.mxu0 %v922
  %1795 = vmatpush1.bf16.msra.mxu0 %v921
  %1796 = vmatprep.subr.bf16.mxu0 %v926
  %1797 = vmatpush1.bf16.msra.mxu0 %v925
  %1798 = vmatprep.subr.bf16.mxu0 %v930
  %1799 = vmatpush1.bf16.msra.mxu0 %v929
  %1800 = vmatprep.subr.bf16.mxu0 %v934
  %1801 = vmatpush1.bf16.msra.mxu0 %v933
  %1802 = vmatprep.subr.bf16.mxu0 0
  %1803 = vmatpush1.bf16.msra.mxu0 0
  %1804 = vmatprep.subr.bf16.mxu0 0
  %1805 = vmatpush1.bf16.msra.mxu0 0
  %1806 = vmatprep.subr.bf16.mxu0 0
  %1807 = vmatpush1.bf16.msra.mxu0 0
  %1808 = vmatprep.subr.bf16.mxu0 0
  %1809 = vmatpush1.bf16.msra.mxu0 0
  %1810 = vmatprep.subr.bf16.mxu0 0
  %1811 = vmatpush1.bf16.msra.mxu0 0
  %1812 = vmatprep.subr.bf16.mxu0 0
  %1813 = vmatpush1.bf16.msra.mxu0 0
  %1814 = vmatprep.subr.bf16.mxu0 0
  %1815 = vmatpush1.bf16.msra.mxu0 0
  %1816 = vmatprep.subr.bf16.mxu0 0
  %1817 = vmatpush1.bf16.msra.mxu0 0
  %1818 = vmatprep.mubr.bf16.mxu0 0
  %1819 = vmatmul.mubr.bf16.gmra.mrb[0].mxu0 %v1740
  %v1820 = vpop.f32.mrb[0].mxu0
  %v1821 = vadd.f32 0.0, %v1820
  %v1822 = vpop.f32.mrb[0].mxu0
  %v1823 = vadd.f32 0.0, %v1822
  %v1824 = vpop.f32.mrb[0].mxu0
  %v1825 = vpop.f32.mrb[0].mxu0
  %1826 = vdwg.mxu0
  %v1827 = vadd.f32 %v1741, %v1780
  %v1828 = vadd.f32 %v1742, %v1782
  %v1829 = vadd.f32 %v1743, %v1821
  %v1830 = vadd.f32 %v1744, %v1823
  %v1831 = vmul.f32 %v1827, 0.5
  %v1832 = vmul.f32 %v1828, 0.5
  %v1833 = vmul.f32 %v1829, 0.5
  %v1834 = vtanh.pop %v1831
  %v1835 = vtanh.pop %v1832
  %v1836 = vtanh.pop %v1833
  %v1837 = vmul.f32 %v1834, 0.5
  %v1838 = vmul.f32 %v1835, 0.5
  %v1839 = vmul.f32 %v1836, 0.5
  %v1840 = vadd.f32 %v1837, 0.5
  %v1841 = vadd.f32 %v1838, 0.5
  %v1842 = vadd.f32 %v1839, 0.5
  %v1843 = vtanh.pop %v1830
  %v1844 = vld [vmem:[#allocation8] sm:$0xff]
  %v1845 = vmul.f32 %v1841, %v1844
  %v1846 = vmul.f32 %v1840, %v1843
  %v1847 = vadd.f32 %v1845, %v1846
  %v1848 = vtanh.pop %v1847
  %v1849 = vmul.f32 %v1842, %v1848
  %1850 = vst [vmem:[#allocation8] sm:$0xff] %v1847
  %1851 = vst [vmem:[#allocation6] sm:$0xff] %v1849
  %v1852 = vpack.c.bf16 %v1849, %v1849
  %1853 = vst [vmem:[#allocation7] sm:$0xf] %v1852
  %1854 = vst [vmem:[%s4 + $0x1c] sm:$0xf] %v1852
  // Predicated region
  $region88: #{multirnn_forward.1} parent=0 // pred_check
    %p1855 = pneg %p17
  $region89: #{multirnn_forward.1} parent=0 // pred_check_branch
    %1857 = sbr.rel (%p1855) target = $region91
  $region90: #{multirnn_forward.1} parent=0 // pred_region
    %v1858 = vld [vmem:[#allocation6] sm:$0xff]
    %1859 = vst [vmem:[%s5] sm:$0xff] %v1858
    %v1860 = vld [vmem:[#allocation8] sm:$0xff]
    %1861 = vst [vmem:[%s6] sm:$0xff] %v1860
  $region91: #{multirnn_forward.1} parent=0 // pred_fallthru
    _
  // Predicated region
  $region92: #{multirnn_forward.1} parent=0 // pred_check
    _
  $region93: #{multirnn_forward.1} parent=0 // pred_check_branch
    %1863 = sbr.rel (0) target = $region95
  $region94: #{multirnn_forward.1} parent=0 // pred_region
    _
  $region95: #{multirnn_forward.1} parent=0 // pred_fallthru
    _
  // Predicated region
  $region96: #{multirnn_forward.1} parent=0 // pred_check
    _
  $region97: #{multirnn_forward.1} parent=0 // pred_check_branch
    %1865 = sbr.rel (0) target = $region99
  $region98: #{multirnn_forward.1} parent=0 // pred_region
    _
  $region99: #{multirnn_forward.1} parent=0 // pred_fallthru
    _
  // Predicated region
  $region100: #{multirnn_forward.1} parent=0 // pred_check
    _
  $region101: #{multirnn_forward.1} parent=0 // pred_check_branch
    %1867 = sbr.rel (0) target = $region103
  $region102: #{multirnn_forward.1} parent=0 // pred_region
    _
  $region103: #{multirnn_forward.1} parent=0 // pred_fallthru
    _
  // Predicated region
  $region104: #{multirnn_forward.1} parent=0 // pred_check
    _
  $region105: #{multirnn_forward.1} parent=0 // pred_check_branch
    %1869 = sbr.rel (0) target = $region107
  $region106: #{multirnn_forward.1} parent=0 // pred_region
    _
  $region107: #{multirnn_forward.1} parent=0 // pred_fallthru
    _
  // Predicated region
  $region108: #{multirnn_forward.1} parent=0 // pred_check
    _
  $region109: #{multirnn_forward.1} parent=0 // pred_check_branch
    %1871 = sbr.rel (0) target = $region111
  $region110: #{multirnn_forward.1} parent=0 // pred_region
    _
  $region111: #{multirnn_forward.1} parent=0 // pred_fallthru
    _
  // Predicated region
  $region112: #{multirnn_forward.1} parent=0 // pred_check
    _
  $region113: #{multirnn_forward.1} parent=0 // pred_check_branch
    %1873 = sbr.rel (0) target = $region115
  $region114: #{multirnn_forward.1} parent=0 // pred_region
    _
  $region115: #{multirnn_forward.1} parent=0 // pred_fallthru
    _
  %1874 = vsyncmov [#allocation4]
  %s1875 = vpop.sfrf %1874
  %p1876 = scmp.eq.s32.totalorder %s1875, 0
  %p1877 = pneg %p1876
  %1879 = shalt.err (%p1877)
  %s1880 = scalar_lea.sflag [#allocation4], 1
  %1881 = vsyncmov %s1880
  %s1882 = vpop.sfrf %1881
  %p1883 = scmp.eq.s32.totalorder %s1882, 0
  %p1884 = pneg %p1883
  %1886 = shalt.err (%p1884)

</llo_original>
